<compile_context>
chip_gen: v6e
topology: v6e:2x2x1
jax: 0.10.0
libtpu: 0.0.40
codegen_flags: <defaults>
</compile_context>

<pallas_src>
import functools

import numpy as np
import jax
import jax.numpy as jnp
from jax import lax
from jax.experimental import pallas as pl
from jax.experimental.pallas import tpu as pltpu

EPS = 1e-8
LANE = 128
SUBLANE = 8


def _round_up(x, m):
  return ((x + m - 1) // m) * m


# ----------------------------------------------------------------------------
# Fused kernel: encode (x3) -> MoPoE fuse -> reparameterize (x3) -> decode (x3)
# One batch tile per grid step; all weights resident in VMEM.
# ----------------------------------------------------------------------------
def _mvae_fused_kernel(
    x_ref, n_ref,                       # (bB, Din) input slab, (bB, 3*Lp) noise slab
    ew1, eb1, ewh, ebh,                 # block-diag encoder L1 + fused mu|logvar heads
    dw1, db1, dw2, db2,                 # block-diag decoder L1 + L2
    r_ref, mu_ref, lv_ref,              # (bB, Dout) recon slab, (bB, Lp) mu, (bB, Lp) logvar
    *, latent_dim, lp):
  L, Lp = latent_dim, lp

  # ---- encoders: 2 lane-dense MXU dots for all three modalities ------------
  x = x_ref[...].astype(jnp.bfloat16)
  h = jnp.dot(x, ew1[...], preferred_element_type=jnp.float32) + eb1[...]
  h = jnp.maximum(h, 0.0)
  head = (jnp.dot(h.astype(jnp.bfloat16), ewh[...],
                  preferred_element_type=jnp.float32) + ebh[...])
  # 128-lane aligned slices -> free views.
  mu1, lv1 = head[:, 0 * Lp:1 * Lp], head[:, 1 * Lp:2 * Lp]   # vision
  mu2, lv2 = head[:, 2 * Lp:3 * Lp], head[:, 3 * Lp:4 * Lp]   # audio
  mu3, lv3 = head[:, 4 * Lp:5 * Lp], head[:, 5 * Lp:6 * Lp]   # tactile

  # ---- mixture_product_3experts (f32 elementwise; recip on the EUP) --------
  # Reference: var = exp(logvar) + eps ; t = 1/(var + eps) = 1/(exp(lv)+2*eps)
  e1, e2, e3 = jnp.exp(lv1), jnp.exp(lv2), jnp.exp(lv3)
  t1 = pl.reciprocal(e1 + 2.0 * EPS, approx=True)
  t2 = pl.reciprocal(e2 + 2.0 * EPS, approx=True)
  t3 = pl.reciprocal(e3 + 2.0 * EPS, approx=True)

  def poe(pairs):
    tsum = sum(t for _, t in pairs)
    inv = pl.reciprocal(tsum, approx=True)      # reused for pd_mu and pd_logvar
    pd_mu = sum(m * t for m, t in pairs) * inv
    pd_lv = jnp.log(inv + EPS)
    return pd_mu, pd_lv

  mu12, lv12 = poe([(mu1, t1), (mu2, t2)])
  mu23, lv23 = poe([(mu2, t2), (mu3, t3)])
  mu31, lv31 = poe([(mu3, t3), (mu1, t1)])
  mu123, lv123 = poe([(mu1, t1), (mu2, t2), (mu3, t3)])

  # 7 lane segments; static boundaries, masks computed once, reused for mu/lv.
  bounds = [k * L // 7 for k in range(1, 7)]
  idx = lax.broadcasted_iota(jnp.int32, mu1.shape, 1)
  masks = [idx < b for b in bounds]

  def seg(a1, a2, a3, a12, a23, a31, a123):
    out = a123
    for m, a in zip(reversed(masks), (a31, a23, a12, a3, a2, a1)):
      out = jnp.where(m, a, out)
    return out

  mu_ref[...] = seg(mu1, mu2, mu3, mu12, mu23, mu31, mu123)
  lv_ref[...] = seg(lv1, lv2, lv3, lv12, lv23, lv31, lv123)

  # ---- reparameterize: std = sqrt(exp(logvar)) (exp reused from above) ------
  n = n_ref[...]
  z1 = mu1 + n[:, 0 * Lp:1 * Lp] * jnp.sqrt(e1)
  z2 = mu2 + n[:, 1 * Lp:2 * Lp] * jnp.sqrt(e2)
  z3 = mu3 + n[:, 2 * Lp:3 * Lp] * jnp.sqrt(e3)
  z = jnp.concatenate([z1, z2, z3], axis=1).astype(jnp.bfloat16)

  # ---- decoders: 2 block-diag MXU dots, one lane-dense output slab ----------
  hd = jnp.dot(z, dw1[...], preferred_element_type=jnp.float32) + db1[...]
  hd = jnp.maximum(hd, 0.0)
  r_ref[...] = (jnp.dot(hd.astype(jnp.bfloat16), dw2[...],
                        preferred_element_type=jnp.float32) + db2[...])


# ----------------------------------------------------------------------------
# pallas_call wrapper: grid over batch tiles, weights with constant index_map
# ----------------------------------------------------------------------------
def multivae_forward(packed, x_slab, n_slab, *, block_b):
  b_pad, din = x_slab.shape
  L, Lp = packed["latent_dim"], packed["Lp"]
  dout = packed["dec_w2"].shape[1]
  grid = (b_pad // block_b,)

  def batch_spec(width):
    return pl.BlockSpec((block_b, width), lambda i: (i, 0))

  def const_spec(arr):
    # Same block index every grid step -> weight stays resident in VMEM.
    return pl.BlockSpec(arr.shape, lambda i: (0, 0))

  weights = (packed["enc_w1"], packed["enc_b1"], packed["enc_wh"], packed["enc_bh"],
             packed["dec_w1"], packed["dec_b1"], packed["dec_w2"], packed["dec_b2"])

  kern = functools.partial(_mvae_fused_kernel, latent_dim=L, lp=Lp)
  out_shape = (
      jax.ShapeDtypeStruct((b_pad, dout), jnp.float32),
      jax.ShapeDtypeStruct((b_pad, Lp), jnp.float32),
      jax.ShapeDtypeStruct((b_pad, Lp), jnp.float32),
  )
  return pl.pallas_call(
      kern,
      grid=grid,
      out_shape=out_shape,
      in_specs=[batch_spec(din), batch_spec(3 * Lp)]
               + [const_spec(w) for w in weights],
      out_specs=(batch_spec(dout), batch_spec(Lp), batch_spec(Lp)),
      compiler_params=pltpu.CompilerParams(
          dimension_semantics=("parallel",)),   # shards batch tiles on v7x's 2 TCs
  )(x_slab, n_slab, *weights)


# ----------------------------------------------------------------------------
# Parameter construction: per-modality MLPs packed into block-diagonal,
# 128-lane padded weights (bf16), biases kept f32.
# ----------------------------------------------------------------------------
def _linear_init(key, din, dout, scale=0.05):
  kw, kb = jax.random.split(key)
  w = scale * jax.random.normal(kw, (din, dout), jnp.float32)
  b = scale * jax.random.normal(kb, (dout,), jnp.float32)
  return np.asarray(w), np.asarray(b)


def build_params(key, shapes, latent_dim, hidden):
  mods = ("vision", "audio", "tactile")
  L = latent_dim
  Lp = _round_up(L, LANE)
  Hp = _round_up(hidden, LANE)
  flat = {m: int(np.prod(shapes[m])) for m in mods}
  in_pad = {m: _round_up(flat[m], LANE) for m in mods}
  out_pad = dict(in_pad)  # reconstruction dims == input dims
  Din = sum(in_pad[m] for m in mods)
  Dout = sum(out_pad[m] for m in mods)

  keys = jax.random.split(key, 6)
  enc_w1 = np.zeros((Din, 3 * Hp), np.float32)
  enc_b1 = np.zeros((1, 3 * Hp), np.float32)
  enc_wh = np.zeros((3 * Hp, 6 * Lp), np.float32)
  enc_bh = np.zeros((1, 6 * Lp), np.float32)
  dec_w1 = np.zeros((3 * Lp, 3 * Hp), np.float32)
  dec_b1 = np.zeros((1, 3 * Hp), np.float32)
  dec_w2 = np.zeros((3 * Hp, Dout), np.float32)
  dec_b2 = np.zeros((1, Dout), np.float32)

  in_off, out_off = 0, 0
  in_offsets, out_offsets = {}, {}
  for i, m in enumerate(mods):
    ek1, ek2, ek3 = jax.random.split(keys[i], 3)
    dk1, dk2 = jax.random.split(keys[3 + i], 2)
    w1, b1 = _linear_init(ek1, flat[m], hidden)
    wmu, bmu = _linear_init(ek2, hidden, L)
    wlv, blv = _linear_init(ek3, hidden, L)
    v1, c1 = _linear_init(dk1, L, hidden)
    v2, c2 = _linear_init(dk2, hidden, flat[m])

    enc_w1[in_off:in_off + flat[m], i * Hp:i * Hp + hidden] = w1
    enc_b1[0, i * Hp:i * Hp + hidden] = b1
    enc_wh[i * Hp:i * Hp + hidden, 2 * i * Lp:2 * i * Lp + L] = wmu
    enc_wh[i * Hp:i * Hp + hidden, (2 * i + 1) * Lp:(2 * i + 1) * Lp + L] = wlv
    enc_bh[0, 2 * i * Lp:2 * i * Lp + L] = bmu
    enc_bh[0, (2 * i + 1) * Lp:(2 * i + 1) * Lp + L] = blv
    dec_w1[i * Lp:i * Lp + L, i * Hp:i * Hp + hidden] = v1
    dec_b1[0, i * Hp:i * Hp + hidden] = c1
    dec_w2[i * Hp:i * Hp + hidden, out_off:out_off + flat[m]] = v2
    dec_b2[0, out_off:out_off + flat[m]] = c2

    in_offsets[m] = in_off
    out_offsets[m] = out_off
    in_off += in_pad[m]
    out_off += out_pad[m]

  bf16 = lambda a: jnp.asarray(a, jnp.bfloat16)
  f32 = lambda a: jnp.asarray(a, jnp.float32)
  return dict(
      latent_dim=L, Lp=Lp, Hp=Hp,
      flat=flat, in_pad=in_pad, out_pad=out_pad,
      in_offsets=in_offsets, out_offsets=out_offsets,
      enc_w1=bf16(enc_w1), enc_b1=f32(enc_b1),
      enc_wh=bf16(enc_wh), enc_bh=f32(enc_bh),
      dec_w1=bf16(dec_w1), dec_b1=f32(dec_b1),
      dec_w2=bf16(dec_w2), dec_b2=f32(dec_b2),
  )


# ----------------------------------------------------------------------------
# MultiVAE forward (all-three-modalities path, training-mode reparam)
# ----------------------------------------------------------------------------
class MultiVAE:
  def __init__(self, latent_dim, shapes, hidden=32, seed=42, block_b=128):
    self.latent_dim = latent_dim
    self.shapes = shapes
    self.block_b = block_b
    self.params = build_params(jax.random.PRNGKey(seed), shapes, latent_dim, hidden)
    # TODO(synk): eval-mode reparameterization (z = mu) and the missing-modality
    # (mixture_product_2experts) branches of the PyTorch module are not
    # implemented; only the all-3-modalities training-mode path is fused here.

  def __call__(self, vision, audio, tactile, noise_key):
    p = self.params
    B = vision.shape[0]
    L, Lp = self.latent_dim, p["Lp"]
    mods = ("vision", "audio", "tactile")
    data = dict(vision=vision, audio=audio, tactile=tactile)

    # Choose batch tile: whole (sublane-padded) batch if small, else block_b.
    block_b = self.block_b
    if B <= block_b:
      b_pad = max(SUBLANE, _round_up(B, SUBLANE))
      block_b = b_pad
    else:
      b_pad = _round_up(B, block_b)

    # Lane-dense input slab:  | vision | pad | audio | pad | tactile | pad |
    din = sum(p["in_pad"][m] for m in mods)
    x_slab = jnp.zeros((b_pad, din), jnp.float32)
    for m in mods:
      flat_m = data[m].reshape(B, -1).astype(jnp.float32)
      off = p["in_offsets"][m]
      x_slab = x_slab.at[:B, off:off + p["flat"][m]].set(flat_m)

    # Noise slab (training-mode reparameterization), one Lp segment per modality.
    n_slab = jnp.zeros((b_pad, 3 * Lp), jnp.float32)
    keys = jax.random.split(noise_key, 3)
    for i, m in enumerate(mods):
      n = jax.random.normal(keys[i], (B, L), jnp.float32)
      n_slab = n_slab.at[:B, i * Lp:i * Lp + L].set(n)

    recon, mu, logvar = multivae_forward(p, x_slab, n_slab, block_b=block_b)

    outs = []
    for m in mods:
      off = p["out_offsets"][m]
      outs.append(recon[:B, off:off + p["flat"][m]].reshape((B,) + self.shapes[m]))
    return outs[0], outs[1], outs[2], mu[:B, :L], logvar[:B, :L]


# ----------------------------------------------------------------------------
if __name__ == "__main__":
  B = 2
  LATENT = 28  # divisible by 7 so all MoPoE segments are non-degenerate
  shapes = {
      "vision": (3, 16, 16),   # per-sample CHW
      "audio": (8, 16),        # (channels, time)
      "tactile": (4, 8),       # (taxel rows, cols)
  }

  key = jax.random.PRNGKey(0)
  kv, ka, kt, kn = jax.random.split(key, 4)
  vision = jax.random.normal(kv, (B,) + shapes["vision"], jnp.float32)
  audio = jax.random.normal(ka, (B,) + shapes["audio"], jnp.float32)
  tactile = jax.random.normal(kt, (B,) + shapes["tactile"], jnp.float32)

  model = MultiVAE(LATENT, shapes, hidden=32)
  out = jax.block_until_ready(model(vision, audio, tactile, kn))

  vr, ar, tr, mu, logvar = out
  assert vr.shape == (B,) + shapes["vision"]
  assert ar.shape == (B,) + shapes["audio"]
  assert tr.shape == (B,) + shapes["tactile"]
  assert mu.shape == (B, LATENT) and logvar.shape == (B, LATENT)
  assert all(bool(jnp.all(jnp.isfinite(x))) for x in (vr, ar, tr, mu, logvar))
  print("KERNEL_OK")
</pallas_src>

<mosaic_0001>
module attributes {stable_mosaic.version = 11 : i64} {
  func.func @_mvae_fused_kernel(%arg0: i32, %arg1: memref<8x1024xf32, #tpu.memory_space<vmem>>, %arg2: memref<8x384xf32, #tpu.memory_space<vmem>>, %arg3: memref<1024x384xbf16, #tpu.memory_space<vmem>>, %arg4: memref<1x384xf32, #tpu.memory_space<vmem>>, %arg5: memref<384x768xbf16, #tpu.memory_space<vmem>>, %arg6: memref<1x768xf32, #tpu.memory_space<vmem>>, %arg7: memref<384x384xbf16, #tpu.memory_space<vmem>>, %arg8: memref<1x384xf32, #tpu.memory_space<vmem>>, %arg9: memref<384x1024xbf16, #tpu.memory_space<vmem>>, %arg10: memref<1x1024xf32, #tpu.memory_space<vmem>>, %arg11: memref<8x1024xf32, #tpu.memory_space<vmem>>, %arg12: memref<8x128xf32, #tpu.memory_space<vmem>>, %arg13: memref<8x128xf32, #tpu.memory_space<vmem>>) attributes {dimension_semantics = [#tpu.dimension_semantics<parallel>], iteration_bounds = array<i64: 1>, scalar_prefetch = 0 : i64, scratch_operands = 0 : i64, tpu.core_type = #tpu.core_type<tc>, window_params = [{transform_indices = @transform_0, window_bounds = array<i64: 8, 1024>}, {transform_indices = @transform_1, window_bounds = array<i64: 8, 384>}, {pipeline_mode = #tpu.pipeline_mode<synchronous>, transform_indices = @transform_2, window_bounds = array<i64: 1024, 384>}, {pipeline_mode = #tpu.pipeline_mode<synchronous>, transform_indices = @transform_3, window_bounds = array<i64: 1, 384>}, {pipeline_mode = #tpu.pipeline_mode<synchronous>, transform_indices = @transform_4, window_bounds = array<i64: 384, 768>}, {pipeline_mode = #tpu.pipeline_mode<synchronous>, transform_indices = @transform_5, window_bounds = array<i64: 1, 768>}, {pipeline_mode = #tpu.pipeline_mode<synchronous>, transform_indices = @transform_6, window_bounds = array<i64: 384, 384>}, {pipeline_mode = #tpu.pipeline_mode<synchronous>, transform_indices = @transform_7, window_bounds = array<i64: 1, 384>}, {pipeline_mode = #tpu.pipeline_mode<synchronous>, transform_indices = @transform_8, window_bounds = array<i64: 384, 1024>}, {pipeline_mode = #tpu.pipeline_mode<synchronous>, transform_indices = @transform_9, window_bounds = array<i64: 1, 1024>}, {transform_indices = @transform_10, window_bounds = array<i64: 8, 1024>}, {transform_indices = @transform_11, window_bounds = array<i64: 8, 128>}, {transform_indices = @transform_12, window_bounds = array<i64: 8, 128>}]} {
    %c0 = arith.constant 0 : index
    %c0_0 = arith.constant 0 : index
    %0 = vector.load %arg1[%c0, %c0_0] : memref<8x1024xf32, #tpu.memory_space<vmem>>, vector<8x1024xf32>
    %1 = arith.truncf %0 : vector<8x1024xf32> to vector<8x1024xbf16>
    %c0_1 = arith.constant 0 : index
    %c0_2 = arith.constant 0 : index
    %2 = vector.load %arg3[%c0_1, %c0_2] : memref<1024x384xbf16, #tpu.memory_space<vmem>>, vector<1024x384xbf16>
    %cst = arith.constant dense<0.000000e+00> : vector<8x384xf32>
    %3 = tpu.matmul %1, %2, %cst {dimension_numbers = #tpu.dot_dimension_numbers<[1], [0], [0], [1], [0, 0, 1, 1], [], []>} : vector<8x1024xbf16>, vector<1024x384xbf16>, vector<8x384xf32> -> vector<8x384xf32>
    %c0_3 = arith.constant 0 : index
    %c0_4 = arith.constant 0 : index
    %4 = vector.load %arg4[%c0_3, %c0_4] : memref<1x384xf32, #tpu.memory_space<vmem>>, vector<1x384xf32>
    %5 = vector.broadcast %4 : vector<1x384xf32> to vector<8x384xf32>
    %6 = arith.addf %3, %5 : vector<8x384xf32>
    %cst_5 = arith.constant 0.000000e+00 : f32
    %7 = vector.broadcast %cst_5 : f32 to vector<8x384xf32>
    %8 = arith.maximumf %6, %7 : vector<8x384xf32>
    %9 = arith.truncf %8 : vector<8x384xf32> to vector<8x384xbf16>
    %c0_6 = arith.constant 0 : index
    %c0_7 = arith.constant 0 : index
    %10 = vector.load %arg5[%c0_6, %c0_7] : memref<384x768xbf16, #tpu.memory_space<vmem>>, vector<384x768xbf16>
    %cst_8 = arith.constant dense<0.000000e+00> : vector<8x768xf32>
    %11 = tpu.matmul %9, %10, %cst_8 {dimension_numbers = #tpu.dot_dimension_numbers<[1], [0], [0], [1], [0, 0, 1, 1], [], []>} : vector<8x384xbf16>, vector<384x768xbf16>, vector<8x768xf32> -> vector<8x768xf32>
    %c0_9 = arith.constant 0 : index
    %c0_10 = arith.constant 0 : index
    %12 = vector.load %arg6[%c0_9, %c0_10] : memref<1x768xf32, #tpu.memory_space<vmem>>, vector<1x768xf32>
    %13 = vector.broadcast %12 : vector<1x768xf32> to vector<8x768xf32>
    %14 = arith.addf %11, %13 : vector<8x768xf32>
    %15 = vector.extract_strided_slice %14 {offsets = [0, 0], sizes = [8, 128], strides = [1, 1]} : vector<8x768xf32> to vector<8x128xf32>
    %16 = vector.extract_strided_slice %14 {offsets = [0, 128], sizes = [8, 128], strides = [1, 1]} : vector<8x768xf32> to vector<8x128xf32>
    %17 = vector.extract_strided_slice %14 {offsets = [0, 256], sizes = [8, 128], strides = [1, 1]} : vector<8x768xf32> to vector<8x128xf32>
    %18 = vector.extract_strided_slice %14 {offsets = [0, 384], sizes = [8, 128], strides = [1, 1]} : vector<8x768xf32> to vector<8x128xf32>
    %19 = vector.extract_strided_slice %14 {offsets = [0, 512], sizes = [8, 128], strides = [1, 1]} : vector<8x768xf32> to vector<8x128xf32>
    %20 = vector.extract_strided_slice %14 {offsets = [0, 640], sizes = [8, 128], strides = [1, 1]} : vector<8x768xf32> to vector<8x128xf32>
    %21 = math.exp %16 : vector<8x128xf32>
    %22 = math.exp %18 : vector<8x128xf32>
    %23 = math.exp %20 : vector<8x128xf32>
    %cst_11 = arith.constant 2.000000e-08 : f32
    %24 = vector.broadcast %cst_11 : f32 to vector<8x128xf32>
    %25 = arith.addf %21, %24 : vector<8x128xf32>
    %26 = tpu.reciprocal %25 {approx = true} : vector<8x128xf32> -> vector<8x128xf32>
    %cst_12 = arith.constant 2.000000e-08 : f32
    %27 = vector.broadcast %cst_12 : f32 to vector<8x128xf32>
    %28 = arith.addf %22, %27 : vector<8x128xf32>
    %29 = tpu.reciprocal %28 {approx = true} : vector<8x128xf32> -> vector<8x128xf32>
    %cst_13 = arith.constant 2.000000e-08 : f32
    %30 = vector.broadcast %cst_13 : f32 to vector<8x128xf32>
    %31 = arith.addf %23, %30 : vector<8x128xf32>
    %32 = tpu.reciprocal %31 {approx = true} : vector<8x128xf32> -> vector<8x128xf32>
    %cst_14 = arith.constant 0.000000e+00 : f32
    %33 = vector.broadcast %cst_14 : f32 to vector<8x128xf32>
    %34 = arith.addf %33, %26 : vector<8x128xf32>
    %35 = arith.addf %34, %29 : vector<8x128xf32>
    %36 = tpu.reciprocal %35 {approx = true} : vector<8x128xf32> -> vector<8x128xf32>
    %37 = arith.mulf %15, %26 : vector<8x128xf32>
    %cst_15 = arith.constant 0.000000e+00 : f32
    %38 = vector.broadcast %cst_15 : f32 to vector<8x128xf32>
    %39 = arith.addf %38, %37 : vector<8x128xf32>
    %40 = arith.mulf %17, %29 : vector<8x128xf32>
    %41 = arith.addf %39, %40 : vector<8x128xf32>
    %42 = arith.mulf %41, %36 : vector<8x128xf32>
    %cst_16 = arith.constant 9.99999993E-9 : f32
    %43 = vector.broadcast %cst_16 : f32 to vector<8x128xf32>
    %44 = arith.addf %36, %43 : vector<8x128xf32>
    %45 = math.log %44 : vector<8x128xf32>
    %cst_17 = arith.constant 0.000000e+00 : f32
    %46 = vector.broadcast %cst_17 : f32 to vector<8x128xf32>
    %47 = arith.addf %46, %29 : vector<8x128xf32>
    %48 = arith.addf %47, %32 : vector<8x128xf32>
    %49 = tpu.reciprocal %48 {approx = true} : vector<8x128xf32> -> vector<8x128xf32>
    %50 = arith.mulf %17, %29 : vector<8x128xf32>
    %cst_18 = arith.constant 0.000000e+00 : f32
    %51 = vector.broadcast %cst_18 : f32 to vector<8x128xf32>
    %52 = arith.addf %51, %50 : vector<8x128xf32>
    %53 = arith.mulf %19, %32 : vector<8x128xf32>
    %54 = arith.addf %52, %53 : vector<8x128xf32>
    %55 = arith.mulf %54, %49 : vector<8x128xf32>
    %cst_19 = arith.constant 9.99999993E-9 : f32
    %56 = vector.broadcast %cst_19 : f32 to vector<8x128xf32>
    %57 = arith.addf %49, %56 : vector<8x128xf32>
    %58 = math.log %57 : vector<8x128xf32>
    %cst_20 = arith.constant 0.000000e+00 : f32
    %59 = vector.broadcast %cst_20 : f32 to vector<8x128xf32>
    %60 = arith.addf %59, %32 : vector<8x128xf32>
    %61 = arith.addf %60, %26 : vector<8x128xf32>
    %62 = tpu.reciprocal %61 {approx = true} : vector<8x128xf32> -> vector<8x128xf32>
    %63 = arith.mulf %19, %32 : vector<8x128xf32>
    %cst_21 = arith.constant 0.000000e+00 : f32
    %64 = vector.broadcast %cst_21 : f32 to vector<8x128xf32>
    %65 = arith.addf %64, %63 : vector<8x128xf32>
    %66 = arith.mulf %15, %26 : vector<8x128xf32>
    %67 = arith.addf %65, %66 : vector<8x128xf32>
    %68 = arith.mulf %67, %62 : vector<8x128xf32>
    %cst_22 = arith.constant 9.99999993E-9 : f32
    %69 = vector.broadcast %cst_22 : f32 to vector<8x128xf32>
    %70 = arith.addf %62, %69 : vector<8x128xf32>
    %71 = math.log %70 : vector<8x128xf32>
    %cst_23 = arith.constant 0.000000e+00 : f32
    %72 = vector.broadcast %cst_23 : f32 to vector<8x128xf32>
    %73 = arith.addf %72, %26 : vector<8x128xf32>
    %74 = arith.addf %73, %29 : vector<8x128xf32>
    %75 = arith.addf %74, %32 : vector<8x128xf32>
    %76 = tpu.reciprocal %75 {approx = true} : vector<8x128xf32> -> vector<8x128xf32>
    %77 = arith.mulf %15, %26 : vector<8x128xf32>
    %cst_24 = arith.constant 0.000000e+00 : f32
    %78 = vector.broadcast %cst_24 : f32 to vector<8x128xf32>
    %79 = arith.addf %78, %77 : vector<8x128xf32>
    %80 = arith.mulf %17, %29 : vector<8x128xf32>
    %81 = arith.addf %79, %80 : vector<8x128xf32>
    %82 = arith.mulf %19, %32 : vector<8x128xf32>
    %83 = arith.addf %81, %82 : vector<8x128xf32>
    %84 = arith.mulf %83, %76 : vector<8x128xf32>
    %cst_25 = arith.constant 9.99999993E-9 : f32
    %85 = vector.broadcast %cst_25 : f32 to vector<8x128xf32>
    %86 = arith.addf %76, %85 : vector<8x128xf32>
    %87 = math.log %86 : vector<8x128xf32>
    %88 = tpu.iota {dimensions = array<i32: 1>} : vector<8x128xi32>
    %c4_i32 = arith.constant 4 : i32
    %89 = vector.broadcast %c4_i32 : i32 to vector<8x128xi32>
    %90 = arith.cmpi slt, %88, %89 : vector<8x128xi32>
    %c8_i32 = arith.constant 8 : i32
    %91 = vector.broadcast %c8_i32 : i32 to vector<8x128xi32>
    %92 = arith.cmpi slt, %88, %91 : vector<8x128xi32>
    %c12_i32 = arith.constant 12 : i32
    %93 = vector.broadcast %c12_i32 : i32 to vector<8x128xi32>
    %94 = arith.cmpi slt, %88, %93 : vector<8x128xi32>
    %c16_i32 = arith.constant 16 : i32
    %95 = vector.broadcast %c16_i32 : i32 to vector<8x128xi32>
    %96 = arith.cmpi slt, %88, %95 : vector<8x128xi32>
    %c20_i32 = arith.constant 20 : i32
    %97 = vector.broadcast %c20_i32 : i32 to vector<8x128xi32>
    %98 = arith.cmpi slt, %88, %97 : vector<8x128xi32>
    %c24_i32 = arith.constant 24 : i32
    %99 = vector.broadcast %c24_i32 : i32 to vector<8x128xi32>
    %100 = arith.cmpi slt, %88, %99 : vector<8x128xi32>
    %101 = arith.select %100, %68, %84 : vector<8x128xi1>, vector<8x128xf32>
    %102 = arith.select %98, %55, %101 : vector<8x128xi1>, vector<8x128xf32>
    %103 = arith.select %96, %42, %102 : vector<8x128xi1>, vector<8x128xf32>
    %104 = arith.select %94, %19, %103 : vector<8x128xi1>, vector<8x128xf32>
    %105 = arith.select %92, %17, %104 : vector<8x128xi1>, vector<8x128xf32>
    %106 = arith.select %90, %15, %105 : vector<8x128xi1>, vector<8x128xf32>
    %c0_26 = arith.constant 0 : index
    %c0_27 = arith.constant 0 : index
    %107 = vector.load %arg12[%c0_26, %c0_27] : memref<8x128xf32, #tpu.memory_space<vmem>>, vector<8x128xf32>
    tpu.vector_store %arg12[%c0_26, %c0_27], %106 {strides = array<i32>} : memref<8x128xf32, #tpu.memory_space<vmem>>, vector<8x128xf32>,
    %108 = arith.select %100, %71, %87 : vector<8x128xi1>, vector<8x128xf32>
    %109 = arith.select %98, %58, %108 : vector<8x128xi1>, vector<8x128xf32>
    %110 = arith.select %96, %45, %109 : vector<8x128xi1>, vector<8x128xf32>
    %111 = arith.select %94, %20, %110 : vector<8x128xi1>, vector<8x128xf32>
    %112 = arith.select %92, %18, %111 : vector<8x128xi1>, vector<8x128xf32>
    %113 = arith.select %90, %16, %112 : vector<8x128xi1>, vector<8x128xf32>
    %c0_28 = arith.constant 0 : index
    %c0_29 = arith.constant 0 : index
    %114 = vector.load %arg13[%c0_28, %c0_29] : memref<8x128xf32, #tpu.memory_space<vmem>>, vector<8x128xf32>
    tpu.vector_store %arg13[%c0_28, %c0_29], %113 {strides = array<i32>} : memref<8x128xf32, #tpu.memory_space<vmem>>, vector<8x128xf32>,
    %c0_30 = arith.constant 0 : index
    %c0_31 = arith.constant 0 : index
    %115 = vector.load %arg2[%c0_30, %c0_31] : memref<8x384xf32, #tpu.memory_space<vmem>>, vector<8x384xf32>
    %116 = vector.extract_strided_slice %115 {offsets = [0, 0], sizes = [8, 128], strides = [1, 1]} : vector<8x384xf32> to vector<8x128xf32>
    %117 = math.sqrt %21 : vector<8x128xf32>
    %118 = arith.mulf %116, %117 : vector<8x128xf32>
    %119 = arith.addf %15, %118 : vector<8x128xf32>
    %120 = vector.extract_strided_slice %115 {offsets = [0, 128], sizes = [8, 128], strides = [1, 1]} : vector<8x384xf32> to vector<8x128xf32>
    %121 = math.sqrt %22 : vector<8x128xf32>
    %122 = arith.mulf %120, %121 : vector<8x128xf32>
    %123 = arith.addf %17, %122 : vector<8x128xf32>
    %124 = vector.extract_strided_slice %115 {offsets = [0, 256], sizes = [8, 128], strides = [1, 1]} : vector<8x384xf32> to vector<8x128xf32>
    %125 = math.sqrt %23 : vector<8x128xf32>
    %126 = arith.mulf %124, %125 : vector<8x128xf32>
    %127 = arith.addf %19, %126 : vector<8x128xf32>
    %128 = tpu.concatenate %119, %123, %127 in 1 : vector<8x128xf32>, vector<8x128xf32>, vector<8x128xf32> -> vector<8x384xf32>
    %129 = arith.truncf %128 : vector<8x384xf32> to vector<8x384xbf16>
    %c0_32 = arith.constant 0 : index
    %c0_33 = arith.constant 0 : index
    %130 = vector.load %arg7[%c0_32, %c0_33] : memref<384x384xbf16, #tpu.memory_space<vmem>>, vector<384x384xbf16>
    %cst_34 = arith.constant dense<0.000000e+00> : vector<8x384xf32>
    %131 = tpu.matmul %129, %130, %cst_34 {dimension_numbers = #tpu.dot_dimension_numbers<[1], [0], [0], [1], [0, 0, 1, 1], [], []>} : vector<8x384xbf16>, vector<384x384xbf16>, vector<8x384xf32> -> vector<8x384xf32>
    %c0_35 = arith.constant 0 : index
    %c0_36 = arith.constant 0 : index
    %132 = vector.load %arg8[%c0_35, %c0_36] : memref<1x384xf32, #tpu.memory_space<vmem>>, vector<1x384xf32>
    %133 = vector.broadcast %132 : vector<1x384xf32> to vector<8x384xf32>
    %134 = arith.addf %131, %133 : vector<8x384xf32>
    %cst_37 = arith.constant 0.000000e+00 : f32
    %135 = vector.broadcast %cst_37 : f32 to vector<8x384xf32>
    %136 = arith.maximumf %134, %135 : vector<8x384xf32>
    %137 = arith.truncf %136 : vector<8x384xf32> to vector<8x384xbf16>
    %c0_38 = arith.constant 0 : index
    %c0_39 = arith.constant 0 : index
    %138 = vector.load %arg9[%c0_38, %c0_39] : memref<384x1024xbf16, #tpu.memory_space<vmem>>, vector<384x1024xbf16>
    %cst_40 = arith.constant dense<0.000000e+00> : vector<8x1024xf32>
    %139 = tpu.matmul %137, %138, %cst_40 {dimension_numbers = #tpu.dot_dimension_numbers<[1], [0], [0], [1], [0, 0, 1, 1], [], []>} : vector<8x384xbf16>, vector<384x1024xbf16>, vector<8x1024xf32> -> vector<8x1024xf32>
    %c0_41 = arith.constant 0 : index
    %c0_42 = arith.constant 0 : index
    %140 = vector.load %arg10[%c0_41, %c0_42] : memref<1x1024xf32, #tpu.memory_space<vmem>>, vector<1x1024xf32>
    %141 = vector.broadcast %140 : vector<1x1024xf32> to vector<8x1024xf32>
    %142 = arith.addf %139, %141 : vector<8x1024xf32>
    %c0_43 = arith.constant 0 : index
    %c0_44 = arith.constant 0 : index
    %143 = vector.load %arg11[%c0_43, %c0_44] : memref<8x1024xf32, #tpu.memory_space<vmem>>, vector<8x1024xf32>
    tpu.vector_store %arg11[%c0_43, %c0_44], %142 {strides = array<i32>} : memref<8x1024xf32, #tpu.memory_space<vmem>>, vector<8x1024xf32>,
    return
  }
  func.func @transform_0(%arg0: i32) -> (i32, i32) {
    %c0_i32 = arith.constant 0 : i32
    %c0_i32_0 = arith.constant 0 : i32
    return %arg0, %c0_i32 : i32, i32
  }
  func.func @transform_1(%arg0: i32) -> (i32, i32) {
    %c0_i32 = arith.constant 0 : i32
    %c0_i32_0 = arith.constant 0 : i32
    return %arg0, %c0_i32 : i32, i32
  }
  func.func @transform_2(%arg0: i32) -> (i32, i32) {
    %c0_i32 = arith.constant 0 : i32
    %c0_i32_0 = arith.constant 0 : i32
    %c0_i32_1 = arith.constant 0 : i32
    return %c0_i32, %c0_i32_0 : i32, i32
  }
  func.func @transform_3(%arg0: i32) -> (i32, i32) {
    %c0_i32 = arith.constant 0 : i32
    %c0_i32_0 = arith.constant 0 : i32
    %c0_i32_1 = arith.constant 0 : i32
    return %c0_i32, %c0_i32_0 : i32, i32
  }
  func.func @transform_4(%arg0: i32) -> (i32, i32) {
    %c0_i32 = arith.constant 0 : i32
    %c0_i32_0 = arith.constant 0 : i32
    %c0_i32_1 = arith.constant 0 : i32
    return %c0_i32, %c0_i32_0 : i32, i32
  }
  func.func @transform_5(%arg0: i32) -> (i32, i32) {
    %c0_i32 = arith.constant 0 : i32
    %c0_i32_0 = arith.constant 0 : i32
    %c0_i32_1 = arith.constant 0 : i32
    return %c0_i32, %c0_i32_0 : i32, i32
  }
  func.func @transform_6(%arg0: i32) -> (i32, i32) {
    %c0_i32 = arith.constant 0 : i32
    %c0_i32_0 = arith.constant 0 : i32
    %c0_i32_1 = arith.constant 0 : i32
    return %c0_i32, %c0_i32_0 : i32, i32
  }
  func.func @transform_7(%arg0: i32) -> (i32, i32) {
    %c0_i32 = arith.constant 0 : i32
    %c0_i32_0 = arith.constant 0 : i32
    %c0_i32_1 = arith.constant 0 : i32
    return %c0_i32, %c0_i32_0 : i32, i32
  }
  func.func @transform_8(%arg0: i32) -> (i32, i32) {
    %c0_i32 = arith.constant 0 : i32
    %c0_i32_0 = arith.constant 0 : i32
    %c0_i32_1 = arith.constant 0 : i32
    return %c0_i32, %c0_i32_0 : i32, i32
  }
  func.func @transform_9(%arg0: i32) -> (i32, i32) {
    %c0_i32 = arith.constant 0 : i32
    %c0_i32_0 = arith.constant 0 : i32
    %c0_i32_1 = arith.constant 0 : i32
    return %c0_i32, %c0_i32_0 : i32, i32
  }
  func.func @transform_10(%arg0: i32) -> (i32, i32) {
    %c0_i32 = arith.constant 0 : i32
    %c0_i32_0 = arith.constant 0 : i32
    return %arg0, %c0_i32 : i32, i32
  }
  func.func @transform_11(%arg0: i32) -> (i32, i32) {
    %c0_i32 = arith.constant 0 : i32
    %c0_i32_0 = arith.constant 0 : i32
    return %arg0, %c0_i32 : i32, i32
  }
  func.func @transform_12(%arg0: i32) -> (i32, i32) {
    %c0_i32 = arith.constant 0 : i32
    %c0_i32_0 = arith.constant 0 : i32
    return %arg0, %c0_i32 : i32, i32
  }
}

</mosaic_0001>

<llo_original>
// kernel: tpu_custom_call.1
$region0: #{tpu_custom_call.1}
  #allocation0 [shape = 'u32[]', space=smem, size = 0x4, offset = 0x4, fixed_abs, tag = 'smem constant byte address 0x4 - core index']
  #allocation1 [shape = 'u32[144,128]{1,0:T(1,128)}', space=vmem, size = 0x12000, scoped, tag = 'internal scratch']
  %s0 = inlined_call_operand.hbm [shape: f32[8,1024], index: 0, kind: input, shape index: {}]
  %s1 = inlined_call_operand.hbm [shape: f32[8,384], index: 1, kind: input, shape index: {}]
  %s2 = inlined_call_operand.hbm [shape: bf16[1024,384], index: 2, kind: input, shape index: {}]
  %s3 = inlined_call_operand.hbm [shape: f32[1,384], index: 3, kind: input, shape index: {}]
  %s4 = inlined_call_operand.hbm [shape: bf16[384,768], index: 4, kind: input, shape index: {}]
  %s5 = inlined_call_operand.vmem [shape: f32[1,768], index: 5, kind: input, shape index: {}]
  %s6 = inlined_call_operand.hbm [shape: bf16[384,384], index: 6, kind: input, shape index: {}]
  %s7 = inlined_call_operand.hbm [shape: f32[1,384], index: 7, kind: input, shape index: {}]
  %s8 = inlined_call_operand.hbm [shape: bf16[384,1024], index: 8, kind: input, shape index: {}]
  %s9 = inlined_call_operand.vmem [shape: f32[1,1024], index: 9, kind: input, shape index: {}]
  %s10 = inlined_call_operand.hbm [shape: f32[8,1024], index: 10, kind: output, shape index: {0}]
  %s11 = inlined_call_operand.hbm [shape: f32[8,128], index: 11, kind: output, shape index: {1}]
  %s12 = inlined_call_operand.hbm [shape: f32[8,128], index: 12, kind: output, shape index: {2}]
  %13 = xla_tuple %s10, %s11, %s12
  %s14 = sld [smem:[#allocation0]]
  $region98: #{tpu_custom_call.1} parent=0
    _
  %s16 = ssub.s32 1, %s14
  %s17 = scalar_select 0, %s16, %s14
  $region1: #{tpu_custom_call.1} parent=0
    #allocation2 [shape = 'u8[32768]{0}', space=vmem, size = 0x8000, scoped, tag = 'input window, operand 0, single buffered']
    #allocation3 [shape = 's32[1]{0}', space=sflag, size = 0x4, scoped, tag = 'scoped memory for tpu_custom_call.1']
    #allocation4 [shape = 's32[1]{0}', space=sflag, size = 0x4, scoped, tag = 'scoped memory for tpu_custom_call.1']
    #allocation5 [shape = 'u8[12288]{0}', space=vmem, size = 0x3000, scoped, tag = 'input window, operand 1, single buffered']
    #allocation6 [shape = 's32[1]{0}', space=sflag, size = 0x4, scoped, tag = 'scoped memory for tpu_custom_call.1']
    #allocation7 [shape = 'u8[786432]{0}', space=vmem, size = 0xc0000, scoped, tag = 'input window, operand 2, single buffered']
    #allocation8 [shape = 'u8[1536]{0}', space=vmem, size = 0x800, scoped, tag = 'input window, operand 3, single buffered']
    #allocation9 [shape = 's32[1]{0}', space=sflag, size = 0x4, scoped, tag = 'scoped memory for tpu_custom_call.1']
    #allocation10 [shape = 'u8[589824]{0}', space=vmem, size = 0x90000, scoped, tag = 'input window, operand 4, single buffered']
    #allocation11 [shape = 'u8[294912]{0}', space=vmem, size = 0x48000, scoped, tag = 'input window, operand 6, single buffered']
    #allocation12 [shape = 's32[1]{0}', space=sflag, size = 0x4, scoped, tag = 'scoped memory for tpu_custom_call.1']
    #allocation13 [shape = 'u8[1536]{0}', space=vmem, size = 0x800, scoped, tag = 'input window, operand 7, single buffered']
    #allocation14 [shape = 'u8[786432]{0}', space=vmem, size = 0xc0000, scoped, tag = 'input window, operand 8, single buffered']
    #allocation15 [shape = 's32[1]{0}', space=sflag, size = 0x4, scoped, tag = 'scoped memory for tpu_custom_call.1']
    #allocation16 [shape = 'u8[32768]{0}', space=vmem, size = 0x8000, scoped, tag = 'output window, operand 0, single buffered']
    #allocation17 [shape = 'u8[4096]{0}', space=vmem, size = 0x1000, scoped, tag = 'output window, operand 1, single buffered']
    #allocation18 [shape = 's32[1]{0}', space=sflag, size = 0x4, scoped, tag = 'scoped memory for tpu_custom_call.1']
    #allocation19 [shape = 'u8[4096]{0}', space=vmem, size = 0x1000, scoped, tag = 'output window, operand 2, single buffered']
    %18 = vsyncpa [#allocation3], 0
    %19 = vsyncpa [#allocation6], 0
    %20 = vsyncpa [#allocation9], 0
    %21 = vsyncpa [#allocation12], 0
    %22 = vsyncpa [#allocation15], 0
    %23 = vsyncpa [#allocation4], 0
    %24 = vsyncpa [#allocation18], 0
    // Predicated region
    $region2: #{tpu_custom_call.1} parent=1 // pred_check
      _
    $region3: #{tpu_custom_call.1} parent=1 // pred_check_branch
      %26 = sbr.rel (0) target = $region5
    $region4: #{tpu_custom_call.1} parent=1 // pred_region
      %s28 = ssub.s32 1024, 1024
      %29 = vsyncadd [#allocation3], %s28
      %s31 = sshll.u32 [#allocation2], 4
      %s32 = int_to_ptr.vmem [resolvable:$true] %s31
      %34 = dma.hbm_to_vmem [thread:$0]  %s0, 1024, %s32, [#allocation3]
    $region5: #{tpu_custom_call.1} parent=1 // pred_fallthru
      _
    // Predicated region
    $region6: #{tpu_custom_call.1} parent=1 // pred_check
      _
    $region7: #{tpu_custom_call.1} parent=1 // pred_check_branch
      %36 = sbr.rel (0) target = $region9
    $region8: #{tpu_custom_call.1} parent=1 // pred_region
      %s38 = ssub.s32 384, 384
      %39 = vsyncadd [#allocation6], %s38
      %s41 = sshll.u32 [#allocation5], 4
      %s42 = int_to_ptr.vmem [resolvable:$true] %s41
      %44 = dma.hbm_to_vmem [thread:$0]  %s1, 384, %s42, [#allocation6]
    $region9: #{tpu_custom_call.1} parent=1 // pred_fallthru
      _
    // Predicated region
    $region10: #{tpu_custom_call.1} parent=1 // pred_check
      _
    $region11: #{tpu_custom_call.1} parent=1 // pred_check_branch
      %46 = sbr.rel (0) target = $region13
    $region12: #{tpu_custom_call.1} parent=1 // pred_region
      %s48 = ssub.s32 24576, 24576
      %49 = vsyncadd [#allocation6], %s48
      %s50 = sshll.u32 [#allocation7], 4
      %s51 = int_to_ptr.vmem [resolvable:$true] %s50
      %56 = dma.hbm_to_vmem [thread:$0]  %s2, 24576, %s51, [#allocation6], 192, 192, 12
    $region13: #{tpu_custom_call.1} parent=1 // pred_fallthru
      _
    // Predicated region
    $region14: #{tpu_custom_call.1} parent=1 // pred_check
      _
    $region15: #{tpu_custom_call.1} parent=1 // pred_check_branch
      %58 = sbr.rel (0) target = $region17
    $region16: #{tpu_custom_call.1} parent=1 // pred_region
      %s60 = ssub.s32 48, 48
      %61 = vsyncadd [#allocation9], %s60
      %s63 = sshll.u32 [#allocation8], 4
      %s64 = int_to_ptr.vmem [resolvable:$true] %s63
      %66 = dma.hbm_to_vmem [thread:$0]  %s3, 48, %s64, [#allocation9]
    $region17: #{tpu_custom_call.1} parent=1 // pred_fallthru
      _
    // Predicated region
    $region18: #{tpu_custom_call.1} parent=1 // pred_check
      _
    $region19: #{tpu_custom_call.1} parent=1 // pred_check_branch
      %68 = sbr.rel (0) target = $region21
    $region20: #{tpu_custom_call.1} parent=1 // pred_region
      %s70 = ssub.s32 18432, 18432
      %71 = vsyncadd [#allocation9], %s70
      %s72 = sshll.u32 [#allocation10], 4
      %s73 = int_to_ptr.vmem [resolvable:$true] %s72
      %78 = dma.hbm_to_vmem [thread:$0]  %s4, 18432, %s73, [#allocation9], 384, 384, 24
    $region21: #{tpu_custom_call.1} parent=1 // pred_fallthru
      _
    // Predicated region
    $region22: #{tpu_custom_call.1} parent=1 // pred_check
      _
    $region23: #{tpu_custom_call.1} parent=1 // pred_check_branch
      %80 = sbr.rel (0) target = $region25
    $region24: #{tpu_custom_call.1} parent=1 // pred_region
      _
    $region25: #{tpu_custom_call.1} parent=1 // pred_fallthru
      _
    // Predicated region
    $region26: #{tpu_custom_call.1} parent=1 // pred_check
      _
    $region27: #{tpu_custom_call.1} parent=1 // pred_check_branch
      %82 = sbr.rel (0) target = $region29
    $region28: #{tpu_custom_call.1} parent=1 // pred_region
      %s84 = ssub.s32 9216, 9216
      %85 = vsyncadd [#allocation12], %s84
      %s86 = sshll.u32 [#allocation11], 4
      %s87 = int_to_ptr.vmem [resolvable:$true] %s86
      %92 = dma.hbm_to_vmem [thread:$0]  %s6, 9216, %s87, [#allocation12], 192, 192, 12
    $region29: #{tpu_custom_call.1} parent=1 // pred_fallthru
      _
    // Predicated region
    $region30: #{tpu_custom_call.1} parent=1 // pred_check
      _
    $region31: #{tpu_custom_call.1} parent=1 // pred_check_branch
      %94 = sbr.rel (0) target = $region33
    $region32: #{tpu_custom_call.1} parent=1 // pred_region
      %s96 = ssub.s32 48, 48
      %97 = vsyncadd [#allocation12], %s96
      %s99 = sshll.u32 [#allocation13], 4
      %s100 = int_to_ptr.vmem [resolvable:$true] %s99
      %102 = dma.hbm_to_vmem [thread:$0]  %s7, 48, %s100, [#allocation12]
    $region33: #{tpu_custom_call.1} parent=1 // pred_fallthru
      _
    // Predicated region
    $region34: #{tpu_custom_call.1} parent=1 // pred_check
      _
    $region35: #{tpu_custom_call.1} parent=1 // pred_check_branch
      %104 = sbr.rel (0) target = $region37
    $region36: #{tpu_custom_call.1} parent=1 // pred_region
      %s106 = ssub.s32 24576, 24576
      %107 = vsyncadd [#allocation15], %s106
      %s108 = sshll.u32 [#allocation14], 4
      %s109 = int_to_ptr.vmem [resolvable:$true] %s108
      %114 = dma.hbm_to_vmem [thread:$0]  %s8, 24576, %s109, [#allocation15], 512, 512, 32
    $region37: #{tpu_custom_call.1} parent=1 // pred_fallthru
      _
    // Predicated region
    $region38: #{tpu_custom_call.1} parent=1 // pred_check
      _
    $region39: #{tpu_custom_call.1} parent=1 // pred_check_branch
      %116 = sbr.rel (0) target = $region41
    $region40: #{tpu_custom_call.1} parent=1 // pred_region
      _
    $region41: #{tpu_custom_call.1} parent=1 // pred_fallthru
      _
    // Predicated region
    $region42: #{tpu_custom_call.1} parent=1 // pred_check
      _
    $region43: #{tpu_custom_call.1} parent=1 // pred_check_branch
      %118 = sbr.rel (0) target = $region45
    $region44: #{tpu_custom_call.1} parent=1 // pred_region
      %119 = dma.done [#allocation3], 1024
    $region45: #{tpu_custom_call.1} parent=1 // pred_fallthru
      _
    // Predicated region
    $region46: #{tpu_custom_call.1} parent=1 // pred_check
      _
    $region47: #{tpu_custom_call.1} parent=1 // pred_check_branch
      %121 = sbr.rel (0) target = $region49
    $region48: #{tpu_custom_call.1} parent=1 // pred_region
      %122 = dma.done [#allocation6], 384
    $region49: #{tpu_custom_call.1} parent=1 // pred_fallthru
      _
    // Predicated region
    $region50: #{tpu_custom_call.1} parent=1 // pred_check
      _
    $region51: #{tpu_custom_call.1} parent=1 // pred_check_branch
      %124 = sbr.rel (0) target = $region53
    $region52: #{tpu_custom_call.1} parent=1 // pred_region
      %125 = dma.done [#allocation6], 24576
    $region53: #{tpu_custom_call.1} parent=1 // pred_fallthru
      _
    // Predicated region
    $region54: #{tpu_custom_call.1} parent=1 // pred_check
      _
    $region55: #{tpu_custom_call.1} parent=1 // pred_check_branch
      %127 = sbr.rel (0) target = $region57
    $region56: #{tpu_custom_call.1} parent=1 // pred_region
      %128 = dma.done [#allocation9], 48
    $region57: #{tpu_custom_call.1} parent=1 // pred_fallthru
      _
    // Predicated region
    $region58: #{tpu_custom_call.1} parent=1 // pred_check
      _
    $region59: #{tpu_custom_call.1} parent=1 // pred_check_branch
      %130 = sbr.rel (0) target = $region61
    $region60: #{tpu_custom_call.1} parent=1 // pred_region
      %131 = dma.done [#allocation9], 18432
    $region61: #{tpu_custom_call.1} parent=1 // pred_fallthru
      _
    // Predicated region
    $region62: #{tpu_custom_call.1} parent=1 // pred_check
      _
    $region63: #{tpu_custom_call.1} parent=1 // pred_check_branch
      %133 = sbr.rel (0) target = $region65
    $region64: #{tpu_custom_call.1} parent=1 // pred_region
      %134 = dma.done [#allocation12], 9216
    $region65: #{tpu_custom_call.1} parent=1 // pred_fallthru
      _
    // Predicated region
    $region66: #{tpu_custom_call.1} parent=1 // pred_check
      _
    $region67: #{tpu_custom_call.1} parent=1 // pred_check_branch
      %136 = sbr.rel (0) target = $region69
    $region68: #{tpu_custom_call.1} parent=1 // pred_region
      %137 = dma.done [#allocation12], 48
    $region69: #{tpu_custom_call.1} parent=1 // pred_fallthru
      _
    // Predicated region
    $region70: #{tpu_custom_call.1} parent=1 // pred_check
      _
    $region71: #{tpu_custom_call.1} parent=1 // pred_check_branch
      %139 = sbr.rel (0) target = $region73
    $region72: #{tpu_custom_call.1} parent=1 // pred_region
      %140 = dma.done [#allocation15], 24576
    $region73: #{tpu_custom_call.1} parent=1 // pred_fallthru
      _
    %v142 = vld [vmem:[#allocation2] sm:$0xff]
    %v143 = vld [vmem:[#allocation2 + $0x8] sm:$0xff]
    %v144 = vld [vmem:[#allocation2 + $0x10] sm:$0xff]
    %v145 = vld [vmem:[#allocation2 + $0x18] sm:$0xff]
    %v146 = vld [vmem:[#allocation2 + $0x20] sm:$0xff]
    %v147 = vld [vmem:[#allocation2 + $0x28] sm:$0xff]
    %v148 = vld [vmem:[#allocation2 + $0x30] sm:$0xff]
    %v149 = vld [vmem:[#allocation2 + $0x38] sm:$0xff]
    %v150 = vpack.c.bf16 %v142, %v142
    %v151 = vpack.c.bf16 %v143, %v143
    %v152 = vpack.c.bf16 %v144, %v144
    %v153 = vpack.c.bf16 %v145, %v145
    %v154 = vpack.c.bf16 %v146, %v146
    %v155 = vpack.c.bf16 %v147, %v147
    %v156 = vpack.c.bf16 %v148, %v148
    %v157 = vpack.c.bf16 %v149, %v149
    %v158 = vld [vmem:[#allocation7] sm:$0xff]
    %v159 = vld [vmem:[#allocation7 + $0x8] sm:$0xf]
    %v160 = vld [vmem:[#allocation7 + $0xc] sm:$0xff]
    %v161 = vld [vmem:[#allocation7 + $0x14] sm:$0xf]
    %v162 = vld [vmem:[#allocation7 + $0x18] sm:$0xff]
    %v163 = vld [vmem:[#allocation7 + $0x20] sm:$0xf]
    %v164 = vld [vmem:[#allocation7 + $0x24] sm:$0xff]
    %v165 = vld [vmem:[#allocation7 + $0x2c] sm:$0xf]
    %v166 = vld [vmem:[#allocation7 + $0x30] sm:$0xff]
    %v167 = vld [vmem:[#allocation7 + $0x38] sm:$0xf]
    %v168 = vld [vmem:[#allocation7 + $0x3c] sm:$0xff]
    %v169 = vld [vmem:[#allocation7 + $0x44] sm:$0xf]
    %v170 = vld [vmem:[#allocation7 + $0x48] sm:$0xff]
    %v171 = vld [vmem:[#allocation7 + $0x50] sm:$0xf]
    %v172 = vld [vmem:[#allocation7 + $0x54] sm:$0xff]
    %v173 = vld [vmem:[#allocation7 + $0x5c] sm:$0xf]
    %v174 = vld [vmem:[#allocation7 + $0x60] sm:$0xff]
    %v175 = vld [vmem:[#allocation7 + $0x68] sm:$0xf]
    %v176 = vld [vmem:[#allocation7 + $0x6c] sm:$0xff]
    %v177 = vld [vmem:[#allocation7 + $0x74] sm:$0xf]
    %v178 = vld [vmem:[#allocation7 + $0x78] sm:$0xff]
    %v179 = vld [vmem:[#allocation7 + $0x80] sm:$0xf]
    %v180 = vld [vmem:[#allocation7 + $0x84] sm:$0xff]
    %v181 = vld [vmem:[#allocation7 + $0x8c] sm:$0xf]
    %v182 = vld [vmem:[#allocation7 + $0x90] sm:$0xff]
    %v183 = vld [vmem:[#allocation7 + $0x98] sm:$0xf]
    %v184 = vld [vmem:[#allocation7 + $0x9c] sm:$0xff]
    %v185 = vld [vmem:[#allocation7 + $0xa4] sm:$0xf]
    %v186 = vld [vmem:[#allocation7 + $0xa8] sm:$0xff]
    %v187 = vld [vmem:[#allocation7 + $0xb0] sm:$0xf]
    %v188 = vld [vmem:[#allocation7 + $0xb4] sm:$0xff]
    %v189 = vld [vmem:[#allocation7 + $0xbc] sm:$0xf]
    %v190 = vld [vmem:[#allocation7 + $0xc0] sm:$0xff]
    %v191 = vld [vmem:[#allocation7 + $0xc8] sm:$0xf]
    %v192 = vld [vmem:[#allocation7 + $0xcc] sm:$0xff]
    %v193 = vld [vmem:[#allocation7 + $0xd4] sm:$0xf]
    %v194 = vld [vmem:[#allocation7 + $0xd8] sm:$0xff]
    %v195 = vld [vmem:[#allocation7 + $0xe0] sm:$0xf]
    %v196 = vld [vmem:[#allocation7 + $0xe4] sm:$0xff]
    %v197 = vld [vmem:[#allocation7 + $0xec] sm:$0xf]
    %v198 = vld [vmem:[#allocation7 + $0xf0] sm:$0xff]
    %v199 = vld [vmem:[#allocation7 + $0xf8] sm:$0xf]
    %v200 = vld [vmem:[#allocation7 + $0xfc] sm:$0xff]
    %v201 = vld [vmem:[#allocation7 + $0x104] sm:$0xf]
    %v202 = vld [vmem:[#allocation7 + $0x108] sm:$0xff]
    %v203 = vld [vmem:[#allocation7 + $0x110] sm:$0xf]
    %v204 = vld [vmem:[#allocation7 + $0x114] sm:$0xff]
    %v205 = vld [vmem:[#allocation7 + $0x11c] sm:$0xf]
    %v206 = vld [vmem:[#allocation7 + $0x120] sm:$0xff]
    %v207 = vld [vmem:[#allocation7 + $0x128] sm:$0xf]
    %v208 = vld [vmem:[#allocation7 + $0x12c] sm:$0xff]
    %v209 = vld [vmem:[#allocation7 + $0x134] sm:$0xf]
    %v210 = vld [vmem:[#allocation7 + $0x138] sm:$0xff]
    %v211 = vld [vmem:[#allocation7 + $0x140] sm:$0xf]
    %v212 = vld [vmem:[#allocation7 + $0x144] sm:$0xff]
    %v213 = vld [vmem:[#allocation7 + $0x14c] sm:$0xf]
    %v214 = vld [vmem:[#allocation7 + $0x150] sm:$0xff]
    %v215 = vld [vmem:[#allocation7 + $0x158] sm:$0xf]
    %v216 = vld [vmem:[#allocation7 + $0x15c] sm:$0xff]
    %v217 = vld [vmem:[#allocation7 + $0x164] sm:$0xf]
    %v218 = vld [vmem:[#allocation7 + $0x168] sm:$0xff]
    %v219 = vld [vmem:[#allocation7 + $0x170] sm:$0xf]
    %v220 = vld [vmem:[#allocation7 + $0x174] sm:$0xff]
    %v221 = vld [vmem:[#allocation7 + $0x17c] sm:$0xf]
    %v222 = vld [vmem:[#allocation7 + $0x180] sm:$0xff]
    %v223 = vld [vmem:[#allocation7 + $0x188] sm:$0xf]
    %v224 = vld [vmem:[#allocation7 + $0x18c] sm:$0xff]
    %v225 = vld [vmem:[#allocation7 + $0x194] sm:$0xf]
    %v226 = vld [vmem:[#allocation7 + $0x198] sm:$0xff]
    %v227 = vld [vmem:[#allocation7 + $0x1a0] sm:$0xf]
    %v228 = vld [vmem:[#allocation7 + $0x1a4] sm:$0xff]
    %v229 = vld [vmem:[#allocation7 + $0x1ac] sm:$0xf]
    %v230 = vld [vmem:[#allocation7 + $0x1b0] sm:$0xff]
    %v231 = vld [vmem:[#allocation7 + $0x1b8] sm:$0xf]
    %v232 = vld [vmem:[#allocation7 + $0x1bc] sm:$0xff]
    %v233 = vld [vmem:[#allocation7 + $0x1c4] sm:$0xf]
    %v234 = vld [vmem:[#allocation7 + $0x1c8] sm:$0xff]
    %v235 = vld [vmem:[#allocation7 + $0x1d0] sm:$0xf]
    %v236 = vld [vmem:[#allocation7 + $0x1d4] sm:$0xff]
    %v237 = vld [vmem:[#allocation7 + $0x1dc] sm:$0xf]
    %v238 = vld [vmem:[#allocation7 + $0x1e0] sm:$0xff]
    %v239 = vld [vmem:[#allocation7 + $0x1e8] sm:$0xf]
    %v240 = vld [vmem:[#allocation7 + $0x1ec] sm:$0xff]
    %v241 = vld [vmem:[#allocation7 + $0x1f4] sm:$0xf]
    %v242 = vld [vmem:[#allocation7 + $0x1f8] sm:$0xff]
    %v243 = vld [vmem:[#allocation7 + $0x200] sm:$0xf]
    %v244 = vld [vmem:[#allocation7 + $0x204] sm:$0xff]
    %v245 = vld [vmem:[#allocation7 + $0x20c] sm:$0xf]
    %v246 = vld [vmem:[#allocation7 + $0x210] sm:$0xff]
    %v247 = vld [vmem:[#allocation7 + $0x218] sm:$0xf]
    %v248 = vld [vmem:[#allocation7 + $0x21c] sm:$0xff]
    %v249 = vld [vmem:[#allocation7 + $0x224] sm:$0xf]
    %v250 = vld [vmem:[#allocation7 + $0x228] sm:$0xff]
    %v251 = vld [vmem:[#allocation7 + $0x230] sm:$0xf]
    %v252 = vld [vmem:[#allocation7 + $0x234] sm:$0xff]
    %v253 = vld [vmem:[#allocation7 + $0x23c] sm:$0xf]
    %v254 = vld [vmem:[#allocation7 + $0x240] sm:$0xff]
    %v255 = vld [vmem:[#allocation7 + $0x248] sm:$0xf]
    %v256 = vld [vmem:[#allocation7 + $0x24c] sm:$0xff]
    %v257 = vld [vmem:[#allocation7 + $0x254] sm:$0xf]
    %v258 = vld [vmem:[#allocation7 + $0x258] sm:$0xff]
    %v259 = vld [vmem:[#allocation7 + $0x260] sm:$0xf]
    %v260 = vld [vmem:[#allocation7 + $0x264] sm:$0xff]
    %v261 = vld [vmem:[#allocation7 + $0x26c] sm:$0xf]
    %v262 = vld [vmem:[#allocation7 + $0x270] sm:$0xff]
    %v263 = vld [vmem:[#allocation7 + $0x278] sm:$0xf]
    %v264 = vld [vmem:[#allocation7 + $0x27c] sm:$0xff]
    %v265 = vld [vmem:[#allocation7 + $0x284] sm:$0xf]
    %v266 = vld [vmem:[#allocation7 + $0x288] sm:$0xff]
    %v267 = vld [vmem:[#allocation7 + $0x290] sm:$0xf]
    %v268 = vld [vmem:[#allocation7 + $0x294] sm:$0xff]
    %v269 = vld [vmem:[#allocation7 + $0x29c] sm:$0xf]
    %v270 = vld [vmem:[#allocation7 + $0x2a0] sm:$0xff]
    %v271 = vld [vmem:[#allocation7 + $0x2a8] sm:$0xf]
    %v272 = vld [vmem:[#allocation7 + $0x2ac] sm:$0xff]
    %v273 = vld [vmem:[#allocation7 + $0x2b4] sm:$0xf]
    %v274 = vld [vmem:[#allocation7 + $0x2b8] sm:$0xff]
    %v275 = vld [vmem:[#allocation7 + $0x2c0] sm:$0xf]
    %v276 = vld [vmem:[#allocation7 + $0x2c4] sm:$0xff]
    %v277 = vld [vmem:[#allocation7 + $0x2cc] sm:$0xf]
    %v278 = vld [vmem:[#allocation7 + $0x2d0] sm:$0xff]
    %v279 = vld [vmem:[#allocation7 + $0x2d8] sm:$0xf]
    %v280 = vld [vmem:[#allocation7 + $0x2dc] sm:$0xff]
    %v281 = vld [vmem:[#allocation7 + $0x2e4] sm:$0xf]
    %v282 = vld [vmem:[#allocation7 + $0x2e8] sm:$0xff]
    %v283 = vld [vmem:[#allocation7 + $0x2f0] sm:$0xf]
    %v284 = vld [vmem:[#allocation7 + $0x2f4] sm:$0xff]
    %v285 = vld [vmem:[#allocation7 + $0x2fc] sm:$0xf]
    %v286 = vld [vmem:[#allocation7 + $0x300] sm:$0xff]
    %v287 = vld [vmem:[#allocation7 + $0x308] sm:$0xf]
    %v288 = vld [vmem:[#allocation7 + $0x30c] sm:$0xff]
    %v289 = vld [vmem:[#allocation7 + $0x314] sm:$0xf]
    %v290 = vld [vmem:[#allocation7 + $0x318] sm:$0xff]
    %v291 = vld [vmem:[#allocation7 + $0x320] sm:$0xf]
    %v292 = vld [vmem:[#allocation7 + $0x324] sm:$0xff]
    %v293 = vld [vmem:[#allocation7 + $0x32c] sm:$0xf]
    %v294 = vld [vmem:[#allocation7 + $0x330] sm:$0xff]
    %v295 = vld [vmem:[#allocation7 + $0x338] sm:$0xf]
    %v296 = vld [vmem:[#allocation7 + $0x33c] sm:$0xff]
    %v297 = vld [vmem:[#allocation7 + $0x344] sm:$0xf]
    %v298 = vld [vmem:[#allocation7 + $0x348] sm:$0xff]
    %v299 = vld [vmem:[#allocation7 + $0x350] sm:$0xf]
    %v300 = vld [vmem:[#allocation7 + $0x354] sm:$0xff]
    %v301 = vld [vmem:[#allocation7 + $0x35c] sm:$0xf]
    %v302 = vld [vmem:[#allocation7 + $0x360] sm:$0xff]
    %v303 = vld [vmem:[#allocation7 + $0x368] sm:$0xf]
    %v304 = vld [vmem:[#allocation7 + $0x36c] sm:$0xff]
    %v305 = vld [vmem:[#allocation7 + $0x374] sm:$0xf]
    %v306 = vld [vmem:[#allocation7 + $0x378] sm:$0xff]
    %v307 = vld [vmem:[#allocation7 + $0x380] sm:$0xf]
    %v308 = vld [vmem:[#allocation7 + $0x384] sm:$0xff]
    %v309 = vld [vmem:[#allocation7 + $0x38c] sm:$0xf]
    %v310 = vld [vmem:[#allocation7 + $0x390] sm:$0xff]
    %v311 = vld [vmem:[#allocation7 + $0x398] sm:$0xf]
    %v312 = vld [vmem:[#allocation7 + $0x39c] sm:$0xff]
    %v313 = vld [vmem:[#allocation7 + $0x3a4] sm:$0xf]
    %v314 = vld [vmem:[#allocation7 + $0x3a8] sm:$0xff]
    %v315 = vld [vmem:[#allocation7 + $0x3b0] sm:$0xf]
    %v316 = vld [vmem:[#allocation7 + $0x3b4] sm:$0xff]
    %v317 = vld [vmem:[#allocation7 + $0x3bc] sm:$0xf]
    %v318 = vld [vmem:[#allocation7 + $0x3c0] sm:$0xff]
    %v319 = vld [vmem:[#allocation7 + $0x3c8] sm:$0xf]
    %v320 = vld [vmem:[#allocation7 + $0x3cc] sm:$0xff]
    %v321 = vld [vmem:[#allocation7 + $0x3d4] sm:$0xf]
    %v322 = vld [vmem:[#allocation7 + $0x3d8] sm:$0xff]
    %v323 = vld [vmem:[#allocation7 + $0x3e0] sm:$0xf]
    %v324 = vld [vmem:[#allocation7 + $0x3e4] sm:$0xff]
    %v325 = vld [vmem:[#allocation7 + $0x3ec] sm:$0xf]
    %v326 = vld [vmem:[#allocation7 + $0x3f0] sm:$0xff]
    %v327 = vld [vmem:[#allocation7 + $0x3f8] sm:$0xf]
    %v328 = vld [vmem:[#allocation7 + $0x3fc] sm:$0xff]
    %v329 = vld [vmem:[#allocation7 + $0x404] sm:$0xf]
    %v330 = vld [vmem:[#allocation7 + $0x408] sm:$0xff]
    %v331 = vld [vmem:[#allocation7 + $0x410] sm:$0xf]
    %v332 = vld [vmem:[#allocation7 + $0x414] sm:$0xff]
    %v333 = vld [vmem:[#allocation7 + $0x41c] sm:$0xf]
    %v334 = vld [vmem:[#allocation7 + $0x420] sm:$0xff]
    %v335 = vld [vmem:[#allocation7 + $0x428] sm:$0xf]
    %v336 = vld [vmem:[#allocation7 + $0x42c] sm:$0xff]
    %v337 = vld [vmem:[#allocation7 + $0x434] sm:$0xf]
    %v338 = vld [vmem:[#allocation7 + $0x438] sm:$0xff]
    %v339 = vld [vmem:[#allocation7 + $0x440] sm:$0xf]
    %v340 = vld [vmem:[#allocation7 + $0x444] sm:$0xff]
    %v341 = vld [vmem:[#allocation7 + $0x44c] sm:$0xf]
    %v342 = vld [vmem:[#allocation7 + $0x450] sm:$0xff]
    %v343 = vld [vmem:[#allocation7 + $0x458] sm:$0xf]
    %v344 = vld [vmem:[#allocation7 + $0x45c] sm:$0xff]
    %v345 = vld [vmem:[#allocation7 + $0x464] sm:$0xf]
    %v346 = vld [vmem:[#allocation7 + $0x468] sm:$0xff]
    %v347 = vld [vmem:[#allocation7 + $0x470] sm:$0xf]
    %v348 = vld [vmem:[#allocation7 + $0x474] sm:$0xff]
    %v349 = vld [vmem:[#allocation7 + $0x47c] sm:$0xf]
    %v350 = vld [vmem:[#allocation7 + $0x480] sm:$0xff]
    %v351 = vld [vmem:[#allocation7 + $0x488] sm:$0xf]
    %v352 = vld [vmem:[#allocation7 + $0x48c] sm:$0xff]
    %v353 = vld [vmem:[#allocation7 + $0x494] sm:$0xf]
    %v354 = vld [vmem:[#allocation7 + $0x498] sm:$0xff]
    %v355 = vld [vmem:[#allocation7 + $0x4a0] sm:$0xf]
    %v356 = vld [vmem:[#allocation7 + $0x4a4] sm:$0xff]
    %v357 = vld [vmem:[#allocation7 + $0x4ac] sm:$0xf]
    %v358 = vld [vmem:[#allocation7 + $0x4b0] sm:$0xff]
    %v359 = vld [vmem:[#allocation7 + $0x4b8] sm:$0xf]
    %v360 = vld [vmem:[#allocation7 + $0x4bc] sm:$0xff]
    %v361 = vld [vmem:[#allocation7 + $0x4c4] sm:$0xf]
    %v362 = vld [vmem:[#allocation7 + $0x4c8] sm:$0xff]
    %v363 = vld [vmem:[#allocation7 + $0x4d0] sm:$0xf]
    %v364 = vld [vmem:[#allocation7 + $0x4d4] sm:$0xff]
    %v365 = vld [vmem:[#allocation7 + $0x4dc] sm:$0xf]
    %v366 = vld [vmem:[#allocation7 + $0x4e0] sm:$0xff]
    %v367 = vld [vmem:[#allocation7 + $0x4e8] sm:$0xf]
    %v368 = vld [vmem:[#allocation7 + $0x4ec] sm:$0xff]
    %v369 = vld [vmem:[#allocation7 + $0x4f4] sm:$0xf]
    %v370 = vld [vmem:[#allocation7 + $0x4f8] sm:$0xff]
    %v371 = vld [vmem:[#allocation7 + $0x500] sm:$0xf]
    %v372 = vld [vmem:[#allocation7 + $0x504] sm:$0xff]
    %v373 = vld [vmem:[#allocation7 + $0x50c] sm:$0xf]
    %v374 = vld [vmem:[#allocation7 + $0x510] sm:$0xff]
    %v375 = vld [vmem:[#allocation7 + $0x518] sm:$0xf]
    %v376 = vld [vmem:[#allocation7 + $0x51c] sm:$0xff]
    %v377 = vld [vmem:[#allocation7 + $0x524] sm:$0xf]
    %v378 = vld [vmem:[#allocation7 + $0x528] sm:$0xff]
    %v379 = vld [vmem:[#allocation7 + $0x530] sm:$0xf]
    %v380 = vld [vmem:[#allocation7 + $0x534] sm:$0xff]
    %v381 = vld [vmem:[#allocation7 + $0x53c] sm:$0xf]
    %v382 = vld [vmem:[#allocation7 + $0x540] sm:$0xff]
    %v383 = vld [vmem:[#allocation7 + $0x548] sm:$0xf]
    %v384 = vld [vmem:[#allocation7 + $0x54c] sm:$0xff]
    %v385 = vld [vmem:[#allocation7 + $0x554] sm:$0xf]
    %v386 = vld [vmem:[#allocation7 + $0x558] sm:$0xff]
    %v387 = vld [vmem:[#allocation7 + $0x560] sm:$0xf]
    %v388 = vld [vmem:[#allocation7 + $0x564] sm:$0xff]
    %v389 = vld [vmem:[#allocation7 + $0x56c] sm:$0xf]
    %v390 = vld [vmem:[#allocation7 + $0x570] sm:$0xff]
    %v391 = vld [vmem:[#allocation7 + $0x578] sm:$0xf]
    %v392 = vld [vmem:[#allocation7 + $0x57c] sm:$0xff]
    %v393 = vld [vmem:[#allocation7 + $0x584] sm:$0xf]
    %v394 = vld [vmem:[#allocation7 + $0x588] sm:$0xff]
    %v395 = vld [vmem:[#allocation7 + $0x590] sm:$0xf]
    %v396 = vld [vmem:[#allocation7 + $0x594] sm:$0xff]
    %v397 = vld [vmem:[#allocation7 + $0x59c] sm:$0xf]
    %v398 = vld [vmem:[#allocation7 + $0x5a0] sm:$0xff]
    %v399 = vld [vmem:[#allocation7 + $0x5a8] sm:$0xf]
    %v400 = vld [vmem:[#allocation7 + $0x5ac] sm:$0xff]
    %v401 = vld [vmem:[#allocation7 + $0x5b4] sm:$0xf]
    %v402 = vld [vmem:[#allocation7 + $0x5b8] sm:$0xff]
    %v403 = vld [vmem:[#allocation7 + $0x5c0] sm:$0xf]
    %v404 = vld [vmem:[#allocation7 + $0x5c4] sm:$0xff]
    %v405 = vld [vmem:[#allocation7 + $0x5cc] sm:$0xf]
    %v406 = vld [vmem:[#allocation7 + $0x5d0] sm:$0xff]
    %v407 = vld [vmem:[#allocation7 + $0x5d8] sm:$0xf]
    %v408 = vld [vmem:[#allocation7 + $0x5dc] sm:$0xff]
    %v409 = vld [vmem:[#allocation7 + $0x5e4] sm:$0xf]
    %v410 = vld [vmem:[#allocation7 + $0x5e8] sm:$0xff]
    %v411 = vld [vmem:[#allocation7 + $0x5f0] sm:$0xf]
    %v412 = vld [vmem:[#allocation7 + $0x5f4] sm:$0xff]
    %v413 = vld [vmem:[#allocation7 + $0x5fc] sm:$0xf]
    %v414 = vld [vmem:[#allocation8] sm:$0x7]
    %v416 = vlaneseq
    %v417 = vshrl.u32 %v416, 7
    %v418 = vsub.s32 0, %v417
    %v419 = vrot.slane %v414, %v418
    %v420 = vlaneseq
    %v421 = vshrl.u32 %v420, 7
    %v422 = vsub.s32 1, %v421
    %v423 = vrot.slane %v414, %v422
    %v424 = vlaneseq
    %v425 = vshrl.u32 %v424, 7
    %v426 = vsub.s32 2, %v425
    %v427 = vrot.slane %v414, %v426
    %v687 = vunpack.c.l.b16 %v158
    %v688 = vunpack.c.h.b16 %v158
    %v689 = vunpack.c.l.b16 %v159
    %v690 = vunpack.c.l.b16 %v160
    %v691 = vunpack.c.h.b16 %v160
    %v692 = vunpack.c.l.b16 %v161
    %v693 = vunpack.c.l.b16 %v162
    %v694 = vunpack.c.h.b16 %v162
    %v695 = vunpack.c.l.b16 %v163
    %v696 = vunpack.c.l.b16 %v164
    %v697 = vunpack.c.h.b16 %v164
    %v698 = vunpack.c.l.b16 %v165
    %v699 = vunpack.c.l.b16 %v166
    %v700 = vunpack.c.h.b16 %v166
    %v701 = vunpack.c.l.b16 %v167
    %v702 = vunpack.c.l.b16 %v168
    %v703 = vunpack.c.h.b16 %v168
    %v704 = vunpack.c.l.b16 %v169
    %v705 = vunpack.c.l.b16 %v170
    %v706 = vunpack.c.h.b16 %v170
    %v707 = vunpack.c.l.b16 %v171
    %v708 = vunpack.c.l.b16 %v172
    %v709 = vunpack.c.h.b16 %v172
    %v710 = vunpack.c.l.b16 %v173
    %v711 = vunpack.c.l.b16 %v174
    %v712 = vunpack.c.h.b16 %v174
    %v713 = vunpack.c.l.b16 %v175
    %v714 = vunpack.c.l.b16 %v176
    %v715 = vunpack.c.h.b16 %v176
    %v716 = vunpack.c.l.b16 %v177
    %v717 = vunpack.c.l.b16 %v178
    %v718 = vunpack.c.h.b16 %v178
    %v719 = vunpack.c.l.b16 %v179
    %v720 = vunpack.c.l.b16 %v180
    %v721 = vunpack.c.h.b16 %v180
    %v722 = vunpack.c.l.b16 %v181
    %v723 = vunpack.c.l.b16 %v182
    %v724 = vunpack.c.h.b16 %v182
    %v725 = vunpack.c.l.b16 %v183
    %v726 = vunpack.c.l.b16 %v184
    %v727 = vunpack.c.h.b16 %v184
    %v728 = vunpack.c.l.b16 %v185
    %v729 = vunpack.c.l.b16 %v186
    %v730 = vunpack.c.h.b16 %v186
    %v731 = vunpack.c.l.b16 %v187
    %v732 = vunpack.c.l.b16 %v188
    %v733 = vunpack.c.h.b16 %v188
    %v734 = vunpack.c.l.b16 %v189
    %v735 = vunpack.c.l.b16 %v190
    %v736 = vunpack.c.h.b16 %v190
    %v737 = vunpack.c.l.b16 %v191
    %v738 = vunpack.c.l.b16 %v192
    %v739 = vunpack.c.h.b16 %v192
    %v740 = vunpack.c.l.b16 %v193
    %v741 = vunpack.c.l.b16 %v194
    %v742 = vunpack.c.h.b16 %v194
    %v743 = vunpack.c.l.b16 %v195
    %v744 = vunpack.c.l.b16 %v196
    %v745 = vunpack.c.h.b16 %v196
    %v746 = vunpack.c.l.b16 %v197
    %v747 = vunpack.c.l.b16 %v198
    %v748 = vunpack.c.h.b16 %v198
    %v749 = vunpack.c.l.b16 %v199
    %v750 = vunpack.c.l.b16 %v200
    %v751 = vunpack.c.h.b16 %v200
    %v752 = vunpack.c.l.b16 %v201
    %v753 = vunpack.c.l.b16 %v202
    %v754 = vunpack.c.h.b16 %v202
    %v755 = vunpack.c.l.b16 %v203
    %v756 = vunpack.c.l.b16 %v204
    %v757 = vunpack.c.h.b16 %v204
    %v758 = vunpack.c.l.b16 %v205
    %v759 = vunpack.c.l.b16 %v206
    %v760 = vunpack.c.h.b16 %v206
    %v761 = vunpack.c.l.b16 %v207
    %v762 = vunpack.c.l.b16 %v208
    %v763 = vunpack.c.h.b16 %v208
    %v764 = vunpack.c.l.b16 %v209
    %v765 = vunpack.c.l.b16 %v210
    %v766 = vunpack.c.h.b16 %v210
    %v767 = vunpack.c.l.b16 %v211
    %v768 = vunpack.c.l.b16 %v212
    %v769 = vunpack.c.h.b16 %v212
    %v770 = vunpack.c.l.b16 %v213
    %v771 = vunpack.c.l.b16 %v214
    %v772 = vunpack.c.h.b16 %v214
    %v773 = vunpack.c.l.b16 %v215
    %v774 = vunpack.c.l.b16 %v216
    %v775 = vunpack.c.h.b16 %v216
    %v776 = vunpack.c.l.b16 %v217
    %v777 = vunpack.c.l.b16 %v218
    %v778 = vunpack.c.h.b16 %v218
    %v779 = vunpack.c.l.b16 %v219
    %v780 = vunpack.c.l.b16 %v220
    %v781 = vunpack.c.h.b16 %v220
    %v782 = vunpack.c.l.b16 %v221
    %v783 = vunpack.c.l.b16 %v222
    %v784 = vunpack.c.h.b16 %v222
    %v785 = vunpack.c.l.b16 %v223
    %v786 = vunpack.c.l.b16 %v224
    %v787 = vunpack.c.h.b16 %v224
    %v788 = vunpack.c.l.b16 %v225
    %v789 = vunpack.c.l.b16 %v226
    %v790 = vunpack.c.h.b16 %v226
    %v791 = vunpack.c.l.b16 %v227
    %v792 = vunpack.c.l.b16 %v228
    %v793 = vunpack.c.h.b16 %v228
    %v794 = vunpack.c.l.b16 %v229
    %v795 = vunpack.c.l.b16 %v230
    %v796 = vunpack.c.h.b16 %v230
    %v797 = vunpack.c.l.b16 %v231
    %v798 = vunpack.c.l.b16 %v232
    %v799 = vunpack.c.h.b16 %v232
    %v800 = vunpack.c.l.b16 %v233
    %v801 = vunpack.c.l.b16 %v234
    %v802 = vunpack.c.h.b16 %v234
    %v803 = vunpack.c.l.b16 %v235
    %v804 = vunpack.c.l.b16 %v236
    %v805 = vunpack.c.h.b16 %v236
    %v806 = vunpack.c.l.b16 %v237
    %v807 = vunpack.c.l.b16 %v238
    %v808 = vunpack.c.h.b16 %v238
    %v809 = vunpack.c.l.b16 %v239
    %v810 = vunpack.c.l.b16 %v240
    %v811 = vunpack.c.h.b16 %v240
    %v812 = vunpack.c.l.b16 %v241
    %v813 = vunpack.c.l.b16 %v242
    %v814 = vunpack.c.h.b16 %v242
    %v815 = vunpack.c.l.b16 %v243
    %v816 = vunpack.c.l.b16 %v244
    %v817 = vunpack.c.h.b16 %v244
    %v818 = vunpack.c.l.b16 %v245
    %v819 = vunpack.c.l.b16 %v246
    %v820 = vunpack.c.h.b16 %v246
    %v821 = vunpack.c.l.b16 %v247
    %v822 = vunpack.c.l.b16 %v248
    %v823 = vunpack.c.h.b16 %v248
    %v824 = vunpack.c.l.b16 %v249
    %v825 = vunpack.c.l.b16 %v250
    %v826 = vunpack.c.h.b16 %v250
    %v827 = vunpack.c.l.b16 %v251
    %v828 = vunpack.c.l.b16 %v252
    %v829 = vunpack.c.h.b16 %v252
    %v830 = vunpack.c.l.b16 %v253
    %v831 = vunpack.c.l.b16 %v254
    %v832 = vunpack.c.h.b16 %v254
    %v833 = vunpack.c.l.b16 %v255
    %v834 = vunpack.c.l.b16 %v256
    %v835 = vunpack.c.h.b16 %v256
    %v836 = vunpack.c.l.b16 %v257
    %v837 = vunpack.c.l.b16 %v258
    %v838 = vunpack.c.h.b16 %v258
    %v839 = vunpack.c.l.b16 %v259
    %v840 = vunpack.c.l.b16 %v260
    %v841 = vunpack.c.h.b16 %v260
    %v842 = vunpack.c.l.b16 %v261
    %v843 = vunpack.c.l.b16 %v262
    %v844 = vunpack.c.h.b16 %v262
    %v845 = vunpack.c.l.b16 %v263
    %v846 = vunpack.c.l.b16 %v264
    %v847 = vunpack.c.h.b16 %v264
    %v848 = vunpack.c.l.b16 %v265
    %v849 = vunpack.c.l.b16 %v266
    %v850 = vunpack.c.h.b16 %v266
    %v851 = vunpack.c.l.b16 %v267
    %v852 = vunpack.c.l.b16 %v268
    %v853 = vunpack.c.h.b16 %v268
    %v854 = vunpack.c.l.b16 %v269
    %v855 = vunpack.c.l.b16 %v270
    %v856 = vunpack.c.h.b16 %v270
    %v857 = vunpack.c.l.b16 %v271
    %v858 = vunpack.c.l.b16 %v272
    %v859 = vunpack.c.h.b16 %v272
    %v860 = vunpack.c.l.b16 %v273
    %v861 = vunpack.c.l.b16 %v274
    %v862 = vunpack.c.h.b16 %v274
    %v863 = vunpack.c.l.b16 %v275
    %v864 = vunpack.c.l.b16 %v276
    %v865 = vunpack.c.h.b16 %v276
    %v866 = vunpack.c.l.b16 %v277
    %v867 = vunpack.c.l.b16 %v278
    %v868 = vunpack.c.h.b16 %v278
    %v869 = vunpack.c.l.b16 %v279
    %v870 = vunpack.c.l.b16 %v280
    %v871 = vunpack.c.h.b16 %v280
    %v872 = vunpack.c.l.b16 %v281
    %v873 = vunpack.c.l.b16 %v282
    %v874 = vunpack.c.h.b16 %v282
    %v875 = vunpack.c.l.b16 %v283
    %v876 = vunpack.c.l.b16 %v284
    %v877 = vunpack.c.h.b16 %v284
    %v878 = vunpack.c.l.b16 %v285
    %v879 = vunpack.c.l.b16 %v286
    %v880 = vunpack.c.h.b16 %v286
    %v881 = vunpack.c.l.b16 %v287
    %v882 = vunpack.c.l.b16 %v288
    %v883 = vunpack.c.h.b16 %v288
    %v884 = vunpack.c.l.b16 %v289
    %v885 = vunpack.c.l.b16 %v290
    %v886 = vunpack.c.h.b16 %v290
    %v887 = vunpack.c.l.b16 %v291
    %v888 = vunpack.c.l.b16 %v292
    %v889 = vunpack.c.h.b16 %v292
    %v890 = vunpack.c.l.b16 %v293
    %v891 = vunpack.c.l.b16 %v294
    %v892 = vunpack.c.h.b16 %v294
    %v893 = vunpack.c.l.b16 %v295
    %v894 = vunpack.c.l.b16 %v296
    %v895 = vunpack.c.h.b16 %v296
    %v896 = vunpack.c.l.b16 %v297
    %v897 = vunpack.c.l.b16 %v298
    %v898 = vunpack.c.h.b16 %v298
    %v899 = vunpack.c.l.b16 %v299
    %v900 = vunpack.c.l.b16 %v300
    %v901 = vunpack.c.h.b16 %v300
    %v902 = vunpack.c.l.b16 %v301
    %v903 = vunpack.c.l.b16 %v302
    %v904 = vunpack.c.h.b16 %v302
    %v905 = vunpack.c.l.b16 %v303
    %v906 = vunpack.c.l.b16 %v304
    %v907 = vunpack.c.h.b16 %v304
    %v908 = vunpack.c.l.b16 %v305
    %v909 = vunpack.c.l.b16 %v306
    %v910 = vunpack.c.h.b16 %v306
    %v911 = vunpack.c.l.b16 %v307
    %v912 = vunpack.c.l.b16 %v308
    %v913 = vunpack.c.h.b16 %v308
    %v914 = vunpack.c.l.b16 %v309
    %v915 = vunpack.c.l.b16 %v310
    %v916 = vunpack.c.h.b16 %v310
    %v917 = vunpack.c.l.b16 %v311
    %v918 = vunpack.c.l.b16 %v312
    %v919 = vunpack.c.h.b16 %v312
    %v920 = vunpack.c.l.b16 %v313
    %v921 = vunpack.c.l.b16 %v314
    %v922 = vunpack.c.h.b16 %v314
    %v923 = vunpack.c.l.b16 %v315
    %v924 = vunpack.c.l.b16 %v316
    %v925 = vunpack.c.h.b16 %v316
    %v926 = vunpack.c.l.b16 %v317
    %v927 = vunpack.c.l.b16 %v318
    %v928 = vunpack.c.h.b16 %v318
    %v929 = vunpack.c.l.b16 %v319
    %v930 = vunpack.c.l.b16 %v320
    %v931 = vunpack.c.h.b16 %v320
    %v932 = vunpack.c.l.b16 %v321
    %v933 = vunpack.c.l.b16 %v322
    %v934 = vunpack.c.h.b16 %v322
    %v935 = vunpack.c.l.b16 %v323
    %v936 = vunpack.c.l.b16 %v324
    %v937 = vunpack.c.h.b16 %v324
    %v938 = vunpack.c.l.b16 %v325
    %v939 = vunpack.c.l.b16 %v326
    %v940 = vunpack.c.h.b16 %v326
    %v941 = vunpack.c.l.b16 %v327
    %v942 = vunpack.c.l.b16 %v328
    %v943 = vunpack.c.h.b16 %v328
    %v944 = vunpack.c.l.b16 %v329
    %v945 = vunpack.c.l.b16 %v330
    %v946 = vunpack.c.h.b16 %v330
    %v947 = vunpack.c.l.b16 %v331
    %v948 = vunpack.c.l.b16 %v332
    %v949 = vunpack.c.h.b16 %v332
    %v950 = vunpack.c.l.b16 %v333
    %v951 = vunpack.c.l.b16 %v334
    %v952 = vunpack.c.h.b16 %v334
    %v953 = vunpack.c.l.b16 %v335
    %v954 = vunpack.c.l.b16 %v336
    %v955 = vunpack.c.h.b16 %v336
    %v956 = vunpack.c.l.b16 %v337
    %v957 = vunpack.c.l.b16 %v338
    %v958 = vunpack.c.h.b16 %v338
    %v959 = vunpack.c.l.b16 %v339
    %v960 = vunpack.c.l.b16 %v340
    %v961 = vunpack.c.h.b16 %v340
    %v962 = vunpack.c.l.b16 %v341
    %v963 = vunpack.c.l.b16 %v342
    %v964 = vunpack.c.h.b16 %v342
    %v965 = vunpack.c.l.b16 %v343
    %v966 = vunpack.c.l.b16 %v344
    %v967 = vunpack.c.h.b16 %v344
    %v968 = vunpack.c.l.b16 %v345
    %v969 = vunpack.c.l.b16 %v346
    %v970 = vunpack.c.h.b16 %v346
    %v971 = vunpack.c.l.b16 %v347
    %v972 = vunpack.c.l.b16 %v348
    %v973 = vunpack.c.h.b16 %v348
    %v974 = vunpack.c.l.b16 %v349
    %v975 = vunpack.c.l.b16 %v350
    %v976 = vunpack.c.h.b16 %v350
    %v977 = vunpack.c.l.b16 %v351
    %v978 = vunpack.c.l.b16 %v352
    %v979 = vunpack.c.h.b16 %v352
    %v980 = vunpack.c.l.b16 %v353
    %v981 = vunpack.c.l.b16 %v354
    %v982 = vunpack.c.h.b16 %v354
    %v983 = vunpack.c.l.b16 %v355
    %v984 = vunpack.c.l.b16 %v356
    %v985 = vunpack.c.h.b16 %v356
    %v986 = vunpack.c.l.b16 %v357
    %v987 = vunpack.c.l.b16 %v358
    %v988 = vunpack.c.h.b16 %v358
    %v989 = vunpack.c.l.b16 %v359
    %v990 = vunpack.c.l.b16 %v360
    %v991 = vunpack.c.h.b16 %v360
    %v992 = vunpack.c.l.b16 %v361
    %v993 = vunpack.c.l.b16 %v362
    %v994 = vunpack.c.h.b16 %v362
    %v995 = vunpack.c.l.b16 %v363
    %v996 = vunpack.c.l.b16 %v364
    %v997 = vunpack.c.h.b16 %v364
    %v998 = vunpack.c.l.b16 %v365
    %v999 = vunpack.c.l.b16 %v366
    %v1000 = vunpack.c.h.b16 %v366
    %v1001 = vunpack.c.l.b16 %v367
    %v1002 = vunpack.c.l.b16 %v368
    %v1003 = vunpack.c.h.b16 %v368
    %v1004 = vunpack.c.l.b16 %v369
    %v1005 = vunpack.c.l.b16 %v370
    %v1006 = vunpack.c.h.b16 %v370
    %v1007 = vunpack.c.l.b16 %v371
    %v1008 = vunpack.c.l.b16 %v372
    %v1009 = vunpack.c.h.b16 %v372
    %v1010 = vunpack.c.l.b16 %v373
    %v1011 = vunpack.c.l.b16 %v374
    %v1012 = vunpack.c.h.b16 %v374
    %v1013 = vunpack.c.l.b16 %v375
    %v1014 = vunpack.c.l.b16 %v376
    %v1015 = vunpack.c.h.b16 %v376
    %v1016 = vunpack.c.l.b16 %v377
    %v1017 = vunpack.c.l.b16 %v378
    %v1018 = vunpack.c.h.b16 %v378
    %v1019 = vunpack.c.l.b16 %v379
    %v1020 = vunpack.c.l.b16 %v380
    %v1021 = vunpack.c.h.b16 %v380
    %v1022 = vunpack.c.l.b16 %v381
    %v1023 = vunpack.c.l.b16 %v382
    %v1024 = vunpack.c.h.b16 %v382
    %v1025 = vunpack.c.l.b16 %v383
    %v1026 = vunpack.c.l.b16 %v384
    %v1027 = vunpack.c.h.b16 %v384
    %v1028 = vunpack.c.l.b16 %v385
    %v1029 = vunpack.c.l.b16 %v386
    %v1030 = vunpack.c.h.b16 %v386
    %v1031 = vunpack.c.l.b16 %v387
    %v1032 = vunpack.c.l.b16 %v388
    %v1033 = vunpack.c.h.b16 %v388
    %v1034 = vunpack.c.l.b16 %v389
    %v1035 = vunpack.c.l.b16 %v390
    %v1036 = vunpack.c.h.b16 %v390
    %v1037 = vunpack.c.l.b16 %v391
    %v1038 = vunpack.c.l.b16 %v392
    %v1039 = vunpack.c.h.b16 %v392
    %v1040 = vunpack.c.l.b16 %v393
    %v1041 = vunpack.c.l.b16 %v394
    %v1042 = vunpack.c.h.b16 %v394
    %v1043 = vunpack.c.l.b16 %v395
    %v1044 = vunpack.c.l.b16 %v396
    %v1045 = vunpack.c.h.b16 %v396
    %v1046 = vunpack.c.l.b16 %v397
    %v1047 = vunpack.c.l.b16 %v398
    %v1048 = vunpack.c.h.b16 %v398
    %v1049 = vunpack.c.l.b16 %v399
    %v1050 = vunpack.c.l.b16 %v400
    %v1051 = vunpack.c.h.b16 %v400
    %v1052 = vunpack.c.l.b16 %v401
    %v1053 = vunpack.c.l.b16 %v402
    %v1054 = vunpack.c.h.b16 %v402
    %v1055 = vunpack.c.l.b16 %v403
    %v1056 = vunpack.c.l.b16 %v404
    %v1057 = vunpack.c.h.b16 %v404
    %v1058 = vunpack.c.l.b16 %v405
    %v1059 = vunpack.c.l.b16 %v406
    %v1060 = vunpack.c.h.b16 %v406
    %v1061 = vunpack.c.l.b16 %v407
    %v1062 = vunpack.c.l.b16 %v408
    %v1063 = vunpack.c.h.b16 %v408
    %v1064 = vunpack.c.l.b16 %v409
    %v1065 = vunpack.c.l.b16 %v410
    %v1066 = vunpack.c.h.b16 %v410
    %v1067 = vunpack.c.l.b16 %v411
    %v1068 = vunpack.c.l.b16 %v412
    %v1069 = vunpack.c.h.b16 %v412
    %v1070 = vunpack.c.l.b16 %v413
    %v1071 = vpack.c.b16 %v690, %v687
    %v1072 = vpack.c.b16 %v691, %v688
    %v1073 = vpack.c.b16 %v692, %v689
    %v1074 = vpack.c.b16 %v696, %v693
    %v1075 = vpack.c.b16 %v697, %v694
    %v1076 = vpack.c.b16 %v698, %v695
    %v1077 = vpack.c.b16 %v702, %v699
    %v1078 = vpack.c.b16 %v703, %v700
    %v1079 = vpack.c.b16 %v704, %v701
    %v1080 = vpack.c.b16 %v708, %v705
    %v1081 = vpack.c.b16 %v709, %v706
    %v1082 = vpack.c.b16 %v710, %v707
    %v1083 = vpack.c.b16 %v714, %v711
    %v1084 = vpack.c.b16 %v715, %v712
    %v1085 = vpack.c.b16 %v716, %v713
    %v1086 = vpack.c.b16 %v720, %v717
    %v1087 = vpack.c.b16 %v721, %v718
    %v1088 = vpack.c.b16 %v722, %v719
    %v1089 = vpack.c.b16 %v726, %v723
    %v1090 = vpack.c.b16 %v727, %v724
    %v1091 = vpack.c.b16 %v728, %v725
    %v1092 = vpack.c.b16 %v732, %v729
    %v1093 = vpack.c.b16 %v733, %v730
    %v1094 = vpack.c.b16 %v734, %v731
    %v1095 = vpack.c.b16 %v738, %v735
    %v1096 = vpack.c.b16 %v739, %v736
    %v1097 = vpack.c.b16 %v740, %v737
    %v1098 = vpack.c.b16 %v744, %v741
    %v1099 = vpack.c.b16 %v745, %v742
    %v1100 = vpack.c.b16 %v746, %v743
    %v1101 = vpack.c.b16 %v750, %v747
    %v1102 = vpack.c.b16 %v751, %v748
    %v1103 = vpack.c.b16 %v752, %v749
    %v1104 = vpack.c.b16 %v756, %v753
    %v1105 = vpack.c.b16 %v757, %v754
    %v1106 = vpack.c.b16 %v758, %v755
    %v1107 = vpack.c.b16 %v762, %v759
    %v1108 = vpack.c.b16 %v763, %v760
    %v1109 = vpack.c.b16 %v764, %v761
    %v1110 = vpack.c.b16 %v768, %v765
    %v1111 = vpack.c.b16 %v769, %v766
    %v1112 = vpack.c.b16 %v770, %v767
    %v1113 = vpack.c.b16 %v774, %v771
    %v1114 = vpack.c.b16 %v775, %v772
    %v1115 = vpack.c.b16 %v776, %v773
    %v1116 = vpack.c.b16 %v780, %v777
    %v1117 = vpack.c.b16 %v781, %v778
    %v1118 = vpack.c.b16 %v782, %v779
    %v1119 = vpack.c.b16 %v786, %v783
    %v1120 = vpack.c.b16 %v787, %v784
    %v1121 = vpack.c.b16 %v788, %v785
    %v1122 = vpack.c.b16 %v792, %v789
    %v1123 = vpack.c.b16 %v793, %v790
    %v1124 = vpack.c.b16 %v794, %v791
    %v1125 = vpack.c.b16 %v798, %v795
    %v1126 = vpack.c.b16 %v799, %v796
    %v1127 = vpack.c.b16 %v800, %v797
    %v1128 = vpack.c.b16 %v804, %v801
    %v1129 = vpack.c.b16 %v805, %v802
    %v1130 = vpack.c.b16 %v806, %v803
    %v1131 = vpack.c.b16 %v810, %v807
    %v1132 = vpack.c.b16 %v811, %v808
    %v1133 = vpack.c.b16 %v812, %v809
    %v1134 = vpack.c.b16 %v816, %v813
    %v1135 = vpack.c.b16 %v817, %v814
    %v1136 = vpack.c.b16 %v818, %v815
    %v1137 = vpack.c.b16 %v822, %v819
    %v1138 = vpack.c.b16 %v823, %v820
    %v1139 = vpack.c.b16 %v824, %v821
    %v1140 = vpack.c.b16 %v828, %v825
    %v1141 = vpack.c.b16 %v829, %v826
    %v1142 = vpack.c.b16 %v830, %v827
    %v1143 = vpack.c.b16 %v834, %v831
    %v1144 = vpack.c.b16 %v835, %v832
    %v1145 = vpack.c.b16 %v836, %v833
    %v1146 = vpack.c.b16 %v840, %v837
    %v1147 = vpack.c.b16 %v841, %v838
    %v1148 = vpack.c.b16 %v842, %v839
    %v1149 = vpack.c.b16 %v846, %v843
    %v1150 = vpack.c.b16 %v847, %v844
    %v1151 = vpack.c.b16 %v848, %v845
    %v1152 = vpack.c.b16 %v852, %v849
    %v1153 = vpack.c.b16 %v853, %v850
    %v1154 = vpack.c.b16 %v854, %v851
    %v1155 = vpack.c.b16 %v858, %v855
    %v1156 = vpack.c.b16 %v859, %v856
    %v1157 = vpack.c.b16 %v860, %v857
    %v1158 = vpack.c.b16 %v864, %v861
    %v1159 = vpack.c.b16 %v865, %v862
    %v1160 = vpack.c.b16 %v866, %v863
    %v1161 = vpack.c.b16 %v870, %v867
    %v1162 = vpack.c.b16 %v871, %v868
    %v1163 = vpack.c.b16 %v872, %v869
    %v1164 = vpack.c.b16 %v876, %v873
    %v1165 = vpack.c.b16 %v877, %v874
    %v1166 = vpack.c.b16 %v878, %v875
    %v1167 = vpack.c.b16 %v882, %v879
    %v1168 = vpack.c.b16 %v883, %v880
    %v1169 = vpack.c.b16 %v884, %v881
    %v1170 = vpack.c.b16 %v888, %v885
    %v1171 = vpack.c.b16 %v889, %v886
    %v1172 = vpack.c.b16 %v890, %v887
    %v1173 = vpack.c.b16 %v894, %v891
    %v1174 = vpack.c.b16 %v895, %v892
    %v1175 = vpack.c.b16 %v896, %v893
    %v1176 = vpack.c.b16 %v900, %v897
    %v1177 = vpack.c.b16 %v901, %v898
    %v1178 = vpack.c.b16 %v902, %v899
    %v1179 = vpack.c.b16 %v906, %v903
    %v1180 = vpack.c.b16 %v907, %v904
    %v1181 = vpack.c.b16 %v908, %v905
    %v1182 = vpack.c.b16 %v912, %v909
    %v1183 = vpack.c.b16 %v913, %v910
    %v1184 = vpack.c.b16 %v914, %v911
    %v1185 = vpack.c.b16 %v918, %v915
    %v1186 = vpack.c.b16 %v919, %v916
    %v1187 = vpack.c.b16 %v920, %v917
    %v1188 = vpack.c.b16 %v924, %v921
    %v1189 = vpack.c.b16 %v925, %v922
    %v1190 = vpack.c.b16 %v926, %v923
    %v1191 = vpack.c.b16 %v930, %v927
    %v1192 = vpack.c.b16 %v931, %v928
    %v1193 = vpack.c.b16 %v932, %v929
    %v1194 = vpack.c.b16 %v936, %v933
    %v1195 = vpack.c.b16 %v937, %v934
    %v1196 = vpack.c.b16 %v938, %v935
    %v1197 = vpack.c.b16 %v942, %v939
    %v1198 = vpack.c.b16 %v943, %v940
    %v1199 = vpack.c.b16 %v944, %v941
    %v1200 = vpack.c.b16 %v948, %v945
    %v1201 = vpack.c.b16 %v949, %v946
    %v1202 = vpack.c.b16 %v950, %v947
    %v1203 = vpack.c.b16 %v954, %v951
    %v1204 = vpack.c.b16 %v955, %v952
    %v1205 = vpack.c.b16 %v956, %v953
    %v1206 = vpack.c.b16 %v960, %v957
    %v1207 = vpack.c.b16 %v961, %v958
    %v1208 = vpack.c.b16 %v962, %v959
    %v1209 = vpack.c.b16 %v966, %v963
    %v1210 = vpack.c.b16 %v967, %v964
    %v1211 = vpack.c.b16 %v968, %v965
    %v1212 = vpack.c.b16 %v972, %v969
    %v1213 = vpack.c.b16 %v973, %v970
    %v1214 = vpack.c.b16 %v974, %v971
    %v1215 = vpack.c.b16 %v978, %v975
    %v1216 = vpack.c.b16 %v979, %v976
    %v1217 = vpack.c.b16 %v980, %v977
    %v1218 = vpack.c.b16 %v984, %v981
    %v1219 = vpack.c.b16 %v985, %v982
    %v1220 = vpack.c.b16 %v986, %v983
    %v1221 = vpack.c.b16 %v990, %v987
    %v1222 = vpack.c.b16 %v991, %v988
    %v1223 = vpack.c.b16 %v992, %v989
    %v1224 = vpack.c.b16 %v996, %v993
    %v1225 = vpack.c.b16 %v997, %v994
    %v1226 = vpack.c.b16 %v998, %v995
    %v1227 = vpack.c.b16 %v1002, %v999
    %v1228 = vpack.c.b16 %v1003, %v1000
    %v1229 = vpack.c.b16 %v1004, %v1001
    %v1230 = vpack.c.b16 %v1008, %v1005
    %v1231 = vpack.c.b16 %v1009, %v1006
    %v1232 = vpack.c.b16 %v1010, %v1007
    %v1233 = vpack.c.b16 %v1014, %v1011
    %v1234 = vpack.c.b16 %v1015, %v1012
    %v1235 = vpack.c.b16 %v1016, %v1013
    %v1236 = vpack.c.b16 %v1020, %v1017
    %v1237 = vpack.c.b16 %v1021, %v1018
    %v1238 = vpack.c.b16 %v1022, %v1019
    %v1239 = vpack.c.b16 %v1026, %v1023
    %v1240 = vpack.c.b16 %v1027, %v1024
    %v1241 = vpack.c.b16 %v1028, %v1025
    %v1242 = vpack.c.b16 %v1032, %v1029
    %v1243 = vpack.c.b16 %v1033, %v1030
    %v1244 = vpack.c.b16 %v1034, %v1031
    %v1245 = vpack.c.b16 %v1038, %v1035
    %v1246 = vpack.c.b16 %v1039, %v1036
    %v1247 = vpack.c.b16 %v1040, %v1037
    %v1248 = vpack.c.b16 %v1044, %v1041
    %v1249 = vpack.c.b16 %v1045, %v1042
    %v1250 = vpack.c.b16 %v1046, %v1043
    %v1251 = vpack.c.b16 %v1050, %v1047
    %v1252 = vpack.c.b16 %v1051, %v1048
    %v1253 = vpack.c.b16 %v1052, %v1049
    %v1254 = vpack.c.b16 %v1056, %v1053
    %v1255 = vpack.c.b16 %v1057, %v1054
    %v1256 = vpack.c.b16 %v1058, %v1055
    %v1257 = vpack.c.b16 %v1062, %v1059
    %v1258 = vpack.c.b16 %v1063, %v1060
    %v1259 = vpack.c.b16 %v1064, %v1061
    %v1260 = vpack.c.b16 %v1068, %v1065
    %v1261 = vpack.c.b16 %v1069, %v1066
    %v1262 = vpack.c.b16 %v1070, %v1067
    %1455 = vmatprep.subr.bf16.mxu0 %v1093
    %1456 = vmatpush1.bf16.msra.mxu0 %v1092
    %1457 = vmatprep.subr.bf16.mxu0 %v1090
    %1458 = vmatpush1.bf16.msra.mxu0 %v1089
    %1459 = vmatprep.subr.bf16.mxu0 %v1087
    %1460 = vmatpush1.bf16.msra.mxu0 %v1086
    %1461 = vmatprep.subr.bf16.mxu0 %v1084
    %1462 = vmatpush1.bf16.msra.mxu0 %v1083
    %1463 = vmatprep.subr.bf16.mxu0 %v1081
    %1464 = vmatpush1.bf16.msra.mxu0 %v1080
    %1465 = vmatprep.subr.bf16.mxu0 %v1078
    %1466 = vmatpush1.bf16.msra.mxu0 %v1077
    %1467 = vmatprep.subr.bf16.mxu0 %v1075
    %1468 = vmatpush1.bf16.msra.mxu0 %v1074
    %1469 = vmatprep.subr.bf16.mxu0 %v1072
    %1470 = vmatpush1.bf16.msra.mxu0 %v1071
    %1471 = vmatprep.subr.bf16.mxu0 %v1117
    %1472 = vmatpush2.bf16.msra.mxu0 %v1116
    %1473 = vmatprep.subr.bf16.mxu0 %v1114
    %1474 = vmatpush2.bf16.msra.mxu0 %v1113
    %1475 = vmatprep.subr.bf16.mxu0 %v1111
    %1476 = vmatpush2.bf16.msra.mxu0 %v1110
    %1477 = vmatprep.subr.bf16.mxu0 %v1108
    %1478 = vmatpush2.bf16.msra.mxu0 %v1107
    %1479 = vmatprep.subr.bf16.mxu0 %v1105
    %1480 = vmatpush2.bf16.msra.mxu0 %v1104
    %1481 = vmatprep.subr.bf16.mxu0 %v1102
    %1482 = vmatpush2.bf16.msra.mxu0 %v1101
    %1483 = vmatprep.subr.bf16.mxu0 %v1099
    %1484 = vmatpush2.bf16.msra.mxu0 %v1098
    %1485 = vmatprep.subr.bf16.mxu0 %v1096
    %1486 = vmatpush2.bf16.msra.mxu0 %v1095
    %1487 = vmatprep.mubr.bf16.mxu0 %v151
    %1488 = vmatmul.mubr.bf16.gmra.mxu0 %v150
    %v1489 = vpop.f32.mrf.mxu0
    %v1490 = vadd.f32 %v419, %v1489
    %v1491 = vpop.f32.mrf.mxu0
    %v1492 = vadd.f32 %v423, %v1491
    %v1493 = vpop.f32.mrf.mxu0
    %v1494 = vpop.f32.mrf.mxu0
    %1495 = vdwg.mxu0
    %1496 = vmatprep.subr.bf16.mxu0 %v1141
    %1497 = vmatpush1.bf16.msra.mxu0 %v1140
    %1498 = vmatprep.subr.bf16.mxu0 %v1138
    %1499 = vmatpush1.bf16.msra.mxu0 %v1137
    %1500 = vmatprep.subr.bf16.mxu0 %v1135
    %1501 = vmatpush1.bf16.msra.mxu0 %v1134
    %1502 = vmatprep.subr.bf16.mxu0 %v1132
    %1503 = vmatpush1.bf16.msra.mxu0 %v1131
    %1504 = vmatprep.subr.bf16.mxu0 %v1129
    %1505 = vmatpush1.bf16.msra.mxu0 %v1128
    %1506 = vmatprep.subr.bf16.mxu0 %v1126
    %1507 = vmatpush1.bf16.msra.mxu0 %v1125
    %1508 = vmatprep.subr.bf16.mxu0 %v1123
    %1509 = vmatpush1.bf16.msra.mxu0 %v1122
    %1510 = vmatprep.subr.bf16.mxu0 %v1120
    %1511 = vmatpush1.bf16.msra.mxu0 %v1119
    %1512 = vmatprep.subr.bf16.mxu0 %v1165
    %1513 = vmatpush2.bf16.msra.mxu0 %v1164
    %1514 = vmatprep.subr.bf16.mxu0 %v1162
    %1515 = vmatpush2.bf16.msra.mxu0 %v1161
    %1516 = vmatprep.subr.bf16.mxu0 %v1159
    %1517 = vmatpush2.bf16.msra.mxu0 %v1158
    %1518 = vmatprep.subr.bf16.mxu0 %v1156
    %1519 = vmatpush2.bf16.msra.mxu0 %v1155
    %1520 = vmatprep.subr.bf16.mxu0 %v1153
    %1521 = vmatpush2.bf16.msra.mxu0 %v1152
    %1522 = vmatprep.subr.bf16.mxu0 %v1150
    %1523 = vmatpush2.bf16.msra.mxu0 %v1149
    %1524 = vmatprep.subr.bf16.mxu0 %v1147
    %1525 = vmatpush2.bf16.msra.mxu0 %v1146
    %1526 = vmatprep.subr.bf16.mxu0 %v1144
    %1527 = vmatpush2.bf16.msra.mxu0 %v1143
    %1528 = vmatprep.mubr.bf16.mxu0 %v153
    %1529 = vmatmul.mubr.bf16.gmra.mxu0 %v152
    %v1530 = vpop.f32.mrf.mxu0
    %v1531 = vadd.f32 %v1490, %v1530
    %v1532 = vpop.f32.mrf.mxu0
    %v1533 = vadd.f32 %v1492, %v1532
    %v1534 = vpop.f32.mrf.mxu0
    %v1535 = vpop.f32.mrf.mxu0
    %1536 = vdwg.mxu0
    %1537 = vmatprep.subr.bf16.mxu0 %v1189
    %1538 = vmatpush1.bf16.msra.mxu0 %v1188
    %1539 = vmatprep.subr.bf16.mxu0 %v1186
    %1540 = vmatpush1.bf16.msra.mxu0 %v1185
    %1541 = vmatprep.subr.bf16.mxu0 %v1183
    %1542 = vmatpush1.bf16.msra.mxu0 %v1182
    %1543 = vmatprep.subr.bf16.mxu0 %v1180
    %1544 = vmatpush1.bf16.msra.mxu0 %v1179
    %1545 = vmatprep.subr.bf16.mxu0 %v1177
    %1546 = vmatpush1.bf16.msra.mxu0 %v1176
    %1547 = vmatprep.subr.bf16.mxu0 %v1174
    %1548 = vmatpush1.bf16.msra.mxu0 %v1173
    %1549 = vmatprep.subr.bf16.mxu0 %v1171
    %1550 = vmatpush1.bf16.msra.mxu0 %v1170
    %1551 = vmatprep.subr.bf16.mxu0 %v1168
    %1552 = vmatpush1.bf16.msra.mxu0 %v1167
    %1553 = vmatprep.subr.bf16.mxu0 %v1213
    %1554 = vmatpush2.bf16.msra.mxu0 %v1212
    %1555 = vmatprep.subr.bf16.mxu0 %v1210
    %1556 = vmatpush2.bf16.msra.mxu0 %v1209
    %1557 = vmatprep.subr.bf16.mxu0 %v1207
    %1558 = vmatpush2.bf16.msra.mxu0 %v1206
    %1559 = vmatprep.subr.bf16.mxu0 %v1204
    %1560 = vmatpush2.bf16.msra.mxu0 %v1203
    %1561 = vmatprep.subr.bf16.mxu0 %v1201
    %1562 = vmatpush2.bf16.msra.mxu0 %v1200
    %1563 = vmatprep.subr.bf16.mxu0 %v1198
    %1564 = vmatpush2.bf16.msra.mxu0 %v1197
    %1565 = vmatprep.subr.bf16.mxu0 %v1195
    %1566 = vmatpush2.bf16.msra.mxu0 %v1194
    %1567 = vmatprep.subr.bf16.mxu0 %v1192
    %1568 = vmatpush2.bf16.msra.mxu0 %v1191
    %1569 = vmatprep.mubr.bf16.mxu0 %v155
    %1570 = vmatmul.mubr.bf16.gmra.mxu0 %v154
    %v1571 = vpop.f32.mrf.mxu0
    %v1572 = vadd.f32 %v1531, %v1571
    %v1573 = vpop.f32.mrf.mxu0
    %v1574 = vadd.f32 %v1533, %v1573
    %v1575 = vpop.f32.mrf.mxu0
    %v1576 = vpop.f32.mrf.mxu0
    %1577 = vdwg.mxu0
    %1578 = vmatprep.subr.bf16.mxu0 %v1237
    %1579 = vmatpush1.bf16.msra.mxu0 %v1236
    %1580 = vmatprep.subr.bf16.mxu0 %v1234
    %1581 = vmatpush1.bf16.msra.mxu0 %v1233
    %1582 = vmatprep.subr.bf16.mxu0 %v1231
    %1583 = vmatpush1.bf16.msra.mxu0 %v1230
    %1584 = vmatprep.subr.bf16.mxu0 %v1228
    %1585 = vmatpush1.bf16.msra.mxu0 %v1227
    %1586 = vmatprep.subr.bf16.mxu0 %v1225
    %1587 = vmatpush1.bf16.msra.mxu0 %v1224
    %1588 = vmatprep.subr.bf16.mxu0 %v1222
    %1589 = vmatpush1.bf16.msra.mxu0 %v1221
    %1590 = vmatprep.subr.bf16.mxu0 %v1219
    %1591 = vmatpush1.bf16.msra.mxu0 %v1218
    %1592 = vmatprep.subr.bf16.mxu0 %v1216
    %1593 = vmatpush1.bf16.msra.mxu0 %v1215
    %1594 = vmatprep.subr.bf16.mxu0 %v1261
    %1595 = vmatpush2.bf16.msra.mxu0 %v1260
    %1596 = vmatprep.subr.bf16.mxu0 %v1258
    %1597 = vmatpush2.bf16.msra.mxu0 %v1257
    %1598 = vmatprep.subr.bf16.mxu0 %v1255
    %1599 = vmatpush2.bf16.msra.mxu0 %v1254
    %1600 = vmatprep.subr.bf16.mxu0 %v1252
    %1601 = vmatpush2.bf16.msra.mxu0 %v1251
    %1602 = vmatprep.subr.bf16.mxu0 %v1249
    %1603 = vmatpush2.bf16.msra.mxu0 %v1248
    %1604 = vmatprep.subr.bf16.mxu0 %v1246
    %1605 = vmatpush2.bf16.msra.mxu0 %v1245
    %1606 = vmatprep.subr.bf16.mxu0 %v1243
    %1607 = vmatpush2.bf16.msra.mxu0 %v1242
    %1608 = vmatprep.subr.bf16.mxu0 %v1240
    %1609 = vmatpush2.bf16.msra.mxu0 %v1239
    %1610 = vmatprep.mubr.bf16.mxu0 %v157
    %1611 = vmatmul.mubr.bf16.gmra.mxu0 %v156
    %v1612 = vpop.f32.mrf.mxu0
    %v1613 = vadd.f32 %v1572, %v1612
    %v1614 = vpop.f32.mrf.mxu0
    %v1615 = vadd.f32 %v1574, %v1614
    %v1616 = vpop.f32.mrf.mxu0
    %v1617 = vpop.f32.mrf.mxu0
    %1618 = vdwg.mxu0
    %1619 = vmatprep.subr.bf16.mxu0 0
    %1620 = vmatpush1.bf16.msra.mxu0 %v1094
    %1621 = vmatprep.subr.bf16.mxu0 0
    %1622 = vmatpush1.bf16.msra.mxu0 %v1091
    %1623 = vmatprep.subr.bf16.mxu0 0
    %1624 = vmatpush1.bf16.msra.mxu0 %v1088
    %1625 = vmatprep.subr.bf16.mxu0 0
    %1626 = vmatpush1.bf16.msra.mxu0 %v1085
    %1627 = vmatprep.subr.bf16.mxu0 0
    %1628 = vmatpush1.bf16.msra.mxu0 %v1082
    %1629 = vmatprep.subr.bf16.mxu0 0
    %1630 = vmatpush1.bf16.msra.mxu0 %v1079
    %1631 = vmatprep.subr.bf16.mxu0 0
    %1632 = vmatpush1.bf16.msra.mxu0 %v1076
    %1633 = vmatprep.subr.bf16.mxu0 0
    %1634 = vmatpush1.bf16.msra.mxu0 %v1073
    %1635 = vmatprep.subr.bf16.mxu0 0
    %1636 = vmatpush2.bf16.msra.mxu0 %v1118
    %1637 = vmatprep.subr.bf16.mxu0 0
    %1638 = vmatpush2.bf16.msra.mxu0 %v1115
    %1639 = vmatprep.subr.bf16.mxu0 0
    %1640 = vmatpush2.bf16.msra.mxu0 %v1112
    %1641 = vmatprep.subr.bf16.mxu0 0
    %1642 = vmatpush2.bf16.msra.mxu0 %v1109
    %1643 = vmatprep.subr.bf16.mxu0 0
    %1644 = vmatpush2.bf16.msra.mxu0 %v1106
    %1645 = vmatprep.subr.bf16.mxu0 0
    %1646 = vmatpush2.bf16.msra.mxu0 %v1103
    %1647 = vmatprep.subr.bf16.mxu0 0
    %1648 = vmatpush2.bf16.msra.mxu0 %v1100
    %1649 = vmatprep.subr.bf16.mxu0 0
    %1650 = vmatpush2.bf16.msra.mxu0 %v1097
    %1651 = vmatprep.mubr.bf16.mxu0 %v151
    %1652 = vmatmul.mubr.bf16.gmra.mxu0 %v150
    %v1653 = vpop.f32.mrf.mxu0
    %v1654 = vadd.f32 %v427, %v1653
    %v1655 = vpop.f32.mrf.mxu0
    %v1656 = vpop.f32.mrf.mxu0
    %v1657 = vpop.f32.mrf.mxu0
    %1658 = vdwg.mxu0
    %1659 = vmatprep.subr.bf16.mxu0 0
    %1660 = vmatpush1.bf16.msra.mxu0 %v1142
    %1661 = vmatprep.subr.bf16.mxu0 0
    %1662 = vmatpush1.bf16.msra.mxu0 %v1139
    %1663 = vmatprep.subr.bf16.mxu0 0
    %1664 = vmatpush1.bf16.msra.mxu0 %v1136
    %1665 = vmatprep.subr.bf16.mxu0 0
    %1666 = vmatpush1.bf16.msra.mxu0 %v1133
    %1667 = vmatprep.subr.bf16.mxu0 0
    %1668 = vmatpush1.bf16.msra.mxu0 %v1130
    %1669 = vmatprep.subr.bf16.mxu0 0
    %1670 = vmatpush1.bf16.msra.mxu0 %v1127
    %1671 = vmatprep.subr.bf16.mxu0 0
    %1672 = vmatpush1.bf16.msra.mxu0 %v1124
    %1673 = vmatprep.subr.bf16.mxu0 0
    %1674 = vmatpush1.bf16.msra.mxu0 %v1121
    %1675 = vmatprep.subr.bf16.mxu0 0
    %1676 = vmatpush2.bf16.msra.mxu0 %v1166
    %1677 = vmatprep.subr.bf16.mxu0 0
    %1678 = vmatpush2.bf16.msra.mxu0 %v1163
    %1679 = vmatprep.subr.bf16.mxu0 0
    %1680 = vmatpush2.bf16.msra.mxu0 %v1160
    %1681 = vmatprep.subr.bf16.mxu0 0
    %1682 = vmatpush2.bf16.msra.mxu0 %v1157
    %1683 = vmatprep.subr.bf16.mxu0 0
    %1684 = vmatpush2.bf16.msra.mxu0 %v1154
    %1685 = vmatprep.subr.bf16.mxu0 0
    %1686 = vmatpush2.bf16.msra.mxu0 %v1151
    %1687 = vmatprep.subr.bf16.mxu0 0
    %1688 = vmatpush2.bf16.msra.mxu0 %v1148
    %1689 = vmatprep.subr.bf16.mxu0 0
    %1690 = vmatpush2.bf16.msra.mxu0 %v1145
    %1691 = vmatprep.mubr.bf16.mxu0 %v153
    %1692 = vmatmul.mubr.bf16.gmra.mxu0 %v152
    %v1693 = vpop.f32.mrf.mxu0
    %v1694 = vadd.f32 %v1654, %v1693
    %v1695 = vpop.f32.mrf.mxu0
    %v1696 = vpop.f32.mrf.mxu0
    %v1697 = vpop.f32.mrf.mxu0
    %1698 = vdwg.mxu0
    %1699 = vmatprep.subr.bf16.mxu0 0
    %1700 = vmatpush1.bf16.msra.mxu0 %v1190
    %1701 = vmatprep.subr.bf16.mxu0 0
    %1702 = vmatpush1.bf16.msra.mxu0 %v1187
    %1703 = vmatprep.subr.bf16.mxu0 0
    %1704 = vmatpush1.bf16.msra.mxu0 %v1184
    %1705 = vmatprep.subr.bf16.mxu0 0
    %1706 = vmatpush1.bf16.msra.mxu0 %v1181
    %1707 = vmatprep.subr.bf16.mxu0 0
    %1708 = vmatpush1.bf16.msra.mxu0 %v1178
    %1709 = vmatprep.subr.bf16.mxu0 0
    %1710 = vmatpush1.bf16.msra.mxu0 %v1175
    %1711 = vmatprep.subr.bf16.mxu0 0
    %1712 = vmatpush1.bf16.msra.mxu0 %v1172
    %1713 = vmatprep.subr.bf16.mxu0 0
    %1714 = vmatpush1.bf16.msra.mxu0 %v1169
    %1715 = vmatprep.subr.bf16.mxu0 0
    %1716 = vmatpush2.bf16.msra.mxu0 %v1214
    %1717 = vmatprep.subr.bf16.mxu0 0
    %1718 = vmatpush2.bf16.msra.mxu0 %v1211
    %1719 = vmatprep.subr.bf16.mxu0 0
    %1720 = vmatpush2.bf16.msra.mxu0 %v1208
    %1721 = vmatprep.subr.bf16.mxu0 0
    %1722 = vmatpush2.bf16.msra.mxu0 %v1205
    %1723 = vmatprep.subr.bf16.mxu0 0
    %1724 = vmatpush2.bf16.msra.mxu0 %v1202
    %1725 = vmatprep.subr.bf16.mxu0 0
    %1726 = vmatpush2.bf16.msra.mxu0 %v1199
    %1727 = vmatprep.subr.bf16.mxu0 0
    %1728 = vmatpush2.bf16.msra.mxu0 %v1196
    %1729 = vmatprep.subr.bf16.mxu0 0
    %1730 = vmatpush2.bf16.msra.mxu0 %v1193
    %1731 = vmatprep.mubr.bf16.mxu0 %v155
    %1732 = vmatmul.mubr.bf16.gmra.mxu0 %v154
    %v1733 = vpop.f32.mrf.mxu0
    %v1734 = vadd.f32 %v1694, %v1733
    %v1735 = vpop.f32.mrf.mxu0
    %v1736 = vpop.f32.mrf.mxu0
    %v1737 = vpop.f32.mrf.mxu0
    %1738 = vdwg.mxu0
    %1739 = vmatprep.subr.bf16.mxu0 0
    %1740 = vmatpush1.bf16.msra.mxu0 %v1238
    %1741 = vmatprep.subr.bf16.mxu0 0
    %1742 = vmatpush1.bf16.msra.mxu0 %v1235
    %1743 = vmatprep.subr.bf16.mxu0 0
    %1744 = vmatpush1.bf16.msra.mxu0 %v1232
    %1745 = vmatprep.subr.bf16.mxu0 0
    %1746 = vmatpush1.bf16.msra.mxu0 %v1229
    %1747 = vmatprep.subr.bf16.mxu0 0
    %1748 = vmatpush1.bf16.msra.mxu0 %v1226
    %1749 = vmatprep.subr.bf16.mxu0 0
    %1750 = vmatpush1.bf16.msra.mxu0 %v1223
    %1751 = vmatprep.subr.bf16.mxu0 0
    %1752 = vmatpush1.bf16.msra.mxu0 %v1220
    %1753 = vmatprep.subr.bf16.mxu0 0
    %1754 = vmatpush1.bf16.msra.mxu0 %v1217
    %1755 = vmatprep.subr.bf16.mxu0 0
    %1756 = vmatpush2.bf16.msra.mxu0 %v1262
    %1757 = vmatprep.subr.bf16.mxu0 0
    %1758 = vmatpush2.bf16.msra.mxu0 %v1259
    %1759 = vmatprep.subr.bf16.mxu0 0
    %1760 = vmatpush2.bf16.msra.mxu0 %v1256
    %1761 = vmatprep.subr.bf16.mxu0 0
    %1762 = vmatpush2.bf16.msra.mxu0 %v1253
    %1763 = vmatprep.subr.bf16.mxu0 0
    %1764 = vmatpush2.bf16.msra.mxu0 %v1250
    %1765 = vmatprep.subr.bf16.mxu0 0
    %1766 = vmatpush2.bf16.msra.mxu0 %v1247
    %1767 = vmatprep.subr.bf16.mxu0 0
    %1768 = vmatpush2.bf16.msra.mxu0 %v1244
    %1769 = vmatprep.subr.bf16.mxu0 0
    %1770 = vmatpush2.bf16.msra.mxu0 %v1241
    %1771 = vmatprep.mubr.bf16.mxu0 %v157
    %1772 = vmatmul.mubr.bf16.gmra.mxu0 %v156
    %v1773 = vpop.f32.mrf.mxu0
    %v1774 = vadd.f32 %v1734, %v1773
    %v1775 = vpop.f32.mrf.mxu0
    %v1776 = vpop.f32.mrf.mxu0
    %v1777 = vpop.f32.mrf.mxu0
    %1778 = vdwg.mxu0
    %v1779 = vmax.f32 %v1613, 0.0
    %v1780 = vmax.f32 %v1615, 0.0
    %v1781 = vmax.f32 %v1774, 0.0
    %v1782 = vpack.c.bf16 %v1779, %v1779
    %v1783 = vpack.c.bf16 %v1780, %v1780
    %v1784 = vpack.c.bf16 %v1781, %v1781
    %v1785 = vld [vmem:[#allocation10] sm:$0xff]
    %v1786 = vld [vmem:[#allocation10 + $0x8] sm:$0xff]
    %v1787 = vld [vmem:[#allocation10 + $0x10] sm:$0xff]
    %v1788 = vld [vmem:[#allocation10 + $0x18] sm:$0xff]
    %v1789 = vld [vmem:[#allocation10 + $0x20] sm:$0xff]
    %v1790 = vld [vmem:[#allocation10 + $0x28] sm:$0xff]
    %v1791 = vld [vmem:[#allocation10 + $0x30] sm:$0xff]
    %v1792 = vld [vmem:[#allocation10 + $0x38] sm:$0xff]
    %v1793 = vld [vmem:[#allocation10 + $0x40] sm:$0xff]
    %v1794 = vld [vmem:[#allocation10 + $0x48] sm:$0xff]
    %v1795 = vld [vmem:[#allocation10 + $0x50] sm:$0xff]
    %v1796 = vld [vmem:[#allocation10 + $0x58] sm:$0xff]
    %v1797 = vld [vmem:[#allocation10 + $0x60] sm:$0xff]
    %v1798 = vld [vmem:[#allocation10 + $0x68] sm:$0xff]
    %v1799 = vld [vmem:[#allocation10 + $0x70] sm:$0xff]
    %v1800 = vld [vmem:[#allocation10 + $0x78] sm:$0xff]
    %v1801 = vld [vmem:[#allocation10 + $0x80] sm:$0xff]
    %v1802 = vld [vmem:[#allocation10 + $0x88] sm:$0xff]
    %v1803 = vld [vmem:[#allocation10 + $0x90] sm:$0xff]
    %v1804 = vld [vmem:[#allocation10 + $0x98] sm:$0xff]
    %v1805 = vld [vmem:[#allocation10 + $0xa0] sm:$0xff]
    %v1806 = vld [vmem:[#allocation10 + $0xa8] sm:$0xff]
    %v1807 = vld [vmem:[#allocation10 + $0xb0] sm:$0xff]
    %v1808 = vld [vmem:[#allocation10 + $0xb8] sm:$0xff]
    %v1809 = vld [vmem:[#allocation10 + $0xc0] sm:$0xff]
    %v1810 = vld [vmem:[#allocation10 + $0xc8] sm:$0xff]
    %v1811 = vld [vmem:[#allocation10 + $0xd0] sm:$0xff]
    %v1812 = vld [vmem:[#allocation10 + $0xd8] sm:$0xff]
    %v1813 = vld [vmem:[#allocation10 + $0xe0] sm:$0xff]
    %v1814 = vld [vmem:[#allocation10 + $0xe8] sm:$0xff]
    %v1815 = vld [vmem:[#allocation10 + $0xf0] sm:$0xff]
    %v1816 = vld [vmem:[#allocation10 + $0xf8] sm:$0xff]
    %v1817 = vld [vmem:[#allocation10 + $0x100] sm:$0xff]
    %v1818 = vld [vmem:[#allocation10 + $0x108] sm:$0xff]
    %v1819 = vld [vmem:[#allocation10 + $0x110] sm:$0xff]
    %v1820 = vld [vmem:[#allocation10 + $0x118] sm:$0xff]
    %v1821 = vld [vmem:[#allocation10 + $0x120] sm:$0xff]
    %v1822 = vld [vmem:[#allocation10 + $0x128] sm:$0xff]
    %v1823 = vld [vmem:[#allocation10 + $0x130] sm:$0xff]
    %v1824 = vld [vmem:[#allocation10 + $0x138] sm:$0xff]
    %v1825 = vld [vmem:[#allocation10 + $0x140] sm:$0xff]
    %v1826 = vld [vmem:[#allocation10 + $0x148] sm:$0xff]
    %v1827 = vld [vmem:[#allocation10 + $0x150] sm:$0xff]
    %v1828 = vld [vmem:[#allocation10 + $0x158] sm:$0xff]
    %v1829 = vld [vmem:[#allocation10 + $0x160] sm:$0xff]
    %v1830 = vld [vmem:[#allocation10 + $0x168] sm:$0xff]
    %v1831 = vld [vmem:[#allocation10 + $0x170] sm:$0xff]
    %v1832 = vld [vmem:[#allocation10 + $0x178] sm:$0xff]
    %v1833 = vld [vmem:[#allocation10 + $0x180] sm:$0xff]
    %v1834 = vld [vmem:[#allocation10 + $0x188] sm:$0xff]
    %v1835 = vld [vmem:[#allocation10 + $0x190] sm:$0xff]
    %v1836 = vld [vmem:[#allocation10 + $0x198] sm:$0xff]
    %v1837 = vld [vmem:[#allocation10 + $0x1a0] sm:$0xff]
    %v1838 = vld [vmem:[#allocation10 + $0x1a8] sm:$0xff]
    %v1839 = vld [vmem:[#allocation10 + $0x1b0] sm:$0xff]
    %v1840 = vld [vmem:[#allocation10 + $0x1b8] sm:$0xff]
    %v1841 = vld [vmem:[#allocation10 + $0x1c0] sm:$0xff]
    %v1842 = vld [vmem:[#allocation10 + $0x1c8] sm:$0xff]
    %v1843 = vld [vmem:[#allocation10 + $0x1d0] sm:$0xff]
    %v1844 = vld [vmem:[#allocation10 + $0x1d8] sm:$0xff]
    %v1845 = vld [vmem:[#allocation10 + $0x1e0] sm:$0xff]
    %v1846 = vld [vmem:[#allocation10 + $0x1e8] sm:$0xff]
    %v1847 = vld [vmem:[#allocation10 + $0x1f0] sm:$0xff]
    %v1848 = vld [vmem:[#allocation10 + $0x1f8] sm:$0xff]
    %v1849 = vld [vmem:[#allocation10 + $0x200] sm:$0xff]
    %v1850 = vld [vmem:[#allocation10 + $0x208] sm:$0xff]
    %v1851 = vld [vmem:[#allocation10 + $0x210] sm:$0xff]
    %v1852 = vld [vmem:[#allocation10 + $0x218] sm:$0xff]
    %v1853 = vld [vmem:[#allocation10 + $0x220] sm:$0xff]
    %v1854 = vld [vmem:[#allocation10 + $0x228] sm:$0xff]
    %v1855 = vld [vmem:[#allocation10 + $0x230] sm:$0xff]
    %v1856 = vld [vmem:[#allocation10 + $0x238] sm:$0xff]
    %v1857 = vld [vmem:[#allocation10 + $0x240] sm:$0xff]
    %v1858 = vld [vmem:[#allocation10 + $0x248] sm:$0xff]
    %v1859 = vld [vmem:[#allocation10 + $0x250] sm:$0xff]
    %v1860 = vld [vmem:[#allocation10 + $0x258] sm:$0xff]
    %v1861 = vld [vmem:[#allocation10 + $0x260] sm:$0xff]
    %v1862 = vld [vmem:[#allocation10 + $0x268] sm:$0xff]
    %v1863 = vld [vmem:[#allocation10 + $0x270] sm:$0xff]
    %v1864 = vld [vmem:[#allocation10 + $0x278] sm:$0xff]
    %v1865 = vld [vmem:[#allocation10 + $0x280] sm:$0xff]
    %v1866 = vld [vmem:[#allocation10 + $0x288] sm:$0xff]
    %v1867 = vld [vmem:[#allocation10 + $0x290] sm:$0xff]
    %v1868 = vld [vmem:[#allocation10 + $0x298] sm:$0xff]
    %v1869 = vld [vmem:[#allocation10 + $0x2a0] sm:$0xff]
    %v1870 = vld [vmem:[#allocation10 + $0x2a8] sm:$0xff]
    %v1871 = vld [vmem:[#allocation10 + $0x2b0] sm:$0xff]
    %v1872 = vld [vmem:[#allocation10 + $0x2b8] sm:$0xff]
    %v1873 = vld [vmem:[#allocation10 + $0x2c0] sm:$0xff]
    %v1874 = vld [vmem:[#allocation10 + $0x2c8] sm:$0xff]
    %v1875 = vld [vmem:[#allocation10 + $0x2d0] sm:$0xff]
    %v1876 = vld [vmem:[#allocation10 + $0x2d8] sm:$0xff]
    %v1877 = vld [vmem:[#allocation10 + $0x2e0] sm:$0xff]
    %v1878 = vld [vmem:[#allocation10 + $0x2e8] sm:$0xff]
    %v1879 = vld [vmem:[#allocation10 + $0x2f0] sm:$0xff]
    %v1880 = vld [vmem:[#allocation10 + $0x2f8] sm:$0xff]
    %v1881 = vld [vmem:[#allocation10 + $0x300] sm:$0xff]
    %v1882 = vld [vmem:[#allocation10 + $0x308] sm:$0xff]
    %v1883 = vld [vmem:[#allocation10 + $0x310] sm:$0xff]
    %v1884 = vld [vmem:[#allocation10 + $0x318] sm:$0xff]
    %v1885 = vld [vmem:[#allocation10 + $0x320] sm:$0xff]
    %v1886 = vld [vmem:[#allocation10 + $0x328] sm:$0xff]
    %v1887 = vld [vmem:[#allocation10 + $0x330] sm:$0xff]
    %v1888 = vld [vmem:[#allocation10 + $0x338] sm:$0xff]
    %v1889 = vld [vmem:[#allocation10 + $0x340] sm:$0xff]
    %v1890 = vld [vmem:[#allocation10 + $0x348] sm:$0xff]
    %v1891 = vld [vmem:[#allocation10 + $0x350] sm:$0xff]
    %v1892 = vld [vmem:[#allocation10 + $0x358] sm:$0xff]
    %v1893 = vld [vmem:[#allocation10 + $0x360] sm:$0xff]
    %v1894 = vld [vmem:[#allocation10 + $0x368] sm:$0xff]
    %v1895 = vld [vmem:[#allocation10 + $0x370] sm:$0xff]
    %v1896 = vld [vmem:[#allocation10 + $0x378] sm:$0xff]
    %v1897 = vld [vmem:[#allocation10 + $0x380] sm:$0xff]
    %v1898 = vld [vmem:[#allocation10 + $0x388] sm:$0xff]
    %v1899 = vld [vmem:[#allocation10 + $0x390] sm:$0xff]
    %v1900 = vld [vmem:[#allocation10 + $0x398] sm:$0xff]
    %v1901 = vld [vmem:[#allocation10 + $0x3a0] sm:$0xff]
    %v1902 = vld [vmem:[#allocation10 + $0x3a8] sm:$0xff]
    %v1903 = vld [vmem:[#allocation10 + $0x3b0] sm:$0xff]
    %v1904 = vld [vmem:[#allocation10 + $0x3b8] sm:$0xff]
    %v1905 = vld [vmem:[#allocation10 + $0x3c0] sm:$0xff]
    %v1906 = vld [vmem:[#allocation10 + $0x3c8] sm:$0xff]
    %v1907 = vld [vmem:[#allocation10 + $0x3d0] sm:$0xff]
    %v1908 = vld [vmem:[#allocation10 + $0x3d8] sm:$0xff]
    %v1909 = vld [vmem:[#allocation10 + $0x3e0] sm:$0xff]
    %v1910 = vld [vmem:[#allocation10 + $0x3e8] sm:$0xff]
    %v1911 = vld [vmem:[#allocation10 + $0x3f0] sm:$0xff]
    %v1912 = vld [vmem:[#allocation10 + $0x3f8] sm:$0xff]
    %v1913 = vld [vmem:[#allocation10 + $0x400] sm:$0xff]
    %v1914 = vld [vmem:[#allocation10 + $0x408] sm:$0xff]
    %v1915 = vld [vmem:[#allocation10 + $0x410] sm:$0xff]
    %v1916 = vld [vmem:[#allocation10 + $0x418] sm:$0xff]
    %v1917 = vld [vmem:[#allocation10 + $0x420] sm:$0xff]
    %v1918 = vld [vmem:[#allocation10 + $0x428] sm:$0xff]
    %v1919 = vld [vmem:[#allocation10 + $0x430] sm:$0xff]
    %v1920 = vld [vmem:[#allocation10 + $0x438] sm:$0xff]
    %v1921 = vld [vmem:[#allocation10 + $0x440] sm:$0xff]
    %v1922 = vld [vmem:[#allocation10 + $0x448] sm:$0xff]
    %v1923 = vld [vmem:[#allocation10 + $0x450] sm:$0xff]
    %v1924 = vld [vmem:[#allocation10 + $0x458] sm:$0xff]
    %v1925 = vld [vmem:[#allocation10 + $0x460] sm:$0xff]
    %v1926 = vld [vmem:[#allocation10 + $0x468] sm:$0xff]
    %v1927 = vld [vmem:[#allocation10 + $0x470] sm:$0xff]
    %v1928 = vld [vmem:[#allocation10 + $0x478] sm:$0xff]
    %v1929 = vld [vmem:[%s5] sm:$0x3f]
    %v1931 = vlaneseq
    %v1932 = vshrl.u32 %v1931, 7
    %v1933 = vsub.s32 0, %v1932
    %v1934 = vrot.slane %v1929, %v1933
    %v1935 = vlaneseq
    %v1936 = vshrl.u32 %v1935, 7
    %v1937 = vsub.s32 1, %v1936
    %v1938 = vrot.slane %v1929, %v1937
    %v1939 = vlaneseq
    %v1940 = vshrl.u32 %v1939, 7
    %v1941 = vsub.s32 2, %v1940
    %v1942 = vrot.slane %v1929, %v1941
    %v1943 = vlaneseq
    %v1944 = vshrl.u32 %v1943, 7
    %v1945 = vsub.s32 3, %v1944
    %v1946 = vrot.slane %v1929, %v1945
    %v1947 = vlaneseq
    %v1948 = vshrl.u32 %v1947, 7
    %v1949 = vsub.s32 4, %v1948
    %v1950 = vrot.slane %v1929, %v1949
    %v1951 = vlaneseq
    %v1952 = vshrl.u32 %v1951, 7
    %v1953 = vsub.s32 5, %v1952
    %v1954 = vrot.slane %v1929, %v1953
    %v2105 = vunpack.c.l.b16 %v1785
    %v2106 = vunpack.c.h.b16 %v1785
    %v2107 = vunpack.c.l.b16 %v1786
    %v2108 = vunpack.c.h.b16 %v1786
    %v2109 = vunpack.c.l.b16 %v1787
    %v2110 = vunpack.c.h.b16 %v1787
    %v2111 = vunpack.c.l.b16 %v1788
    %v2112 = vunpack.c.h.b16 %v1788
    %v2113 = vunpack.c.l.b16 %v1789
    %v2114 = vunpack.c.h.b16 %v1789
    %v2115 = vunpack.c.l.b16 %v1790
    %v2116 = vunpack.c.h.b16 %v1790
    %v2117 = vunpack.c.l.b16 %v1791
    %v2118 = vunpack.c.h.b16 %v1791
    %v2119 = vunpack.c.l.b16 %v1792
    %v2120 = vunpack.c.h.b16 %v1792
    %v2121 = vunpack.c.l.b16 %v1793
    %v2122 = vunpack.c.h.b16 %v1793
    %v2123 = vunpack.c.l.b16 %v1794
    %v2124 = vunpack.c.h.b16 %v1794
    %v2125 = vunpack.c.l.b16 %v1795
    %v2126 = vunpack.c.h.b16 %v1795
    %v2127 = vunpack.c.l.b16 %v1796
    %v2128 = vunpack.c.h.b16 %v1796
    %v2129 = vunpack.c.l.b16 %v1797
    %v2130 = vunpack.c.h.b16 %v1797
    %v2131 = vunpack.c.l.b16 %v1798
    %v2132 = vunpack.c.h.b16 %v1798
    %v2133 = vunpack.c.l.b16 %v1799
    %v2134 = vunpack.c.h.b16 %v1799
    %v2135 = vunpack.c.l.b16 %v1800
    %v2136 = vunpack.c.h.b16 %v1800
    %v2137 = vunpack.c.l.b16 %v1801
    %v2138 = vunpack.c.h.b16 %v1801
    %v2139 = vunpack.c.l.b16 %v1802
    %v2140 = vunpack.c.h.b16 %v1802
    %v2141 = vunpack.c.l.b16 %v1803
    %v2142 = vunpack.c.h.b16 %v1803
    %v2143 = vunpack.c.l.b16 %v1804
    %v2144 = vunpack.c.h.b16 %v1804
    %v2145 = vunpack.c.l.b16 %v1805
    %v2146 = vunpack.c.h.b16 %v1805
    %v2147 = vunpack.c.l.b16 %v1806
    %v2148 = vunpack.c.h.b16 %v1806
    %v2149 = vunpack.c.l.b16 %v1807
    %v2150 = vunpack.c.h.b16 %v1807
    %v2151 = vunpack.c.l.b16 %v1808
    %v2152 = vunpack.c.h.b16 %v1808
    %v2153 = vunpack.c.l.b16 %v1809
    %v2154 = vunpack.c.h.b16 %v1809
    %v2155 = vunpack.c.l.b16 %v1810
    %v2156 = vunpack.c.h.b16 %v1810
    %v2157 = vunpack.c.l.b16 %v1811
    %v2158 = vunpack.c.h.b16 %v1811
    %v2159 = vunpack.c.l.b16 %v1812
    %v2160 = vunpack.c.h.b16 %v1812
    %v2161 = vunpack.c.l.b16 %v1813
    %v2162 = vunpack.c.h.b16 %v1813
    %v2163 = vunpack.c.l.b16 %v1814
    %v2164 = vunpack.c.h.b16 %v1814
    %v2165 = vunpack.c.l.b16 %v1815
    %v2166 = vunpack.c.h.b16 %v1815
    %v2167 = vunpack.c.l.b16 %v1816
    %v2168 = vunpack.c.h.b16 %v1816
    %v2169 = vunpack.c.l.b16 %v1817
    %v2170 = vunpack.c.h.b16 %v1817
    %v2171 = vunpack.c.l.b16 %v1818
    %v2172 = vunpack.c.h.b16 %v1818
    %v2173 = vunpack.c.l.b16 %v1819
    %v2174 = vunpack.c.h.b16 %v1819
    %v2175 = vunpack.c.l.b16 %v1820
    %v2176 = vunpack.c.h.b16 %v1820
    %v2177 = vunpack.c.l.b16 %v1821
    %v2178 = vunpack.c.h.b16 %v1821
    %v2179 = vunpack.c.l.b16 %v1822
    %v2180 = vunpack.c.h.b16 %v1822
    %v2181 = vunpack.c.l.b16 %v1823
    %v2182 = vunpack.c.h.b16 %v1823
    %v2183 = vunpack.c.l.b16 %v1824
    %v2184 = vunpack.c.h.b16 %v1824
    %v2185 = vunpack.c.l.b16 %v1825
    %v2186 = vunpack.c.h.b16 %v1825
    %v2187 = vunpack.c.l.b16 %v1826
    %v2188 = vunpack.c.h.b16 %v1826
    %v2189 = vunpack.c.l.b16 %v1827
    %v2190 = vunpack.c.h.b16 %v1827
    %v2191 = vunpack.c.l.b16 %v1828
    %v2192 = vunpack.c.h.b16 %v1828
    %v2193 = vunpack.c.l.b16 %v1829
    %v2194 = vunpack.c.h.b16 %v1829
    %v2195 = vunpack.c.l.b16 %v1830
    %v2196 = vunpack.c.h.b16 %v1830
    %v2197 = vunpack.c.l.b16 %v1831
    %v2198 = vunpack.c.h.b16 %v1831
    %v2199 = vunpack.c.l.b16 %v1832
    %v2200 = vunpack.c.h.b16 %v1832
    %v2201 = vunpack.c.l.b16 %v1833
    %v2202 = vunpack.c.h.b16 %v1833
    %v2203 = vunpack.c.l.b16 %v1834
    %v2204 = vunpack.c.h.b16 %v1834
    %v2205 = vunpack.c.l.b16 %v1835
    %v2206 = vunpack.c.h.b16 %v1835
    %v2207 = vunpack.c.l.b16 %v1836
    %v2208 = vunpack.c.h.b16 %v1836
    %v2209 = vunpack.c.l.b16 %v1837
    %v2210 = vunpack.c.h.b16 %v1837
    %v2211 = vunpack.c.l.b16 %v1838
    %v2212 = vunpack.c.h.b16 %v1838
    %v2213 = vunpack.c.l.b16 %v1839
    %v2214 = vunpack.c.h.b16 %v1839
    %v2215 = vunpack.c.l.b16 %v1840
    %v2216 = vunpack.c.h.b16 %v1840
    %v2217 = vunpack.c.l.b16 %v1841
    %v2218 = vunpack.c.h.b16 %v1841
    %v2219 = vunpack.c.l.b16 %v1842
    %v2220 = vunpack.c.h.b16 %v1842
    %v2221 = vunpack.c.l.b16 %v1843
    %v2222 = vunpack.c.h.b16 %v1843
    %v2223 = vunpack.c.l.b16 %v1844
    %v2224 = vunpack.c.h.b16 %v1844
    %v2225 = vunpack.c.l.b16 %v1845
    %v2226 = vunpack.c.h.b16 %v1845
    %v2227 = vunpack.c.l.b16 %v1846
    %v2228 = vunpack.c.h.b16 %v1846
    %v2229 = vunpack.c.l.b16 %v1847
    %v2230 = vunpack.c.h.b16 %v1847
    %v2231 = vunpack.c.l.b16 %v1848
    %v2232 = vunpack.c.h.b16 %v1848
    %v2233 = vunpack.c.l.b16 %v1849
    %v2234 = vunpack.c.h.b16 %v1849
    %v2235 = vunpack.c.l.b16 %v1850
    %v2236 = vunpack.c.h.b16 %v1850
    %v2237 = vunpack.c.l.b16 %v1851
    %v2238 = vunpack.c.h.b16 %v1851
    %v2239 = vunpack.c.l.b16 %v1852
    %v2240 = vunpack.c.h.b16 %v1852
    %v2241 = vunpack.c.l.b16 %v1853
    %v2242 = vunpack.c.h.b16 %v1853
    %v2243 = vunpack.c.l.b16 %v1854
    %v2244 = vunpack.c.h.b16 %v1854
    %v2245 = vunpack.c.l.b16 %v1855
    %v2246 = vunpack.c.h.b16 %v1855
    %v2247 = vunpack.c.l.b16 %v1856
    %v2248 = vunpack.c.h.b16 %v1856
    %v2249 = vunpack.c.l.b16 %v1857
    %v2250 = vunpack.c.h.b16 %v1857
    %v2251 = vunpack.c.l.b16 %v1858
    %v2252 = vunpack.c.h.b16 %v1858
    %v2253 = vunpack.c.l.b16 %v1859
    %v2254 = vunpack.c.h.b16 %v1859
    %v2255 = vunpack.c.l.b16 %v1860
    %v2256 = vunpack.c.h.b16 %v1860
    %v2257 = vunpack.c.l.b16 %v1861
    %v2258 = vunpack.c.h.b16 %v1861
    %v2259 = vunpack.c.l.b16 %v1862
    %v2260 = vunpack.c.h.b16 %v1862
    %v2261 = vunpack.c.l.b16 %v1863
    %v2262 = vunpack.c.h.b16 %v1863
    %v2263 = vunpack.c.l.b16 %v1864
    %v2264 = vunpack.c.h.b16 %v1864
    %v2265 = vunpack.c.l.b16 %v1865
    %v2266 = vunpack.c.h.b16 %v1865
    %v2267 = vunpack.c.l.b16 %v1866
    %v2268 = vunpack.c.h.b16 %v1866
    %v2269 = vunpack.c.l.b16 %v1867
    %v2270 = vunpack.c.h.b16 %v1867
    %v2271 = vunpack.c.l.b16 %v1868
    %v2272 = vunpack.c.h.b16 %v1868
    %v2273 = vunpack.c.l.b16 %v1869
    %v2274 = vunpack.c.h.b16 %v1869
    %v2275 = vunpack.c.l.b16 %v1870
    %v2276 = vunpack.c.h.b16 %v1870
    %v2277 = vunpack.c.l.b16 %v1871
    %v2278 = vunpack.c.h.b16 %v1871
    %v2279 = vunpack.c.l.b16 %v1872
    %v2280 = vunpack.c.h.b16 %v1872
    %v2281 = vunpack.c.l.b16 %v1873
    %v2282 = vunpack.c.h.b16 %v1873
    %v2283 = vunpack.c.l.b16 %v1874
    %v2284 = vunpack.c.h.b16 %v1874
    %v2285 = vunpack.c.l.b16 %v1875
    %v2286 = vunpack.c.h.b16 %v1875
    %v2287 = vunpack.c.l.b16 %v1876
    %v2288 = vunpack.c.h.b16 %v1876
    %v2289 = vunpack.c.l.b16 %v1877
    %v2290 = vunpack.c.h.b16 %v1877
    %v2291 = vunpack.c.l.b16 %v1878
    %v2292 = vunpack.c.h.b16 %v1878
    %v2293 = vunpack.c.l.b16 %v1879
    %v2294 = vunpack.c.h.b16 %v1879
    %v2295 = vunpack.c.l.b16 %v1880
    %v2296 = vunpack.c.h.b16 %v1880
    %v2297 = vunpack.c.l.b16 %v1881
    %v2298 = vunpack.c.h.b16 %v1881
    %v2299 = vunpack.c.l.b16 %v1882
    %v2300 = vunpack.c.h.b16 %v1882
    %v2301 = vunpack.c.l.b16 %v1883
    %v2302 = vunpack.c.h.b16 %v1883
    %v2303 = vunpack.c.l.b16 %v1884
    %v2304 = vunpack.c.h.b16 %v1884
    %v2305 = vunpack.c.l.b16 %v1885
    %v2306 = vunpack.c.h.b16 %v1885
    %v2307 = vunpack.c.l.b16 %v1886
    %v2308 = vunpack.c.h.b16 %v1886
    %v2309 = vunpack.c.l.b16 %v1887
    %v2310 = vunpack.c.h.b16 %v1887
    %v2311 = vunpack.c.l.b16 %v1888
    %v2312 = vunpack.c.h.b16 %v1888
    %v2313 = vunpack.c.l.b16 %v1889
    %v2314 = vunpack.c.h.b16 %v1889
    %v2315 = vunpack.c.l.b16 %v1890
    %v2316 = vunpack.c.h.b16 %v1890
    %v2317 = vunpack.c.l.b16 %v1891
    %v2318 = vunpack.c.h.b16 %v1891
    %v2319 = vunpack.c.l.b16 %v1892
    %v2320 = vunpack.c.h.b16 %v1892
    %v2321 = vunpack.c.l.b16 %v1893
    %v2322 = vunpack.c.h.b16 %v1893
    %v2323 = vunpack.c.l.b16 %v1894
    %v2324 = vunpack.c.h.b16 %v1894
    %v2325 = vunpack.c.l.b16 %v1895
    %v2326 = vunpack.c.h.b16 %v1895
    %v2327 = vunpack.c.l.b16 %v1896
    %v2328 = vunpack.c.h.b16 %v1896
    %v2329 = vunpack.c.l.b16 %v1897
    %v2330 = vunpack.c.h.b16 %v1897
    %v2331 = vunpack.c.l.b16 %v1898
    %v2332 = vunpack.c.h.b16 %v1898
    %v2333 = vunpack.c.l.b16 %v1899
    %v2334 = vunpack.c.h.b16 %v1899
    %v2335 = vunpack.c.l.b16 %v1900
    %v2336 = vunpack.c.h.b16 %v1900
    %v2337 = vunpack.c.l.b16 %v1901
    %v2338 = vunpack.c.h.b16 %v1901
    %v2339 = vunpack.c.l.b16 %v1902
    %v2340 = vunpack.c.h.b16 %v1902
    %v2341 = vunpack.c.l.b16 %v1903
    %v2342 = vunpack.c.h.b16 %v1903
    %v2343 = vunpack.c.l.b16 %v1904
    %v2344 = vunpack.c.h.b16 %v1904
    %v2345 = vunpack.c.l.b16 %v1905
    %v2346 = vunpack.c.h.b16 %v1905
    %v2347 = vunpack.c.l.b16 %v1906
    %v2348 = vunpack.c.h.b16 %v1906
    %v2349 = vunpack.c.l.b16 %v1907
    %v2350 = vunpack.c.h.b16 %v1907
    %v2351 = vunpack.c.l.b16 %v1908
    %v2352 = vunpack.c.h.b16 %v1908
    %v2353 = vunpack.c.l.b16 %v1909
    %v2354 = vunpack.c.h.b16 %v1909
    %v2355 = vunpack.c.l.b16 %v1910
    %v2356 = vunpack.c.h.b16 %v1910
    %v2357 = vunpack.c.l.b16 %v1911
    %v2358 = vunpack.c.h.b16 %v1911
    %v2359 = vunpack.c.l.b16 %v1912
    %v2360 = vunpack.c.h.b16 %v1912
    %v2361 = vunpack.c.l.b16 %v1913
    %v2362 = vunpack.c.h.b16 %v1913
    %v2363 = vunpack.c.l.b16 %v1914
    %v2364 = vunpack.c.h.b16 %v1914
    %v2365 = vunpack.c.l.b16 %v1915
    %v2366 = vunpack.c.h.b16 %v1915
    %v2367 = vunpack.c.l.b16 %v1916
    %v2368 = vunpack.c.h.b16 %v1916
    %v2369 = vunpack.c.l.b16 %v1917
    %v2370 = vunpack.c.h.b16 %v1917
    %v2371 = vunpack.c.l.b16 %v1918
    %v2372 = vunpack.c.h.b16 %v1918
    %v2373 = vunpack.c.l.b16 %v1919
    %v2374 = vunpack.c.h.b16 %v1919
    %v2375 = vunpack.c.l.b16 %v1920
    %v2376 = vunpack.c.h.b16 %v1920
    %v2377 = vunpack.c.l.b16 %v1921
    %v2378 = vunpack.c.h.b16 %v1921
    %v2379 = vunpack.c.l.b16 %v1922
    %v2380 = vunpack.c.h.b16 %v1922
    %v2381 = vunpack.c.l.b16 %v1923
    %v2382 = vunpack.c.h.b16 %v1923
    %v2383 = vunpack.c.l.b16 %v1924
    %v2384 = vunpack.c.h.b16 %v1924
    %v2385 = vunpack.c.l.b16 %v1925
    %v2386 = vunpack.c.h.b16 %v1925
    %v2387 = vunpack.c.l.b16 %v1926
    %v2388 = vunpack.c.h.b16 %v1926
    %v2389 = vunpack.c.l.b16 %v1927
    %v2390 = vunpack.c.h.b16 %v1927
    %v2391 = vunpack.c.l.b16 %v1928
    %v2392 = vunpack.c.h.b16 %v1928
    %v2393 = vpack.c.b16 %v2111, %v2105
    %v2394 = vpack.c.b16 %v2112, %v2106
    %v2395 = vpack.c.b16 %v2113, %v2107
    %v2396 = vpack.c.b16 %v2114, %v2108
    %v2397 = vpack.c.b16 %v2115, %v2109
    %v2398 = vpack.c.b16 %v2116, %v2110
    %v2399 = vpack.c.b16 %v2123, %v2117
    %v2400 = vpack.c.b16 %v2124, %v2118
    %v2401 = vpack.c.b16 %v2125, %v2119
    %v2402 = vpack.c.b16 %v2126, %v2120
    %v2403 = vpack.c.b16 %v2127, %v2121
    %v2404 = vpack.c.b16 %v2128, %v2122
    %v2405 = vpack.c.b16 %v2135, %v2129
    %v2406 = vpack.c.b16 %v2136, %v2130
    %v2407 = vpack.c.b16 %v2137, %v2131
    %v2408 = vpack.c.b16 %v2138, %v2132
    %v2409 = vpack.c.b16 %v2139, %v2133
    %v2410 = vpack.c.b16 %v2140, %v2134
    %v2411 = vpack.c.b16 %v2147, %v2141
    %v2412 = vpack.c.b16 %v2148, %v2142
    %v2413 = vpack.c.b16 %v2149, %v2143
    %v2414 = vpack.c.b16 %v2150, %v2144
    %v2415 = vpack.c.b16 %v2151, %v2145
    %v2416 = vpack.c.b16 %v2152, %v2146
    %v2417 = vpack.c.b16 %v2159, %v2153
    %v2418 = vpack.c.b16 %v2160, %v2154
    %v2419 = vpack.c.b16 %v2161, %v2155
    %v2420 = vpack.c.b16 %v2162, %v2156
    %v2421 = vpack.c.b16 %v2163, %v2157
    %v2422 = vpack.c.b16 %v2164, %v2158
    %v2423 = vpack.c.b16 %v2171, %v2165
    %v2424 = vpack.c.b16 %v2172, %v2166
    %v2425 = vpack.c.b16 %v2173, %v2167
    %v2426 = vpack.c.b16 %v2174, %v2168
    %v2427 = vpack.c.b16 %v2175, %v2169
    %v2428 = vpack.c.b16 %v2176, %v2170
    %v2429 = vpack.c.b16 %v2183, %v2177
    %v2430 = vpack.c.b16 %v2184, %v2178
    %v2431 = vpack.c.b16 %v2185, %v2179
    %v2432 = vpack.c.b16 %v2186, %v2180
    %v2433 = vpack.c.b16 %v2187, %v2181
    %v2434 = vpack.c.b16 %v2188, %v2182
    %v2435 = vpack.c.b16 %v2195, %v2189
    %v2436 = vpack.c.b16 %v2196, %v2190
    %v2437 = vpack.c.b16 %v2197, %v2191
    %v2438 = vpack.c.b16 %v2198, %v2192
    %v2439 = vpack.c.b16 %v2199, %v2193
    %v2440 = vpack.c.b16 %v2200, %v2194
    %v2441 = vpack.c.b16 %v2207, %v2201
    %v2442 = vpack.c.b16 %v2208, %v2202
    %v2443 = vpack.c.b16 %v2209, %v2203
    %v2444 = vpack.c.b16 %v2210, %v2204
    %v2445 = vpack.c.b16 %v2211, %v2205
    %v2446 = vpack.c.b16 %v2212, %v2206
    %v2447 = vpack.c.b16 %v2219, %v2213
    %v2448 = vpack.c.b16 %v2220, %v2214
    %v2449 = vpack.c.b16 %v2221, %v2215
    %v2450 = vpack.c.b16 %v2222, %v2216
    %v2451 = vpack.c.b16 %v2223, %v2217
    %v2452 = vpack.c.b16 %v2224, %v2218
    %v2453 = vpack.c.b16 %v2231, %v2225
    %v2454 = vpack.c.b16 %v2232, %v2226
    %v2455 = vpack.c.b16 %v2233, %v2227
    %v2456 = vpack.c.b16 %v2234, %v2228
    %v2457 = vpack.c.b16 %v2235, %v2229
    %v2458 = vpack.c.b16 %v2236, %v2230
    %v2459 = vpack.c.b16 %v2243, %v2237
    %v2460 = vpack.c.b16 %v2244, %v2238
    %v2461 = vpack.c.b16 %v2245, %v2239
    %v2462 = vpack.c.b16 %v2246, %v2240
    %v2463 = vpack.c.b16 %v2247, %v2241
    %v2464 = vpack.c.b16 %v2248, %v2242
    %v2465 = vpack.c.b16 %v2255, %v2249
    %v2466 = vpack.c.b16 %v2256, %v2250
    %v2467 = vpack.c.b16 %v2257, %v2251
    %v2468 = vpack.c.b16 %v2258, %v2252
    %v2469 = vpack.c.b16 %v2259, %v2253
    %v2470 = vpack.c.b16 %v2260, %v2254
    %v2471 = vpack.c.b16 %v2267, %v2261
    %v2472 = vpack.c.b16 %v2268, %v2262
    %v2473 = vpack.c.b16 %v2269, %v2263
    %v2474 = vpack.c.b16 %v2270, %v2264
    %v2475 = vpack.c.b16 %v2271, %v2265
    %v2476 = vpack.c.b16 %v2272, %v2266
    %v2477 = vpack.c.b16 %v2279, %v2273
    %v2478 = vpack.c.b16 %v2280, %v2274
    %v2479 = vpack.c.b16 %v2281, %v2275
    %v2480 = vpack.c.b16 %v2282, %v2276
    %v2481 = vpack.c.b16 %v2283, %v2277
    %v2482 = vpack.c.b16 %v2284, %v2278
    %v2483 = vpack.c.b16 %v2291, %v2285
    %v2484 = vpack.c.b16 %v2292, %v2286
    %v2485 = vpack.c.b16 %v2293, %v2287
    %v2486 = vpack.c.b16 %v2294, %v2288
    %v2487 = vpack.c.b16 %v2295, %v2289
    %v2488 = vpack.c.b16 %v2296, %v2290
    %v2489 = vpack.c.b16 %v2303, %v2297
    %v2490 = vpack.c.b16 %v2304, %v2298
    %v2491 = vpack.c.b16 %v2305, %v2299
    %v2492 = vpack.c.b16 %v2306, %v2300
    %v2493 = vpack.c.b16 %v2307, %v2301
    %v2494 = vpack.c.b16 %v2308, %v2302
    %v2495 = vpack.c.b16 %v2315, %v2309
    %v2496 = vpack.c.b16 %v2316, %v2310
    %v2497 = vpack.c.b16 %v2317, %v2311
    %v2498 = vpack.c.b16 %v2318, %v2312
    %v2499 = vpack.c.b16 %v2319, %v2313
    %v2500 = vpack.c.b16 %v2320, %v2314
    %v2501 = vpack.c.b16 %v2327, %v2321
    %v2502 = vpack.c.b16 %v2328, %v2322
    %v2503 = vpack.c.b16 %v2329, %v2323
    %v2504 = vpack.c.b16 %v2330, %v2324
    %v2505 = vpack.c.b16 %v2331, %v2325
    %v2506 = vpack.c.b16 %v2332, %v2326
    %v2507 = vpack.c.b16 %v2339, %v2333
    %v2508 = vpack.c.b16 %v2340, %v2334
    %v2509 = vpack.c.b16 %v2341, %v2335
    %v2510 = vpack.c.b16 %v2342, %v2336
    %v2511 = vpack.c.b16 %v2343, %v2337
    %v2512 = vpack.c.b16 %v2344, %v2338
    %v2513 = vpack.c.b16 %v2351, %v2345
    %v2514 = vpack.c.b16 %v2352, %v2346
    %v2515 = vpack.c.b16 %v2353, %v2347
    %v2516 = vpack.c.b16 %v2354, %v2348
    %v2517 = vpack.c.b16 %v2355, %v2349
    %v2518 = vpack.c.b16 %v2356, %v2350
    %v2519 = vpack.c.b16 %v2363, %v2357
    %v2520 = vpack.c.b16 %v2364, %v2358
    %v2521 = vpack.c.b16 %v2365, %v2359
    %v2522 = vpack.c.b16 %v2366, %v2360
    %v2523 = vpack.c.b16 %v2367, %v2361
    %v2524 = vpack.c.b16 %v2368, %v2362
    %v2525 = vpack.c.b16 %v2375, %v2369
    %v2526 = vpack.c.b16 %v2376, %v2370
    %v2527 = vpack.c.b16 %v2377, %v2371
    %v2528 = vpack.c.b16 %v2378, %v2372
    %v2529 = vpack.c.b16 %v2379, %v2373
    %v2530 = vpack.c.b16 %v2380, %v2374
    %v2531 = vpack.c.b16 %v2387, %v2381
    %v2532 = vpack.c.b16 %v2388, %v2382
    %v2533 = vpack.c.b16 %v2389, %v2383
    %v2534 = vpack.c.b16 %v2390, %v2384
    %v2535 = vpack.c.b16 %v2391, %v2385
    %v2536 = vpack.c.b16 %v2392, %v2386
    %2681 = vmatprep.subr.bf16.mxu0 %v2436
    %2682 = vmatpush1.bf16.msra.mxu0 %v2435
    %2683 = vmatprep.subr.bf16.mxu0 %v2430
    %2684 = vmatpush1.bf16.msra.mxu0 %v2429
    %2685 = vmatprep.subr.bf16.mxu0 %v2424
    %2686 = vmatpush1.bf16.msra.mxu0 %v2423
    %2687 = vmatprep.subr.bf16.mxu0 %v2418
    %2688 = vmatpush1.bf16.msra.mxu0 %v2417
    %2689 = vmatprep.subr.bf16.mxu0 %v2412
    %2690 = vmatpush1.bf16.msra.mxu0 %v2411
    %2691 = vmatprep.subr.bf16.mxu0 %v2406
    %2692 = vmatpush1.bf16.msra.mxu0 %v2405
    %2693 = vmatprep.subr.bf16.mxu0 %v2400
    %2694 = vmatpush1.bf16.msra.mxu0 %v2399
    %2695 = vmatprep.subr.bf16.mxu0 %v2394
    %2696 = vmatpush1.bf16.msra.mxu0 %v2393
    %2697 = vmatprep.subr.bf16.mxu0 %v2484
    %2698 = vmatpush2.bf16.msra.mxu0 %v2483
    %2699 = vmatprep.subr.bf16.mxu0 %v2478
    %2700 = vmatpush2.bf16.msra.mxu0 %v2477
    %2701 = vmatprep.subr.bf16.mxu0 %v2472
    %2702 = vmatpush2.bf16.msra.mxu0 %v2471
    %2703 = vmatprep.subr.bf16.mxu0 %v2466
    %2704 = vmatpush2.bf16.msra.mxu0 %v2465
    %2705 = vmatprep.subr.bf16.mxu0 %v2460
    %2706 = vmatpush2.bf16.msra.mxu0 %v2459
    %2707 = vmatprep.subr.bf16.mxu0 %v2454
    %2708 = vmatpush2.bf16.msra.mxu0 %v2453
    %2709 = vmatprep.subr.bf16.mxu0 %v2448
    %2710 = vmatpush2.bf16.msra.mxu0 %v2447
    %2711 = vmatprep.subr.bf16.mxu0 %v2442
    %2712 = vmatpush2.bf16.msra.mxu0 %v2441
    %2713 = vmatprep.mubr.bf16.mxu0 %v1783
    %2714 = vmatmul.mubr.bf16.gmra.mxu0 %v1782
    %v2715 = vpop.f32.mrf.mxu0
    %v2716 = vadd.f32 %v1934, %v2715
    %v2717 = vpop.f32.mrf.mxu0
    %v2718 = vadd.f32 %v1938, %v2717
    %v2719 = vpop.f32.mrf.mxu0
    %v2720 = vpop.f32.mrf.mxu0
    %2721 = vdwg.mxu0
    %2722 = vmatprep.subr.bf16.mxu0 %v2532
    %2723 = vmatpush1.bf16.msra.mxu0 %v2531
    %2724 = vmatprep.subr.bf16.mxu0 %v2526
    %2725 = vmatpush1.bf16.msra.mxu0 %v2525
    %2726 = vmatprep.subr.bf16.mxu0 %v2520
    %2727 = vmatpush1.bf16.msra.mxu0 %v2519
    %2728 = vmatprep.subr.bf16.mxu0 %v2514
    %2729 = vmatpush1.bf16.msra.mxu0 %v2513
    %2730 = vmatprep.subr.bf16.mxu0 %v2508
    %2731 = vmatpush1.bf16.msra.mxu0 %v2507
    %2732 = vmatprep.subr.bf16.mxu0 %v2502
    %2733 = vmatpush1.bf16.msra.mxu0 %v2501
    %2734 = vmatprep.subr.bf16.mxu0 %v2496
    %2735 = vmatpush1.bf16.msra.mxu0 %v2495
    %2736 = vmatprep.subr.bf16.mxu0 %v2490
    %2737 = vmatpush1.bf16.msra.mxu0 %v2489
    %2738 = vmatprep.subr.bf16.mxu0 0
    %2739 = vmatpush2.bf16.msra.mxu0 0
    %2740 = vmatprep.subr.bf16.mxu0 0
    %2741 = vmatpush2.bf16.msra.mxu0 0
    %2742 = vmatprep.subr.bf16.mxu0 0
    %2743 = vmatpush2.bf16.msra.mxu0 0
    %2744 = vmatprep.subr.bf16.mxu0 0
    %2745 = vmatpush2.bf16.msra.mxu0 0
    %2746 = vmatprep.subr.bf16.mxu0 0
    %2747 = vmatpush2.bf16.msra.mxu0 0
    %2748 = vmatprep.subr.bf16.mxu0 0
    %2749 = vmatpush2.bf16.msra.mxu0 0
    %2750 = vmatprep.subr.bf16.mxu0 0
    %2751 = vmatpush2.bf16.msra.mxu0 0
    %2752 = vmatprep.subr.bf16.mxu0 0
    %2753 = vmatpush2.bf16.msra.mxu0 0
    %2754 = vmatprep.mubr.bf16.mxu0 0
    %2755 = vmatmul.mubr.bf16.gmra.mxu0 %v1784
    %v2756 = vpop.f32.mrf.mxu0
    %v2757 = vadd.f32 %v2716, %v2756
    %v2758 = vpop.f32.mrf.mxu0
    %v2759 = vadd.f32 %v2718, %v2758
    %v2760 = vpop.f32.mrf.mxu0
    %v2761 = vpop.f32.mrf.mxu0
    %2762 = vdwg.mxu0
    %2763 = vmatprep.subr.bf16.mxu0 %v2438
    %2764 = vmatpush1.bf16.msra.mxu0 %v2437
    %2765 = vmatprep.subr.bf16.mxu0 %v2432
    %2766 = vmatpush1.bf16.msra.mxu0 %v2431
    %2767 = vmatprep.subr.bf16.mxu0 %v2426
    %2768 = vmatpush1.bf16.msra.mxu0 %v2425
    %2769 = vmatprep.subr.bf16.mxu0 %v2420
    %2770 = vmatpush1.bf16.msra.mxu0 %v2419
    %2771 = vmatprep.subr.bf16.mxu0 %v2414
    %2772 = vmatpush1.bf16.msra.mxu0 %v2413
    %2773 = vmatprep.subr.bf16.mxu0 %v2408
    %2774 = vmatpush1.bf16.msra.mxu0 %v2407
    %2775 = vmatprep.subr.bf16.mxu0 %v2402
    %2776 = vmatpush1.bf16.msra.mxu0 %v2401
    %2777 = vmatprep.subr.bf16.mxu0 %v2396
    %2778 = vmatpush1.bf16.msra.mxu0 %v2395
    %2779 = vmatprep.subr.bf16.mxu0 %v2486
    %2780 = vmatpush2.bf16.msra.mxu0 %v2485
    %2781 = vmatprep.subr.bf16.mxu0 %v2480
    %2782 = vmatpush2.bf16.msra.mxu0 %v2479
    %2783 = vmatprep.subr.bf16.mxu0 %v2474
    %2784 = vmatpush2.bf16.msra.mxu0 %v2473
    %2785 = vmatprep.subr.bf16.mxu0 %v2468
    %2786 = vmatpush2.bf16.msra.mxu0 %v2467
    %2787 = vmatprep.subr.bf16.mxu0 %v2462
    %2788 = vmatpush2.bf16.msra.mxu0 %v2461
    %2789 = vmatprep.subr.bf16.mxu0 %v2456
    %2790 = vmatpush2.bf16.msra.mxu0 %v2455
    %2791 = vmatprep.subr.bf16.mxu0 %v2450
    %2792 = vmatpush2.bf16.msra.mxu0 %v2449
    %2793 = vmatprep.subr.bf16.mxu0 %v2444
    %2794 = vmatpush2.bf16.msra.mxu0 %v2443
    %2795 = vmatprep.mubr.bf16.mxu0 %v1783
    %2796 = vmatmul.mubr.bf16.gmra.mxu0 %v1782
    %v2797 = vpop.f32.mrf.mxu0
    %v2798 = vadd.f32 %v1942, %v2797
    %v2799 = vpop.f32.mrf.mxu0
    %v2800 = vadd.f32 %v1946, %v2799
    %v2801 = vpop.f32.mrf.mxu0
    %v2802 = vpop.f32.mrf.mxu0
    %2803 = vdwg.mxu0
    %2804 = vmatprep.subr.bf16.mxu0 %v2534
    %2805 = vmatpush1.bf16.msra.mxu0 %v2533
    %2806 = vmatprep.subr.bf16.mxu0 %v2528
    %2807 = vmatpush1.bf16.msra.mxu0 %v2527
    %2808 = vmatprep.subr.bf16.mxu0 %v2522
    %2809 = vmatpush1.bf16.msra.mxu0 %v2521
    %2810 = vmatprep.subr.bf16.mxu0 %v2516
    %2811 = vmatpush1.bf16.msra.mxu0 %v2515
    %2812 = vmatprep.subr.bf16.mxu0 %v2510
    %2813 = vmatpush1.bf16.msra.mxu0 %v2509
    %2814 = vmatprep.subr.bf16.mxu0 %v2504
    %2815 = vmatpush1.bf16.msra.mxu0 %v2503
    %2816 = vmatprep.subr.bf16.mxu0 %v2498
    %2817 = vmatpush1.bf16.msra.mxu0 %v2497
    %2818 = vmatprep.subr.bf16.mxu0 %v2492
    %2819 = vmatpush1.bf16.msra.mxu0 %v2491
    %2820 = vmatprep.subr.bf16.mxu0 0
    %2821 = vmatpush2.bf16.msra.mxu0 0
    %2822 = vmatprep.subr.bf16.mxu0 0
    %2823 = vmatpush2.bf16.msra.mxu0 0
    %2824 = vmatprep.subr.bf16.mxu0 0
    %2825 = vmatpush2.bf16.msra.mxu0 0
    %2826 = vmatprep.subr.bf16.mxu0 0
    %2827 = vmatpush2.bf16.msra.mxu0 0
    %2828 = vmatprep.subr.bf16.mxu0 0
    %2829 = vmatpush2.bf16.msra.mxu0 0
    %2830 = vmatprep.subr.bf16.mxu0 0
    %2831 = vmatpush2.bf16.msra.mxu0 0
    %2832 = vmatprep.subr.bf16.mxu0 0
    %2833 = vmatpush2.bf16.msra.mxu0 0
    %2834 = vmatprep.subr.bf16.mxu0 0
    %2835 = vmatpush2.bf16.msra.mxu0 0
    %2836 = vmatprep.mubr.bf16.mxu0 0
    %2837 = vmatmul.mubr.bf16.gmra.mxu0 %v1784
    %v2838 = vpop.f32.mrf.mxu0
    %v2839 = vadd.f32 %v2798, %v2838
    %v2840 = vpop.f32.mrf.mxu0
    %v2841 = vadd.f32 %v2800, %v2840
    %v2842 = vpop.f32.mrf.mxu0
    %v2843 = vpop.f32.mrf.mxu0
    %2844 = vdwg.mxu0
    %2845 = vmatprep.subr.bf16.mxu0 %v2440
    %2846 = vmatpush1.bf16.msra.mxu0 %v2439
    %2847 = vmatprep.subr.bf16.mxu0 %v2434
    %2848 = vmatpush1.bf16.msra.mxu0 %v2433
    %2849 = vmatprep.subr.bf16.mxu0 %v2428
    %2850 = vmatpush1.bf16.msra.mxu0 %v2427
    %2851 = vmatprep.subr.bf16.mxu0 %v2422
    %2852 = vmatpush1.bf16.msra.mxu0 %v2421
    %2853 = vmatprep.subr.bf16.mxu0 %v2416
    %2854 = vmatpush1.bf16.msra.mxu0 %v2415
    %2855 = vmatprep.subr.bf16.mxu0 %v2410
    %2856 = vmatpush1.bf16.msra.mxu0 %v2409
    %2857 = vmatprep.subr.bf16.mxu0 %v2404
    %2858 = vmatpush1.bf16.msra.mxu0 %v2403
    %2859 = vmatprep.subr.bf16.mxu0 %v2398
    %2860 = vmatpush1.bf16.msra.mxu0 %v2397
    %2861 = vmatprep.subr.bf16.mxu0 %v2488
    %2862 = vmatpush2.bf16.msra.mxu0 %v2487
    %2863 = vmatprep.subr.bf16.mxu0 %v2482
    %2864 = vmatpush2.bf16.msra.mxu0 %v2481
    %2865 = vmatprep.subr.bf16.mxu0 %v2476
    %2866 = vmatpush2.bf16.msra.mxu0 %v2475
    %2867 = vmatprep.subr.bf16.mxu0 %v2470
    %2868 = vmatpush2.bf16.msra.mxu0 %v2469
    %2869 = vmatprep.subr.bf16.mxu0 %v2464
    %2870 = vmatpush2.bf16.msra.mxu0 %v2463
    %2871 = vmatprep.subr.bf16.mxu0 %v2458
    %2872 = vmatpush2.bf16.msra.mxu0 %v2457
    %2873 = vmatprep.subr.bf16.mxu0 %v2452
    %2874 = vmatpush2.bf16.msra.mxu0 %v2451
    %2875 = vmatprep.subr.bf16.mxu0 %v2446
    %2876 = vmatpush2.bf16.msra.mxu0 %v2445
    %2877 = vmatprep.mubr.bf16.mxu0 %v1783
    %2878 = vmatmul.mubr.bf16.gmra.mxu0 %v1782
    %v2879 = vpop.f32.mrf.mxu0
    %v2880 = vadd.f32 %v1950, %v2879
    %v2881 = vpop.f32.mrf.mxu0
    %v2882 = vadd.f32 %v1954, %v2881
    %v2883 = vpop.f32.mrf.mxu0
    %v2884 = vpop.f32.mrf.mxu0
    %2885 = vdwg.mxu0
    %2886 = vmatprep.subr.bf16.mxu0 %v2536
    %2887 = vmatpush1.bf16.msra.mxu0 %v2535
    %2888 = vmatprep.subr.bf16.mxu0 %v2530
    %2889 = vmatpush1.bf16.msra.mxu0 %v2529
    %2890 = vmatprep.subr.bf16.mxu0 %v2524
    %2891 = vmatpush1.bf16.msra.mxu0 %v2523
    %2892 = vmatprep.subr.bf16.mxu0 %v2518
    %2893 = vmatpush1.bf16.msra.mxu0 %v2517
    %2894 = vmatprep.subr.bf16.mxu0 %v2512
    %2895 = vmatpush1.bf16.msra.mxu0 %v2511
    %2896 = vmatprep.subr.bf16.mxu0 %v2506
    %2897 = vmatpush1.bf16.msra.mxu0 %v2505
    %2898 = vmatprep.subr.bf16.mxu0 %v2500
    %2899 = vmatpush1.bf16.msra.mxu0 %v2499
    %2900 = vmatprep.subr.bf16.mxu0 %v2494
    %2901 = vmatpush1.bf16.msra.mxu0 %v2493
    %2902 = vmatprep.subr.bf16.mxu0 0
    %2903 = vmatpush2.bf16.msra.mxu0 0
    %2904 = vmatprep.subr.bf16.mxu0 0
    %2905 = vmatpush2.bf16.msra.mxu0 0
    %2906 = vmatprep.subr.bf16.mxu0 0
    %2907 = vmatpush2.bf16.msra.mxu0 0
    %2908 = vmatprep.subr.bf16.mxu0 0
    %2909 = vmatpush2.bf16.msra.mxu0 0
    %2910 = vmatprep.subr.bf16.mxu0 0
    %2911 = vmatpush2.bf16.msra.mxu0 0
    %2912 = vmatprep.subr.bf16.mxu0 0
    %2913 = vmatpush2.bf16.msra.mxu0 0
    %2914 = vmatprep.subr.bf16.mxu0 0
    %2915 = vmatpush2.bf16.msra.mxu0 0
    %2916 = vmatprep.subr.bf16.mxu0 0
    %2917 = vmatpush2.bf16.msra.mxu0 0
    %2918 = vmatprep.mubr.bf16.mxu0 0
    %2919 = vmatmul.mubr.bf16.gmra.mxu0 %v1784
    %v2920 = vpop.f32.mrf.mxu0
    %v2921 = vadd.f32 %v2880, %v2920
    %v2922 = vpop.f32.mrf.mxu0
    %v2923 = vadd.f32 %v2882, %v2922
    %v2924 = vpop.f32.mrf.mxu0
    %v2925 = vpop.f32.mrf.mxu0
    %2926 = vdwg.mxu0
    %v2927 = vmul.f32 %v2759, 1.442695
    %v2928 = vpow.pop %v2927
    %v2929 = vmul.f32 %v2841, 1.442695
    %v2930 = vpow.pop %v2929
    %v2931 = vmul.f32 %v2923, 1.442695
    %v2932 = vpow.pop %v2931
    %v2933 = vadd.f32 %v2928, 2e-08
    %v2934 = vrcp.pop %v2933
    %v2935 = vadd.f32 %v2930, 2e-08
    %v2936 = vrcp.pop %v2935
    %v2937 = vadd.f32 %v2932, 2e-08
    %v2938 = vrcp.pop %v2937
    %v2939 = vadd.f32 %v2934, 0.0
    %v2940 = vadd.f32 %v2939, %v2936
    %v2941 = vrcp.pop %v2940
    %v2942 = vmul.f32 %v2757, %v2934
    %v2943 = vadd.f32 %v2942, 0.0
    %v2944 = vmul.f32 %v2839, %v2936
    %v2945 = vadd.f32 %v2943, %v2944
    %v2946 = vmul.f32 %v2945, %v2941
    %v2947 = vadd.f32 %v2941, 1e-08
    %v2948 = vlog2.pop %v2947
    %v2949 = vmul.f32 %v2948, 0.6931472
    %v2950 = vadd.f32 %v2936, 0.0
    %v2951 = vadd.f32 %v2950, %v2938
    %v2952 = vrcp.pop %v2951
    %v2953 = vadd.f32 %v2944, 0.0
    %v2954 = vmul.f32 %v2921, %v2938
    %v2955 = vadd.f32 %v2953, %v2954
    %v2956 = vmul.f32 %v2955, %v2952
    %v2957 = vadd.f32 %v2952, 1e-08
    %v2958 = vlog2.pop %v2957
    %v2959 = vmul.f32 %v2958, 0.6931472
    %v2960 = vadd.f32 %v2938, 0.0
    %v2961 = vadd.f32 %v2960, %v2934
    %v2962 = vrcp.pop %v2961
    %v2963 = vadd.f32 %v2954, 0.0
    %v2964 = vadd.f32 %v2963, %v2942
    %v2965 = vmul.f32 %v2964, %v2962
    %v2966 = vadd.f32 %v2962, 1e-08
    %v2967 = vlog2.pop %v2966
    %v2968 = vmul.f32 %v2967, 0.6931472
    %v2969 = vadd.f32 %v2940, %v2938
    %v2970 = vrcp.pop %v2969
    %v2971 = vadd.f32 %v2945, %v2954
    %v2972 = vmul.f32 %v2971, %v2970
    %v2973 = vadd.f32 %v2970, 1e-08
    %v2974 = vlog2.pop %v2973
    %v2975 = vmul.f32 %v2974, 0.6931472
    %v2976 = vlaneseq
    %v2977 = vand.u32 %v2976, 127
    %vm2978 = vcmp.lt.s32.totalorder %v2977, 4
    %vm2979 = vcmp.lt.s32.totalorder %v2977, 8
    %vm2980 = vcmp.lt.s32.totalorder %v2977, 12
    %vm2981 = vcmp.lt.s32.totalorder %v2977, 16
    %vm2982 = vcmp.lt.s32.totalorder %v2977, 20
    %vm2983 = vcmp.lt.s32.totalorder %v2977, 24
    %v2984 = vsel %vm2983, %v2965, %v2972
    %v2985 = vsel %vm2982, %v2956, %v2984
    %v2986 = vsel %vm2981, %v2946, %v2985
    %v2987 = vsel %vm2980, %v2921, %v2986
    %v2988 = vsel %vm2979, %v2839, %v2987
    %v2989 = vsel %vm2978, %v2757, %v2988
    %2990 = vst [vmem:[#allocation17] sm:$0xff] %v2989
    %v2991 = vsel %vm2983, %v2968, %v2975
    %v2992 = vsel %vm2982, %v2959, %v2991
    %v2993 = vsel %vm2981, %v2949, %v2992
    %v2994 = vsel %vm2980, %v2923, %v2993
    %v2995 = vsel %vm2979, %v2841, %v2994
    %v2996 = vsel %vm2978, %v2759, %v2995
    %2997 = vst [vmem:[#allocation19] sm:$0xff] %v2996
    %v2998 = vld [vmem:[#allocation5] sm:$0xff]
    %v2999 = vld [vmem:[#allocation5 + $0x8] sm:$0xff]
    %v3000 = vld [vmem:[#allocation5 + $0x10] sm:$0xff]
    %v3001 = vrsqrt.pop %v2928
    %v3002 = vmul.f32 %v2928, %v3001
    %vm3003 = vcmp.eq.f32.partialorder %v2928, inf
    %v3004 = vsel %vm3003, %v2928, %v3002
    %vm3005 = vcmp.eq.f32.partialorder %v2928, 0.0
    %v3006 = vand.u32 %v2928, 2147483648
    %v3007 = vsel %vm3005, %v3006, %v3004
    %v3008 = vmul.f32 %v2998, %v3007
    %v3009 = vadd.f32 %v2757, %v3008
    %v3010 = vrsqrt.pop %v2930
    %v3011 = vmul.f32 %v2930, %v3010
    %vm3012 = vcmp.eq.f32.partialorder %v2930, inf
    %v3013 = vsel %vm3012, %v2930, %v3011
    %vm3014 = vcmp.eq.f32.partialorder %v2930, 0.0
    %v3015 = vand.u32 %v2930, 2147483648
    %v3016 = vsel %vm3014, %v3015, %v3013
    %v3017 = vmul.f32 %v2999, %v3016
    %v3018 = vadd.f32 %v2839, %v3017
    %v3019 = vrsqrt.pop %v2932
    %v3020 = vmul.f32 %v2932, %v3019
    %vm3021 = vcmp.eq.f32.partialorder %v2932, inf
    %v3022 = vsel %vm3021, %v2932, %v3020
    %vm3023 = vcmp.eq.f32.partialorder %v2932, 0.0
    %v3024 = vand.u32 %v2932, 2147483648
    %v3025 = vsel %vm3023, %v3024, %v3022
    %v3026 = vmul.f32 %v3000, %v3025
    %v3027 = vadd.f32 %v2921, %v3026
    %v3028 = vpack.c.bf16 %v3009, %v3009
    %v3029 = vpack.c.bf16 %v3018, %v3018
    %v3030 = vpack.c.bf16 %v3027, %v3027
    %v3031 = vld [vmem:[#allocation11] sm:$0xff]
    %v3032 = vld [vmem:[#allocation11 + $0x8] sm:$0xf]
    %v3033 = vld [vmem:[#allocation11 + $0xc] sm:$0xff]
    %v3034 = vld [vmem:[#allocation11 + $0x14] sm:$0xf]
    %v3035 = vld [vmem:[#allocation11 + $0x18] sm:$0xff]
    %v3036 = vld [vmem:[#allocation11 + $0x20] sm:$0xf]
    %v3037 = vld [vmem:[#allocation11 + $0x24] sm:$0xff]
    %v3038 = vld [vmem:[#allocation11 + $0x2c] sm:$0xf]
    %v3039 = vld [vmem:[#allocation11 + $0x30] sm:$0xff]
    %v3040 = vld [vmem:[#allocation11 + $0x38] sm:$0xf]
    %v3041 = vld [vmem:[#allocation11 + $0x3c] sm:$0xff]
    %v3042 = vld [vmem:[#allocation11 + $0x44] sm:$0xf]
    %v3043 = vld [vmem:[#allocation11 + $0x48] sm:$0xff]
    %v3044 = vld [vmem:[#allocation11 + $0x50] sm:$0xf]
    %v3045 = vld [vmem:[#allocation11 + $0x54] sm:$0xff]
    %v3046 = vld [vmem:[#allocation11 + $0x5c] sm:$0xf]
    %v3047 = vld [vmem:[#allocation11 + $0x60] sm:$0xff]
    %v3048 = vld [vmem:[#allocation11 + $0x68] sm:$0xf]
    %v3049 = vld [vmem:[#allocation11 + $0x6c] sm:$0xff]
    %v3050 = vld [vmem:[#allocation11 + $0x74] sm:$0xf]
    %v3051 = vld [vmem:[#allocation11 + $0x78] sm:$0xff]
    %v3052 = vld [vmem:[#allocation11 + $0x80] sm:$0xf]
    %v3053 = vld [vmem:[#allocation11 + $0x84] sm:$0xff]
    %v3054 = vld [vmem:[#allocation11 + $0x8c] sm:$0xf]
    %v3055 = vld [vmem:[#allocation11 + $0x90] sm:$0xff]
    %v3056 = vld [vmem:[#allocation11 + $0x98] sm:$0xf]
    %v3057 = vld [vmem:[#allocation11 + $0x9c] sm:$0xff]
    %v3058 = vld [vmem:[#allocation11 + $0xa4] sm:$0xf]
    %v3059 = vld [vmem:[#allocation11 + $0xa8] sm:$0xff]
    %v3060 = vld [vmem:[#allocation11 + $0xb0] sm:$0xf]
    %v3061 = vld [vmem:[#allocation11 + $0xb4] sm:$0xff]
    %v3062 = vld [vmem:[#allocation11 + $0xbc] sm:$0xf]
    %v3063 = vld [vmem:[#allocation11 + $0xc0] sm:$0xff]
    %v3064 = vld [vmem:[#allocation11 + $0xc8] sm:$0xf]
    %v3065 = vld [vmem:[#allocation11 + $0xcc] sm:$0xff]
    %v3066 = vld [vmem:[#allocation11 + $0xd4] sm:$0xf]
    %v3067 = vld [vmem:[#allocation11 + $0xd8] sm:$0xff]
    %v3068 = vld [vmem:[#allocation11 + $0xe0] sm:$0xf]
    %v3069 = vld [vmem:[#allocation11 + $0xe4] sm:$0xff]
    %v3070 = vld [vmem:[#allocation11 + $0xec] sm:$0xf]
    %v3071 = vld [vmem:[#allocation11 + $0xf0] sm:$0xff]
    %v3072 = vld [vmem:[#allocation11 + $0xf8] sm:$0xf]
    %v3073 = vld [vmem:[#allocation11 + $0xfc] sm:$0xff]
    %v3074 = vld [vmem:[#allocation11 + $0x104] sm:$0xf]
    %v3075 = vld [vmem:[#allocation11 + $0x108] sm:$0xff]
    %v3076 = vld [vmem:[#allocation11 + $0x110] sm:$0xf]
    %v3077 = vld [vmem:[#allocation11 + $0x114] sm:$0xff]
    %v3078 = vld [vmem:[#allocation11 + $0x11c] sm:$0xf]
    %v3079 = vld [vmem:[#allocation11 + $0x120] sm:$0xff]
    %v3080 = vld [vmem:[#allocation11 + $0x128] sm:$0xf]
    %v3081 = vld [vmem:[#allocation11 + $0x12c] sm:$0xff]
    %v3082 = vld [vmem:[#allocation11 + $0x134] sm:$0xf]
    %v3083 = vld [vmem:[#allocation11 + $0x138] sm:$0xff]
    %v3084 = vld [vmem:[#allocation11 + $0x140] sm:$0xf]
    %v3085 = vld [vmem:[#allocation11 + $0x144] sm:$0xff]
    %v3086 = vld [vmem:[#allocation11 + $0x14c] sm:$0xf]
    %v3087 = vld [vmem:[#allocation11 + $0x150] sm:$0xff]
    %v3088 = vld [vmem:[#allocation11 + $0x158] sm:$0xf]
    %v3089 = vld [vmem:[#allocation11 + $0x15c] sm:$0xff]
    %v3090 = vld [vmem:[#allocation11 + $0x164] sm:$0xf]
    %v3091 = vld [vmem:[#allocation11 + $0x168] sm:$0xff]
    %v3092 = vld [vmem:[#allocation11 + $0x170] sm:$0xf]
    %v3093 = vld [vmem:[#allocation11 + $0x174] sm:$0xff]
    %v3094 = vld [vmem:[#allocation11 + $0x17c] sm:$0xf]
    %v3095 = vld [vmem:[#allocation11 + $0x180] sm:$0xff]
    %v3096 = vld [vmem:[#allocation11 + $0x188] sm:$0xf]
    %v3097 = vld [vmem:[#allocation11 + $0x18c] sm:$0xff]
    %v3098 = vld [vmem:[#allocation11 + $0x194] sm:$0xf]
    %v3099 = vld [vmem:[#allocation11 + $0x198] sm:$0xff]
    %v3100 = vld [vmem:[#allocation11 + $0x1a0] sm:$0xf]
    %v3101 = vld [vmem:[#allocation11 + $0x1a4] sm:$0xff]
    %v3102 = vld [vmem:[#allocation11 + $0x1ac] sm:$0xf]
    %v3103 = vld [vmem:[#allocation11 + $0x1b0] sm:$0xff]
    %v3104 = vld [vmem:[#allocation11 + $0x1b8] sm:$0xf]
    %v3105 = vld [vmem:[#allocation11 + $0x1bc] sm:$0xff]
    %v3106 = vld [vmem:[#allocation11 + $0x1c4] sm:$0xf]
    %v3107 = vld [vmem:[#allocation11 + $0x1c8] sm:$0xff]
    %v3108 = vld [vmem:[#allocation11 + $0x1d0] sm:$0xf]
    %v3109 = vld [vmem:[#allocation11 + $0x1d4] sm:$0xff]
    %v3110 = vld [vmem:[#allocation11 + $0x1dc] sm:$0xf]
    %v3111 = vld [vmem:[#allocation11 + $0x1e0] sm:$0xff]
    %v3112 = vld [vmem:[#allocation11 + $0x1e8] sm:$0xf]
    %v3113 = vld [vmem:[#allocation11 + $0x1ec] sm:$0xff]
    %v3114 = vld [vmem:[#allocation11 + $0x1f4] sm:$0xf]
    %v3115 = vld [vmem:[#allocation11 + $0x1f8] sm:$0xff]
    %v3116 = vld [vmem:[#allocation11 + $0x200] sm:$0xf]
    %v3117 = vld [vmem:[#allocation11 + $0x204] sm:$0xff]
    %v3118 = vld [vmem:[#allocation11 + $0x20c] sm:$0xf]
    %v3119 = vld [vmem:[#allocation11 + $0x210] sm:$0xff]
    %v3120 = vld [vmem:[#allocation11 + $0x218] sm:$0xf]
    %v3121 = vld [vmem:[#allocation11 + $0x21c] sm:$0xff]
    %v3122 = vld [vmem:[#allocation11 + $0x224] sm:$0xf]
    %v3123 = vld [vmem:[#allocation11 + $0x228] sm:$0xff]
    %v3124 = vld [vmem:[#allocation11 + $0x230] sm:$0xf]
    %v3125 = vld [vmem:[#allocation11 + $0x234] sm:$0xff]
    %v3126 = vld [vmem:[#allocation11 + $0x23c] sm:$0xf]
    %v3127 = vld [vmem:[#allocation13] sm:$0x7]
    %v3129 = vlaneseq
    %v3130 = vshrl.u32 %v3129, 7
    %v3131 = vsub.s32 0, %v3130
    %v3132 = vrot.slane %v3127, %v3131
    %v3133 = vlaneseq
    %v3134 = vshrl.u32 %v3133, 7
    %v3135 = vsub.s32 1, %v3134
    %v3136 = vrot.slane %v3127, %v3135
    %v3137 = vlaneseq
    %v3138 = vshrl.u32 %v3137, 7
    %v3139 = vsub.s32 2, %v3138
    %v3140 = vrot.slane %v3127, %v3139
    %v3240 = vunpack.c.l.b16 %v3031
    %v3241 = vunpack.c.h.b16 %v3031
    %v3242 = vunpack.c.l.b16 %v3032
    %v3243 = vunpack.c.l.b16 %v3033
    %v3244 = vunpack.c.h.b16 %v3033
    %v3245 = vunpack.c.l.b16 %v3034
    %v3246 = vunpack.c.l.b16 %v3035
    %v3247 = vunpack.c.h.b16 %v3035
    %v3248 = vunpack.c.l.b16 %v3036
    %v3249 = vunpack.c.l.b16 %v3037
    %v3250 = vunpack.c.h.b16 %v3037
    %v3251 = vunpack.c.l.b16 %v3038
    %v3252 = vunpack.c.l.b16 %v3039
    %v3253 = vunpack.c.h.b16 %v3039
    %v3254 = vunpack.c.l.b16 %v3040
    %v3255 = vunpack.c.l.b16 %v3041
    %v3256 = vunpack.c.h.b16 %v3041
    %v3257 = vunpack.c.l.b16 %v3042
    %v3258 = vunpack.c.l.b16 %v3043
    %v3259 = vunpack.c.h.b16 %v3043
    %v3260 = vunpack.c.l.b16 %v3044
    %v3261 = vunpack.c.l.b16 %v3045
    %v3262 = vunpack.c.h.b16 %v3045
    %v3263 = vunpack.c.l.b16 %v3046
    %v3264 = vunpack.c.l.b16 %v3047
    %v3265 = vunpack.c.h.b16 %v3047
    %v3266 = vunpack.c.l.b16 %v3048
    %v3267 = vunpack.c.l.b16 %v3049
    %v3268 = vunpack.c.h.b16 %v3049
    %v3269 = vunpack.c.l.b16 %v3050
    %v3270 = vunpack.c.l.b16 %v3051
    %v3271 = vunpack.c.h.b16 %v3051
    %v3272 = vunpack.c.l.b16 %v3052
    %v3273 = vunpack.c.l.b16 %v3053
    %v3274 = vunpack.c.h.b16 %v3053
    %v3275 = vunpack.c.l.b16 %v3054
    %v3276 = vunpack.c.l.b16 %v3055
    %v3277 = vunpack.c.h.b16 %v3055
    %v3278 = vunpack.c.l.b16 %v3056
    %v3279 = vunpack.c.l.b16 %v3057
    %v3280 = vunpack.c.h.b16 %v3057
    %v3281 = vunpack.c.l.b16 %v3058
    %v3282 = vunpack.c.l.b16 %v3059
    %v3283 = vunpack.c.h.b16 %v3059
    %v3284 = vunpack.c.l.b16 %v3060
    %v3285 = vunpack.c.l.b16 %v3061
    %v3286 = vunpack.c.h.b16 %v3061
    %v3287 = vunpack.c.l.b16 %v3062
    %v3288 = vunpack.c.l.b16 %v3063
    %v3289 = vunpack.c.h.b16 %v3063
    %v3290 = vunpack.c.l.b16 %v3064
    %v3291 = vunpack.c.l.b16 %v3065
    %v3292 = vunpack.c.h.b16 %v3065
    %v3293 = vunpack.c.l.b16 %v3066
    %v3294 = vunpack.c.l.b16 %v3067
    %v3295 = vunpack.c.h.b16 %v3067
    %v3296 = vunpack.c.l.b16 %v3068
    %v3297 = vunpack.c.l.b16 %v3069
    %v3298 = vunpack.c.h.b16 %v3069
    %v3299 = vunpack.c.l.b16 %v3070
    %v3300 = vunpack.c.l.b16 %v3071
    %v3301 = vunpack.c.h.b16 %v3071
    %v3302 = vunpack.c.l.b16 %v3072
    %v3303 = vunpack.c.l.b16 %v3073
    %v3304 = vunpack.c.h.b16 %v3073
    %v3305 = vunpack.c.l.b16 %v3074
    %v3306 = vunpack.c.l.b16 %v3075
    %v3307 = vunpack.c.h.b16 %v3075
    %v3308 = vunpack.c.l.b16 %v3076
    %v3309 = vunpack.c.l.b16 %v3077
    %v3310 = vunpack.c.h.b16 %v3077
    %v3311 = vunpack.c.l.b16 %v3078
    %v3312 = vunpack.c.l.b16 %v3079
    %v3313 = vunpack.c.h.b16 %v3079
    %v3314 = vunpack.c.l.b16 %v3080
    %v3315 = vunpack.c.l.b16 %v3081
    %v3316 = vunpack.c.h.b16 %v3081
    %v3317 = vunpack.c.l.b16 %v3082
    %v3318 = vunpack.c.l.b16 %v3083
    %v3319 = vunpack.c.h.b16 %v3083
    %v3320 = vunpack.c.l.b16 %v3084
    %v3321 = vunpack.c.l.b16 %v3085
    %v3322 = vunpack.c.h.b16 %v3085
    %v3323 = vunpack.c.l.b16 %v3086
    %v3324 = vunpack.c.l.b16 %v3087
    %v3325 = vunpack.c.h.b16 %v3087
    %v3326 = vunpack.c.l.b16 %v3088
    %v3327 = vunpack.c.l.b16 %v3089
    %v3328 = vunpack.c.h.b16 %v3089
    %v3329 = vunpack.c.l.b16 %v3090
    %v3330 = vunpack.c.l.b16 %v3091
    %v3331 = vunpack.c.h.b16 %v3091
    %v3332 = vunpack.c.l.b16 %v3092
    %v3333 = vunpack.c.l.b16 %v3093
    %v3334 = vunpack.c.h.b16 %v3093
    %v3335 = vunpack.c.l.b16 %v3094
    %v3336 = vunpack.c.l.b16 %v3095
    %v3337 = vunpack.c.h.b16 %v3095
    %v3338 = vunpack.c.l.b16 %v3096
    %v3339 = vunpack.c.l.b16 %v3097
    %v3340 = vunpack.c.h.b16 %v3097
    %v3341 = vunpack.c.l.b16 %v3098
    %v3342 = vunpack.c.l.b16 %v3099
    %v3343 = vunpack.c.h.b16 %v3099
    %v3344 = vunpack.c.l.b16 %v3100
    %v3345 = vunpack.c.l.b16 %v3101
    %v3346 = vunpack.c.h.b16 %v3101
    %v3347 = vunpack.c.l.b16 %v3102
    %v3348 = vunpack.c.l.b16 %v3103
    %v3349 = vunpack.c.h.b16 %v3103
    %v3350 = vunpack.c.l.b16 %v3104
    %v3351 = vunpack.c.l.b16 %v3105
    %v3352 = vunpack.c.h.b16 %v3105
    %v3353 = vunpack.c.l.b16 %v3106
    %v3354 = vunpack.c.l.b16 %v3107
    %v3355 = vunpack.c.h.b16 %v3107
    %v3356 = vunpack.c.l.b16 %v3108
    %v3357 = vunpack.c.l.b16 %v3109
    %v3358 = vunpack.c.h.b16 %v3109
    %v3359 = vunpack.c.l.b16 %v3110
    %v3360 = vunpack.c.l.b16 %v3111
    %v3361 = vunpack.c.h.b16 %v3111
    %v3362 = vunpack.c.l.b16 %v3112
    %v3363 = vunpack.c.l.b16 %v3113
    %v3364 = vunpack.c.h.b16 %v3113
    %v3365 = vunpack.c.l.b16 %v3114
    %v3366 = vunpack.c.l.b16 %v3115
    %v3367 = vunpack.c.h.b16 %v3115
    %v3368 = vunpack.c.l.b16 %v3116
    %v3369 = vunpack.c.l.b16 %v3117
    %v3370 = vunpack.c.h.b16 %v3117
    %v3371 = vunpack.c.l.b16 %v3118
    %v3372 = vunpack.c.l.b16 %v3119
    %v3373 = vunpack.c.h.b16 %v3119
    %v3374 = vunpack.c.l.b16 %v3120
    %v3375 = vunpack.c.l.b16 %v3121
    %v3376 = vunpack.c.h.b16 %v3121
    %v3377 = vunpack.c.l.b16 %v3122
    %v3378 = vunpack.c.l.b16 %v3123
    %v3379 = vunpack.c.h.b16 %v3123
    %v3380 = vunpack.c.l.b16 %v3124
    %v3381 = vunpack.c.l.b16 %v3125
    %v3382 = vunpack.c.h.b16 %v3125
    %v3383 = vunpack.c.l.b16 %v3126
    %v3384 = vpack.c.b16 %v3243, %v3240
    %v3385 = vpack.c.b16 %v3244, %v3241
    %v3386 = vpack.c.b16 %v3245, %v3242
    %v3387 = vpack.c.b16 %v3249, %v3246
    %v3388 = vpack.c.b16 %v3250, %v3247
    %v3389 = vpack.c.b16 %v3251, %v3248
    %v3390 = vpack.c.b16 %v3255, %v3252
    %v3391 = vpack.c.b16 %v3256, %v3253
    %v3392 = vpack.c.b16 %v3257, %v3254
    %v3393 = vpack.c.b16 %v3261, %v3258
    %v3394 = vpack.c.b16 %v3262, %v3259
    %v3395 = vpack.c.b16 %v3263, %v3260
    %v3396 = vpack.c.b16 %v3267, %v3264
    %v3397 = vpack.c.b16 %v3268, %v3265
    %v3398 = vpack.c.b16 %v3269, %v3266
    %v3399 = vpack.c.b16 %v3273, %v3270
    %v3400 = vpack.c.b16 %v3274, %v3271
    %v3401 = vpack.c.b16 %v3275, %v3272
    %v3402 = vpack.c.b16 %v3279, %v3276
    %v3403 = vpack.c.b16 %v3280, %v3277
    %v3404 = vpack.c.b16 %v3281, %v3278
    %v3405 = vpack.c.b16 %v3285, %v3282
    %v3406 = vpack.c.b16 %v3286, %v3283
    %v3407 = vpack.c.b16 %v3287, %v3284
    %v3408 = vpack.c.b16 %v3291, %v3288
    %v3409 = vpack.c.b16 %v3292, %v3289
    %v3410 = vpack.c.b16 %v3293, %v3290
    %v3411 = vpack.c.b16 %v3297, %v3294
    %v3412 = vpack.c.b16 %v3298, %v3295
    %v3413 = vpack.c.b16 %v3299, %v3296
    %v3414 = vpack.c.b16 %v3303, %v3300
    %v3415 = vpack.c.b16 %v3304, %v3301
    %v3416 = vpack.c.b16 %v3305, %v3302
    %v3417 = vpack.c.b16 %v3309, %v3306
    %v3418 = vpack.c.b16 %v3310, %v3307
    %v3419 = vpack.c.b16 %v3311, %v3308
    %v3420 = vpack.c.b16 %v3315, %v3312
    %v3421 = vpack.c.b16 %v3316, %v3313
    %v3422 = vpack.c.b16 %v3317, %v3314
    %v3423 = vpack.c.b16 %v3321, %v3318
    %v3424 = vpack.c.b16 %v3322, %v3319
    %v3425 = vpack.c.b16 %v3323, %v3320
    %v3426 = vpack.c.b16 %v3327, %v3324
    %v3427 = vpack.c.b16 %v3328, %v3325
    %v3428 = vpack.c.b16 %v3329, %v3326
    %v3429 = vpack.c.b16 %v3333, %v3330
    %v3430 = vpack.c.b16 %v3334, %v3331
    %v3431 = vpack.c.b16 %v3335, %v3332
    %v3432 = vpack.c.b16 %v3339, %v3336
    %v3433 = vpack.c.b16 %v3340, %v3337
    %v3434 = vpack.c.b16 %v3341, %v3338
    %v3435 = vpack.c.b16 %v3345, %v3342
    %v3436 = vpack.c.b16 %v3346, %v3343
    %v3437 = vpack.c.b16 %v3347, %v3344
    %v3438 = vpack.c.b16 %v3351, %v3348
    %v3439 = vpack.c.b16 %v3352, %v3349
    %v3440 = vpack.c.b16 %v3353, %v3350
    %v3441 = vpack.c.b16 %v3357, %v3354
    %v3442 = vpack.c.b16 %v3358, %v3355
    %v3443 = vpack.c.b16 %v3359, %v3356
    %v3444 = vpack.c.b16 %v3363, %v3360
    %v3445 = vpack.c.b16 %v3364, %v3361
    %v3446 = vpack.c.b16 %v3365, %v3362
    %v3447 = vpack.c.b16 %v3369, %v3366
    %v3448 = vpack.c.b16 %v3370, %v3367
    %v3449 = vpack.c.b16 %v3371, %v3368
    %v3450 = vpack.c.b16 %v3375, %v3372
    %v3451 = vpack.c.b16 %v3376, %v3373
    %v3452 = vpack.c.b16 %v3377, %v3374
    %v3453 = vpack.c.b16 %v3381, %v3378
    %v3454 = vpack.c.b16 %v3382, %v3379
    %v3455 = vpack.c.b16 %v3383, %v3380
    %3528 = vmatprep.subr.bf16.mxu0 %v3406
    %3529 = vmatpush1.bf16.msra.mxu0 %v3405
    %3530 = vmatprep.subr.bf16.mxu0 %v3403
    %3531 = vmatpush1.bf16.msra.mxu0 %v3402
    %3532 = vmatprep.subr.bf16.mxu0 %v3400
    %3533 = vmatpush1.bf16.msra.mxu0 %v3399
    %3534 = vmatprep.subr.bf16.mxu0 %v3397
    %3535 = vmatpush1.bf16.msra.mxu0 %v3396
    %3536 = vmatprep.subr.bf16.mxu0 %v3394
    %3537 = vmatpush1.bf16.msra.mxu0 %v3393
    %3538 = vmatprep.subr.bf16.mxu0 %v3391
    %3539 = vmatpush1.bf16.msra.mxu0 %v3390
    %3540 = vmatprep.subr.bf16.mxu0 %v3388
    %3541 = vmatpush1.bf16.msra.mxu0 %v3387
    %3542 = vmatprep.subr.bf16.mxu0 %v3385
    %3543 = vmatpush1.bf16.msra.mxu0 %v3384
    %3544 = vmatprep.subr.bf16.mxu0 %v3430
    %3545 = vmatpush2.bf16.msra.mxu0 %v3429
    %3546 = vmatprep.subr.bf16.mxu0 %v3427
    %3547 = vmatpush2.bf16.msra.mxu0 %v3426
    %3548 = vmatprep.subr.bf16.mxu0 %v3424
    %3549 = vmatpush2.bf16.msra.mxu0 %v3423
    %3550 = vmatprep.subr.bf16.mxu0 %v3421
    %3551 = vmatpush2.bf16.msra.mxu0 %v3420
    %3552 = vmatprep.subr.bf16.mxu0 %v3418
    %3553 = vmatpush2.bf16.msra.mxu0 %v3417
    %3554 = vmatprep.subr.bf16.mxu0 %v3415
    %3555 = vmatpush2.bf16.msra.mxu0 %v3414
    %3556 = vmatprep.subr.bf16.mxu0 %v3412
    %3557 = vmatpush2.bf16.msra.mxu0 %v3411
    %3558 = vmatprep.subr.bf16.mxu0 %v3409
    %3559 = vmatpush2.bf16.msra.mxu0 %v3408
    %3560 = vmatprep.mubr.bf16.mxu0 %v3029
    %3561 = vmatmul.mubr.bf16.gmra.mxu0 %v3028
    %v3562 = vpop.f32.mrf.mxu0
    %v3563 = vadd.f32 %v3132, %v3562
    %v3564 = vpop.f32.mrf.mxu0
    %v3565 = vadd.f32 %v3136, %v3564
    %v3566 = vpop.f32.mrf.mxu0
    %v3567 = vpop.f32.mrf.mxu0
    %3568 = vdwg.mxu0
    %3569 = vmatprep.subr.bf16.mxu0 %v3454
    %3570 = vmatpush1.bf16.msra.mxu0 %v3453
    %3571 = vmatprep.subr.bf16.mxu0 %v3451
    %3572 = vmatpush1.bf16.msra.mxu0 %v3450
    %3573 = vmatprep.subr.bf16.mxu0 %v3448
    %3574 = vmatpush1.bf16.msra.mxu0 %v3447
    %3575 = vmatprep.subr.bf16.mxu0 %v3445
    %3576 = vmatpush1.bf16.msra.mxu0 %v3444
    %3577 = vmatprep.subr.bf16.mxu0 %v3442
    %3578 = vmatpush1.bf16.msra.mxu0 %v3441
    %3579 = vmatprep.subr.bf16.mxu0 %v3439
    %3580 = vmatpush1.bf16.msra.mxu0 %v3438
    %3581 = vmatprep.subr.bf16.mxu0 %v3436
    %3582 = vmatpush1.bf16.msra.mxu0 %v3435
    %3583 = vmatprep.subr.bf16.mxu0 %v3433
    %3584 = vmatpush1.bf16.msra.mxu0 %v3432
    %3585 = vmatprep.subr.bf16.mxu0 0
    %3586 = vmatpush2.bf16.msra.mxu0 0
    %3587 = vmatprep.subr.bf16.mxu0 0
    %3588 = vmatpush2.bf16.msra.mxu0 0
    %3589 = vmatprep.subr.bf16.mxu0 0
    %3590 = vmatpush2.bf16.msra.mxu0 0
    %3591 = vmatprep.subr.bf16.mxu0 0
    %3592 = vmatpush2.bf16.msra.mxu0 0
    %3593 = vmatprep.subr.bf16.mxu0 0
    %3594 = vmatpush2.bf16.msra.mxu0 0
    %3595 = vmatprep.subr.bf16.mxu0 0
    %3596 = vmatpush2.bf16.msra.mxu0 0
    %3597 = vmatprep.subr.bf16.mxu0 0
    %3598 = vmatpush2.bf16.msra.mxu0 0
    %3599 = vmatprep.subr.bf16.mxu0 0
    %3600 = vmatpush2.bf16.msra.mxu0 0
    %3601 = vmatprep.mubr.bf16.mxu0 0
    %3602 = vmatmul.mubr.bf16.gmra.mxu0 %v3030
    %v3603 = vpop.f32.mrf.mxu0
    %v3604 = vadd.f32 %v3563, %v3603
    %v3605 = vpop.f32.mrf.mxu0
    %v3606 = vadd.f32 %v3565, %v3605
    %v3607 = vpop.f32.mrf.mxu0
    %v3608 = vpop.f32.mrf.mxu0
    %3609 = vdwg.mxu0
    %3610 = vmatprep.subr.bf16.mxu0 0
    %3611 = vmatpush1.bf16.msra.mxu0 %v3407
    %3612 = vmatprep.subr.bf16.mxu0 0
    %3613 = vmatpush1.bf16.msra.mxu0 %v3404
    %3614 = vmatprep.subr.bf16.mxu0 0
    %3615 = vmatpush1.bf16.msra.mxu0 %v3401
    %3616 = vmatprep.subr.bf16.mxu0 0
    %3617 = vmatpush1.bf16.msra.mxu0 %v3398
    %3618 = vmatprep.subr.bf16.mxu0 0
    %3619 = vmatpush1.bf16.msra.mxu0 %v3395
    %3620 = vmatprep.subr.bf16.mxu0 0
    %3621 = vmatpush1.bf16.msra.mxu0 %v3392
    %3622 = vmatprep.subr.bf16.mxu0 0
    %3623 = vmatpush1.bf16.msra.mxu0 %v3389
    %3624 = vmatprep.subr.bf16.mxu0 0
    %3625 = vmatpush1.bf16.msra.mxu0 %v3386
    %3626 = vmatprep.subr.bf16.mxu0 0
    %3627 = vmatpush2.bf16.msra.mxu0 %v3431
    %3628 = vmatprep.subr.bf16.mxu0 0
    %3629 = vmatpush2.bf16.msra.mxu0 %v3428
    %3630 = vmatprep.subr.bf16.mxu0 0
    %3631 = vmatpush2.bf16.msra.mxu0 %v3425
    %3632 = vmatprep.subr.bf16.mxu0 0
    %3633 = vmatpush2.bf16.msra.mxu0 %v3422
    %3634 = vmatprep.subr.bf16.mxu0 0
    %3635 = vmatpush2.bf16.msra.mxu0 %v3419
    %3636 = vmatprep.subr.bf16.mxu0 0
    %3637 = vmatpush2.bf16.msra.mxu0 %v3416
    %3638 = vmatprep.subr.bf16.mxu0 0
    %3639 = vmatpush2.bf16.msra.mxu0 %v3413
    %3640 = vmatprep.subr.bf16.mxu0 0
    %3641 = vmatpush2.bf16.msra.mxu0 %v3410
    %3642 = vmatprep.mubr.bf16.mxu0 %v3029
    %3643 = vmatmul.mubr.bf16.gmra.mxu0 %v3028
    %v3644 = vpop.f32.mrf.mxu0
    %v3645 = vadd.f32 %v3140, %v3644
    %v3646 = vpop.f32.mrf.mxu0
    %v3647 = vpop.f32.mrf.mxu0
    %v3648 = vpop.f32.mrf.mxu0
    %3649 = vdwg.mxu0
    %3650 = vmatprep.subr.bf16.mxu0 0
    %3651 = vmatpush1.bf16.msra.mxu0 %v3455
    %3652 = vmatprep.subr.bf16.mxu0 0
    %3653 = vmatpush1.bf16.msra.mxu0 %v3452
    %3654 = vmatprep.subr.bf16.mxu0 0
    %3655 = vmatpush1.bf16.msra.mxu0 %v3449
    %3656 = vmatprep.subr.bf16.mxu0 0
    %3657 = vmatpush1.bf16.msra.mxu0 %v3446
    %3658 = vmatprep.subr.bf16.mxu0 0
    %3659 = vmatpush1.bf16.msra.mxu0 %v3443
    %3660 = vmatprep.subr.bf16.mxu0 0
    %3661 = vmatpush1.bf16.msra.mxu0 %v3440
    %3662 = vmatprep.subr.bf16.mxu0 0
    %3663 = vmatpush1.bf16.msra.mxu0 %v3437
    %3664 = vmatprep.subr.bf16.mxu0 0
    %3665 = vmatpush1.bf16.msra.mxu0 %v3434
    %3666 = vmatprep.subr.bf16.mxu0 0
    %3667 = vmatpush2.bf16.msra.mxu0 0
    %3668 = vmatprep.subr.bf16.mxu0 0
    %3669 = vmatpush2.bf16.msra.mxu0 0
    %3670 = vmatprep.subr.bf16.mxu0 0
    %3671 = vmatpush2.bf16.msra.mxu0 0
    %3672 = vmatprep.subr.bf16.mxu0 0
    %3673 = vmatpush2.bf16.msra.mxu0 0
    %3674 = vmatprep.subr.bf16.mxu0 0
    %3675 = vmatpush2.bf16.msra.mxu0 0
    %3676 = vmatprep.subr.bf16.mxu0 0
    %3677 = vmatpush2.bf16.msra.mxu0 0
    %3678 = vmatprep.subr.bf16.mxu0 0
    %3679 = vmatpush2.bf16.msra.mxu0 0
    %3680 = vmatprep.subr.bf16.mxu0 0
    %3681 = vmatpush2.bf16.msra.mxu0 0
    %3682 = vmatprep.mubr.bf16.mxu0 0
    %3683 = vmatmul.mubr.bf16.gmra.mxu0 %v3030
    %v3684 = vpop.f32.mrf.mxu0
    %v3685 = vadd.f32 %v3645, %v3684
    %v3686 = vpop.f32.mrf.mxu0
    %v3687 = vpop.f32.mrf.mxu0
    %v3688 = vpop.f32.mrf.mxu0
    %3689 = vdwg.mxu0
    %v3690 = vmax.f32 %v3604, 0.0
    %v3691 = vmax.f32 %v3606, 0.0
    %v3692 = vmax.f32 %v3685, 0.0
    %v3693 = vpack.c.bf16 %v3690, %v3690
    %v3694 = vpack.c.bf16 %v3691, %v3691
    %v3695 = vpack.c.bf16 %v3692, %v3692
    %v3696 = vld [vmem:[#allocation14] sm:$0xff]
    %v3697 = vld [vmem:[#allocation14 + $0x8] sm:$0xff]
    %v3698 = vld [vmem:[#allocation14 + $0x10] sm:$0xff]
    %v3699 = vld [vmem:[#allocation14 + $0x18] sm:$0xff]
    %v3700 = vld [vmem:[#allocation14 + $0x20] sm:$0xff]
    %v3701 = vld [vmem:[#allocation14 + $0x28] sm:$0xff]
    %v3702 = vld [vmem:[#allocation14 + $0x30] sm:$0xff]
    %v3703 = vld [vmem:[#allocation14 + $0x38] sm:$0xff]
    %v3704 = vld [vmem:[#allocation14 + $0x40] sm:$0xff]
    %v3705 = vld [vmem:[#allocation14 + $0x48] sm:$0xff]
    %v3706 = vld [vmem:[#allocation14 + $0x50] sm:$0xff]
    %v3707 = vld [vmem:[#allocation14 + $0x58] sm:$0xff]
    %v3708 = vld [vmem:[#allocation14 + $0x60] sm:$0xff]
    %v3709 = vld [vmem:[#allocation14 + $0x68] sm:$0xff]
    %v3710 = vld [vmem:[#allocation14 + $0x70] sm:$0xff]
    %v3711 = vld [vmem:[#allocation14 + $0x78] sm:$0xff]
    %v3712 = vld [vmem:[#allocation14 + $0x80] sm:$0xff]
    %v3713 = vld [vmem:[#allocation14 + $0x88] sm:$0xff]
    %v3714 = vld [vmem:[#allocation14 + $0x90] sm:$0xff]
    %v3715 = vld [vmem:[#allocation14 + $0x98] sm:$0xff]
    %v3716 = vld [vmem:[#allocation14 + $0xa0] sm:$0xff]
    %v3717 = vld [vmem:[#allocation14 + $0xa8] sm:$0xff]
    %v3718 = vld [vmem:[#allocation14 + $0xb0] sm:$0xff]
    %v3719 = vld [vmem:[#allocation14 + $0xb8] sm:$0xff]
    %v3720 = vld [vmem:[#allocation14 + $0xc0] sm:$0xff]
    %v3721 = vld [vmem:[#allocation14 + $0xc8] sm:$0xff]
    %v3722 = vld [vmem:[#allocation14 + $0xd0] sm:$0xff]
    %v3723 = vld [vmem:[#allocation14 + $0xd8] sm:$0xff]
    %v3724 = vld [vmem:[#allocation14 + $0xe0] sm:$0xff]
    %v3725 = vld [vmem:[#allocation14 + $0xe8] sm:$0xff]
    %v3726 = vld [vmem:[#allocation14 + $0xf0] sm:$0xff]
    %v3727 = vld [vmem:[#allocation14 + $0xf8] sm:$0xff]
    %v3728 = vld [vmem:[#allocation14 + $0x100] sm:$0xff]
    %v3729 = vld [vmem:[#allocation14 + $0x108] sm:$0xff]
    %v3730 = vld [vmem:[#allocation14 + $0x110] sm:$0xff]
    %v3731 = vld [vmem:[#allocation14 + $0x118] sm:$0xff]
    %v3732 = vld [vmem:[#allocation14 + $0x120] sm:$0xff]
    %v3733 = vld [vmem:[#allocation14 + $0x128] sm:$0xff]
    %v3734 = vld [vmem:[#allocation14 + $0x130] sm:$0xff]
    %v3735 = vld [vmem:[#allocation14 + $0x138] sm:$0xff]
    %v3736 = vld [vmem:[#allocation14 + $0x140] sm:$0xff]
    %v3737 = vld [vmem:[#allocation14 + $0x148] sm:$0xff]
    %v3738 = vld [vmem:[#allocation14 + $0x150] sm:$0xff]
    %v3739 = vld [vmem:[#allocation14 + $0x158] sm:$0xff]
    %v3740 = vld [vmem:[#allocation14 + $0x160] sm:$0xff]
    %v3741 = vld [vmem:[#allocation14 + $0x168] sm:$0xff]
    %v3742 = vld [vmem:[#allocation14 + $0x170] sm:$0xff]
    %v3743 = vld [vmem:[#allocation14 + $0x178] sm:$0xff]
    %v3744 = vld [vmem:[#allocation14 + $0x180] sm:$0xff]
    %v3745 = vld [vmem:[#allocation14 + $0x188] sm:$0xff]
    %v3746 = vld [vmem:[#allocation14 + $0x190] sm:$0xff]
    %v3747 = vld [vmem:[#allocation14 + $0x198] sm:$0xff]
    %v3748 = vld [vmem:[#allocation14 + $0x1a0] sm:$0xff]
    %v3749 = vld [vmem:[#allocation14 + $0x1a8] sm:$0xff]
    %v3750 = vld [vmem:[#allocation14 + $0x1b0] sm:$0xff]
    %v3751 = vld [vmem:[#allocation14 + $0x1b8] sm:$0xff]
    %v3752 = vld [vmem:[#allocation14 + $0x1c0] sm:$0xff]
    %v3753 = vld [vmem:[#allocation14 + $0x1c8] sm:$0xff]
    %v3754 = vld [vmem:[#allocation14 + $0x1d0] sm:$0xff]
    %v3755 = vld [vmem:[#allocation14 + $0x1d8] sm:$0xff]
    %v3756 = vld [vmem:[#allocation14 + $0x1e0] sm:$0xff]
    %v3757 = vld [vmem:[#allocation14 + $0x1e8] sm:$0xff]
    %v3758 = vld [vmem:[#allocation14 + $0x1f0] sm:$0xff]
    %v3759 = vld [vmem:[#allocation14 + $0x1f8] sm:$0xff]
    %v3760 = vld [vmem:[#allocation14 + $0x200] sm:$0xff]
    %v3761 = vld [vmem:[#allocation14 + $0x208] sm:$0xff]
    %v3762 = vld [vmem:[#allocation14 + $0x210] sm:$0xff]
    %v3763 = vld [vmem:[#allocation14 + $0x218] sm:$0xff]
    %v3764 = vld [vmem:[#allocation14 + $0x220] sm:$0xff]
    %v3765 = vld [vmem:[#allocation14 + $0x228] sm:$0xff]
    %v3766 = vld [vmem:[#allocation14 + $0x230] sm:$0xff]
    %v3767 = vld [vmem:[#allocation14 + $0x238] sm:$0xff]
    %v3768 = vld [vmem:[#allocation14 + $0x240] sm:$0xff]
    %v3769 = vld [vmem:[#allocation14 + $0x248] sm:$0xff]
    %v3770 = vld [vmem:[#allocation14 + $0x250] sm:$0xff]
    %v3771 = vld [vmem:[#allocation14 + $0x258] sm:$0xff]
    %v3772 = vld [vmem:[#allocation14 + $0x260] sm:$0xff]
    %v3773 = vld [vmem:[#allocation14 + $0x268] sm:$0xff]
    %v3774 = vld [vmem:[#allocation14 + $0x270] sm:$0xff]
    %v3775 = vld [vmem:[#allocation14 + $0x278] sm:$0xff]
    %v3776 = vld [vmem:[#allocation14 + $0x280] sm:$0xff]
    %v3777 = vld [vmem:[#allocation14 + $0x288] sm:$0xff]
    %v3778 = vld [vmem:[#allocation14 + $0x290] sm:$0xff]
    %v3779 = vld [vmem:[#allocation14 + $0x298] sm:$0xff]
    %v3780 = vld [vmem:[#allocation14 + $0x2a0] sm:$0xff]
    %v3781 = vld [vmem:[#allocation14 + $0x2a8] sm:$0xff]
    %v3782 = vld [vmem:[#allocation14 + $0x2b0] sm:$0xff]
    %v3783 = vld [vmem:[#allocation14 + $0x2b8] sm:$0xff]
    %v3784 = vld [vmem:[#allocation14 + $0x2c0] sm:$0xff]
    %v3785 = vld [vmem:[#allocation14 + $0x2c8] sm:$0xff]
    %v3786 = vld [vmem:[#allocation14 + $0x2d0] sm:$0xff]
    %v3787 = vld [vmem:[#allocation14 + $0x2d8] sm:$0xff]
    %v3788 = vld [vmem:[#allocation14 + $0x2e0] sm:$0xff]
    %v3789 = vld [vmem:[#allocation14 + $0x2e8] sm:$0xff]
    %v3790 = vld [vmem:[#allocation14 + $0x2f0] sm:$0xff]
    %v3791 = vld [vmem:[#allocation14 + $0x2f8] sm:$0xff]
    %v3792 = vld [vmem:[#allocation14 + $0x300] sm:$0xff]
    %v3793 = vld [vmem:[#allocation14 + $0x308] sm:$0xff]
    %v3794 = vld [vmem:[#allocation14 + $0x310] sm:$0xff]
    %v3795 = vld [vmem:[#allocation14 + $0x318] sm:$0xff]
    %v3796 = vld [vmem:[#allocation14 + $0x320] sm:$0xff]
    %v3797 = vld [vmem:[#allocation14 + $0x328] sm:$0xff]
    %v3798 = vld [vmem:[#allocation14 + $0x330] sm:$0xff]
    %v3799 = vld [vmem:[#allocation14 + $0x338] sm:$0xff]
    %v3800 = vld [vmem:[#allocation14 + $0x340] sm:$0xff]
    %v3801 = vld [vmem:[#allocation14 + $0x348] sm:$0xff]
    %v3802 = vld [vmem:[#allocation14 + $0x350] sm:$0xff]
    %v3803 = vld [vmem:[#allocation14 + $0x358] sm:$0xff]
    %v3804 = vld [vmem:[#allocation14 + $0x360] sm:$0xff]
    %v3805 = vld [vmem:[#allocation14 + $0x368] sm:$0xff]
    %v3806 = vld [vmem:[#allocation14 + $0x370] sm:$0xff]
    %v3807 = vld [vmem:[#allocation14 + $0x378] sm:$0xff]
    %v3808 = vld [vmem:[#allocation14 + $0x380] sm:$0xff]
    %v3809 = vld [vmem:[#allocation14 + $0x388] sm:$0xff]
    %v3810 = vld [vmem:[#allocation14 + $0x390] sm:$0xff]
    %v3811 = vld [vmem:[#allocation14 + $0x398] sm:$0xff]
    %v3812 = vld [vmem:[#allocation14 + $0x3a0] sm:$0xff]
    %v3813 = vld [vmem:[#allocation14 + $0x3a8] sm:$0xff]
    %v3814 = vld [vmem:[#allocation14 + $0x3b0] sm:$0xff]
    %v3815 = vld [vmem:[#allocation14 + $0x3b8] sm:$0xff]
    %v3816 = vld [vmem:[#allocation14 + $0x3c0] sm:$0xff]
    %v3817 = vld [vmem:[#allocation14 + $0x3c8] sm:$0xff]
    %v3818 = vld [vmem:[#allocation14 + $0x3d0] sm:$0xff]
    %v3819 = vld [vmem:[#allocation14 + $0x3d8] sm:$0xff]
    %v3820 = vld [vmem:[#allocation14 + $0x3e0] sm:$0xff]
    %v3821 = vld [vmem:[#allocation14 + $0x3e8] sm:$0xff]
    %v3822 = vld [vmem:[#allocation14 + $0x3f0] sm:$0xff]
    %v3823 = vld [vmem:[#allocation14 + $0x3f8] sm:$0xff]
    %v3824 = vld [vmem:[#allocation14 + $0x400] sm:$0xff]
    %v3825 = vld [vmem:[#allocation14 + $0x408] sm:$0xff]
    %v3826 = vld [vmem:[#allocation14 + $0x410] sm:$0xff]
    %v3827 = vld [vmem:[#allocation14 + $0x418] sm:$0xff]
    %v3828 = vld [vmem:[#allocation14 + $0x420] sm:$0xff]
    %v3829 = vld [vmem:[#allocation14 + $0x428] sm:$0xff]
    %v3830 = vld [vmem:[#allocation14 + $0x430] sm:$0xff]
    %v3831 = vld [vmem:[#allocation14 + $0x438] sm:$0xff]
    %v3832 = vld [vmem:[#allocation14 + $0x440] sm:$0xff]
    %v3833 = vld [vmem:[#allocation14 + $0x448] sm:$0xff]
    %v3834 = vld [vmem:[#allocation14 + $0x450] sm:$0xff]
    %v3835 = vld [vmem:[#allocation14 + $0x458] sm:$0xff]
    %v3836 = vld [vmem:[#allocation14 + $0x460] sm:$0xff]
    %v3837 = vld [vmem:[#allocation14 + $0x468] sm:$0xff]
    %v3838 = vld [vmem:[#allocation14 + $0x470] sm:$0xff]
    %v3839 = vld [vmem:[#allocation14 + $0x478] sm:$0xff]
    %v3840 = vld [vmem:[#allocation14 + $0x480] sm:$0xff]
    %v3841 = vld [vmem:[#allocation14 + $0x488] sm:$0xff]
    %v3842 = vld [vmem:[#allocation14 + $0x490] sm:$0xff]
    %v3843 = vld [vmem:[#allocation14 + $0x498] sm:$0xff]
    %v3844 = vld [vmem:[#allocation14 + $0x4a0] sm:$0xff]
    %v3845 = vld [vmem:[#allocation14 + $0x4a8] sm:$0xff]
    %v3846 = vld [vmem:[#allocation14 + $0x4b0] sm:$0xff]
    %v3847 = vld [vmem:[#allocation14 + $0x4b8] sm:$0xff]
    %v3848 = vld [vmem:[#allocation14 + $0x4c0] sm:$0xff]
    %v3849 = vld [vmem:[#allocation14 + $0x4c8] sm:$0xff]
    %v3850 = vld [vmem:[#allocation14 + $0x4d0] sm:$0xff]
    %v3851 = vld [vmem:[#allocation14 + $0x4d8] sm:$0xff]
    %v3852 = vld [vmem:[#allocation14 + $0x4e0] sm:$0xff]
    %v3853 = vld [vmem:[#allocation14 + $0x4e8] sm:$0xff]
    %v3854 = vld [vmem:[#allocation14 + $0x4f0] sm:$0xff]
    %v3855 = vld [vmem:[#allocation14 + $0x4f8] sm:$0xff]
    %v3856 = vld [vmem:[#allocation14 + $0x500] sm:$0xff]
    %v3857 = vld [vmem:[#allocation14 + $0x508] sm:$0xff]
    %v3858 = vld [vmem:[#allocation14 + $0x510] sm:$0xff]
    %v3859 = vld [vmem:[#allocation14 + $0x518] sm:$0xff]
    %v3860 = vld [vmem:[#allocation14 + $0x520] sm:$0xff]
    %v3861 = vld [vmem:[#allocation14 + $0x528] sm:$0xff]
    %v3862 = vld [vmem:[#allocation14 + $0x530] sm:$0xff]
    %v3863 = vld [vmem:[#allocation14 + $0x538] sm:$0xff]
    %v3864 = vld [vmem:[#allocation14 + $0x540] sm:$0xff]
    %v3865 = vld [vmem:[#allocation14 + $0x548] sm:$0xff]
    %v3866 = vld [vmem:[#allocation14 + $0x550] sm:$0xff]
    %v3867 = vld [vmem:[#allocation14 + $0x558] sm:$0xff]
    %v3868 = vld [vmem:[#allocation14 + $0x560] sm:$0xff]
    %v3869 = vld [vmem:[#allocation14 + $0x568] sm:$0xff]
    %v3870 = vld [vmem:[#allocation14 + $0x570] sm:$0xff]
    %v3871 = vld [vmem:[#allocation14 + $0x578] sm:$0xff]
    %v3872 = vld [vmem:[#allocation14 + $0x580] sm:$0xff]
    %v3873 = vld [vmem:[#allocation14 + $0x588] sm:$0xff]
    %v3874 = vld [vmem:[#allocation14 + $0x590] sm:$0xff]
    %v3875 = vld [vmem:[#allocation14 + $0x598] sm:$0xff]
    %v3876 = vld [vmem:[#allocation14 + $0x5a0] sm:$0xff]
    %v3877 = vld [vmem:[#allocation14 + $0x5a8] sm:$0xff]
    %v3878 = vld [vmem:[#allocation14 + $0x5b0] sm:$0xff]
    %v3879 = vld [vmem:[#allocation14 + $0x5b8] sm:$0xff]
    %v3880 = vld [vmem:[#allocation14 + $0x5c0] sm:$0xff]
    %v3881 = vld [vmem:[#allocation14 + $0x5c8] sm:$0xff]
    %v3882 = vld [vmem:[#allocation14 + $0x5d0] sm:$0xff]
    %v3883 = vld [vmem:[#allocation14 + $0x5d8] sm:$0xff]
    %v3884 = vld [vmem:[#allocation14 + $0x5e0] sm:$0xff]
    %v3885 = vld [vmem:[#allocation14 + $0x5e8] sm:$0xff]
    %v3886 = vld [vmem:[#allocation14 + $0x5f0] sm:$0xff]
    %v3887 = vld [vmem:[#allocation14 + $0x5f8] sm:$0xff]
    %v3888 = vld [vmem:[%s9] sm:$0xff]
    %v3890 = vlaneseq
    %v3891 = vshrl.u32 %v3890, 7
    %v3892 = vsub.s32 0, %v3891
    %v3893 = vrot.slane %v3888, %v3892
    %v3894 = vlaneseq
    %v3895 = vshrl.u32 %v3894, 7
    %v3896 = vsub.s32 1, %v3895
    %v3897 = vrot.slane %v3888, %v3896
    %v3898 = vlaneseq
    %v3899 = vshrl.u32 %v3898, 7
    %v3900 = vsub.s32 2, %v3899
    %v3901 = vrot.slane %v3888, %v3900
    %v3902 = vlaneseq
    %v3903 = vshrl.u32 %v3902, 7
    %v3904 = vsub.s32 3, %v3903
    %v3905 = vrot.slane %v3888, %v3904
    %v3906 = vlaneseq
    %v3907 = vshrl.u32 %v3906, 7
    %v3908 = vsub.s32 4, %v3907
    %v3909 = vrot.slane %v3888, %v3908
    %v3910 = vlaneseq
    %v3911 = vshrl.u32 %v3910, 7
    %v3912 = vsub.s32 5, %v3911
    %v3913 = vrot.slane %v3888, %v3912
    %v3914 = vlaneseq
    %v3915 = vshrl.u32 %v3914, 7
    %v3916 = vsub.s32 6, %v3915
    %v3917 = vrot.slane %v3888, %v3916
    %v3918 = vlaneseq
    %v3919 = vshrl.u32 %v3918, 7
    %v3920 = vsub.s32 7, %v3919
    %v3921 = vrot.slane %v3888, %v3920
    %v4122 = vunpack.c.l.b16 %v3696
    %v4123 = vunpack.c.h.b16 %v3696
    %v4124 = vunpack.c.l.b16 %v3697
    %v4125 = vunpack.c.h.b16 %v3697
    %v4126 = vunpack.c.l.b16 %v3698
    %v4127 = vunpack.c.h.b16 %v3698
    %v4128 = vunpack.c.l.b16 %v3699
    %v4129 = vunpack.c.h.b16 %v3699
    %v4130 = vunpack.c.l.b16 %v3700
    %v4131 = vunpack.c.h.b16 %v3700
    %v4132 = vunpack.c.l.b16 %v3701
    %v4133 = vunpack.c.h.b16 %v3701
    %v4134 = vunpack.c.l.b16 %v3702
    %v4135 = vunpack.c.h.b16 %v3702
    %v4136 = vunpack.c.l.b16 %v3703
    %v4137 = vunpack.c.h.b16 %v3703
    %v4138 = vunpack.c.l.b16 %v3704
    %v4139 = vunpack.c.h.b16 %v3704
    %v4140 = vunpack.c.l.b16 %v3705
    %v4141 = vunpack.c.h.b16 %v3705
    %v4142 = vunpack.c.l.b16 %v3706
    %v4143 = vunpack.c.h.b16 %v3706
    %v4144 = vunpack.c.l.b16 %v3707
    %v4145 = vunpack.c.h.b16 %v3707
    %v4146 = vunpack.c.l.b16 %v3708
    %v4147 = vunpack.c.h.b16 %v3708
    %v4148 = vunpack.c.l.b16 %v3709
    %v4149 = vunpack.c.h.b16 %v3709
    %v4150 = vunpack.c.l.b16 %v3710
    %v4151 = vunpack.c.h.b16 %v3710
    %v4152 = vunpack.c.l.b16 %v3711
    %v4153 = vunpack.c.h.b16 %v3711
    %v4154 = vunpack.c.l.b16 %v3712
    %v4155 = vunpack.c.h.b16 %v3712
    %v4156 = vunpack.c.l.b16 %v3713
    %v4157 = vunpack.c.h.b16 %v3713
    %v4158 = vunpack.c.l.b16 %v3714
    %v4159 = vunpack.c.h.b16 %v3714
    %v4160 = vunpack.c.l.b16 %v3715
    %v4161 = vunpack.c.h.b16 %v3715
    %v4162 = vunpack.c.l.b16 %v3716
    %v4163 = vunpack.c.h.b16 %v3716
    %v4164 = vunpack.c.l.b16 %v3717
    %v4165 = vunpack.c.h.b16 %v3717
    %v4166 = vunpack.c.l.b16 %v3718
    %v4167 = vunpack.c.h.b16 %v3718
    %v4168 = vunpack.c.l.b16 %v3719
    %v4169 = vunpack.c.h.b16 %v3719
    %v4170 = vunpack.c.l.b16 %v3720
    %v4171 = vunpack.c.h.b16 %v3720
    %v4172 = vunpack.c.l.b16 %v3721
    %v4173 = vunpack.c.h.b16 %v3721
    %v4174 = vunpack.c.l.b16 %v3722
    %v4175 = vunpack.c.h.b16 %v3722
    %v4176 = vunpack.c.l.b16 %v3723
    %v4177 = vunpack.c.h.b16 %v3723
    %v4178 = vunpack.c.l.b16 %v3724
    %v4179 = vunpack.c.h.b16 %v3724
    %v4180 = vunpack.c.l.b16 %v3725
    %v4181 = vunpack.c.h.b16 %v3725
    %v4182 = vunpack.c.l.b16 %v3726
    %v4183 = vunpack.c.h.b16 %v3726
    %v4184 = vunpack.c.l.b16 %v3727
    %v4185 = vunpack.c.h.b16 %v3727
    %v4186 = vunpack.c.l.b16 %v3728
    %v4187 = vunpack.c.h.b16 %v3728
    %v4188 = vunpack.c.l.b16 %v3729
    %v4189 = vunpack.c.h.b16 %v3729
    %v4190 = vunpack.c.l.b16 %v3730
    %v4191 = vunpack.c.h.b16 %v3730
    %v4192 = vunpack.c.l.b16 %v3731
    %v4193 = vunpack.c.h.b16 %v3731
    %v4194 = vunpack.c.l.b16 %v3732
    %v4195 = vunpack.c.h.b16 %v3732
    %v4196 = vunpack.c.l.b16 %v3733
    %v4197 = vunpack.c.h.b16 %v3733
    %v4198 = vunpack.c.l.b16 %v3734
    %v4199 = vunpack.c.h.b16 %v3734
    %v4200 = vunpack.c.l.b16 %v3735
    %v4201 = vunpack.c.h.b16 %v3735
    %v4202 = vunpack.c.l.b16 %v3736
    %v4203 = vunpack.c.h.b16 %v3736
    %v4204 = vunpack.c.l.b16 %v3737
    %v4205 = vunpack.c.h.b16 %v3737
    %v4206 = vunpack.c.l.b16 %v3738
    %v4207 = vunpack.c.h.b16 %v3738
    %v4208 = vunpack.c.l.b16 %v3739
    %v4209 = vunpack.c.h.b16 %v3739
    %v4210 = vunpack.c.l.b16 %v3740
    %v4211 = vunpack.c.h.b16 %v3740
    %v4212 = vunpack.c.l.b16 %v3741
    %v4213 = vunpack.c.h.b16 %v3741
    %v4214 = vunpack.c.l.b16 %v3742
    %v4215 = vunpack.c.h.b16 %v3742
    %v4216 = vunpack.c.l.b16 %v3743
    %v4217 = vunpack.c.h.b16 %v3743
    %v4218 = vunpack.c.l.b16 %v3744
    %v4219 = vunpack.c.h.b16 %v3744
    %v4220 = vunpack.c.l.b16 %v3745
    %v4221 = vunpack.c.h.b16 %v3745
    %v4222 = vunpack.c.l.b16 %v3746
    %v4223 = vunpack.c.h.b16 %v3746
    %v4224 = vunpack.c.l.b16 %v3747
    %v4225 = vunpack.c.h.b16 %v3747
    %v4226 = vunpack.c.l.b16 %v3748
    %v4227 = vunpack.c.h.b16 %v3748
    %v4228 = vunpack.c.l.b16 %v3749
    %v4229 = vunpack.c.h.b16 %v3749
    %v4230 = vunpack.c.l.b16 %v3750
    %v4231 = vunpack.c.h.b16 %v3750
    %v4232 = vunpack.c.l.b16 %v3751
    %v4233 = vunpack.c.h.b16 %v3751
    %v4234 = vunpack.c.l.b16 %v3752
    %v4235 = vunpack.c.h.b16 %v3752
    %v4236 = vunpack.c.l.b16 %v3753
    %v4237 = vunpack.c.h.b16 %v3753
    %v4238 = vunpack.c.l.b16 %v3754
    %v4239 = vunpack.c.h.b16 %v3754
    %v4240 = vunpack.c.l.b16 %v3755
    %v4241 = vunpack.c.h.b16 %v3755
    %v4242 = vunpack.c.l.b16 %v3756
    %v4243 = vunpack.c.h.b16 %v3756
    %v4244 = vunpack.c.l.b16 %v3757
    %v4245 = vunpack.c.h.b16 %v3757
    %v4246 = vunpack.c.l.b16 %v3758
    %v4247 = vunpack.c.h.b16 %v3758
    %v4248 = vunpack.c.l.b16 %v3759
    %v4249 = vunpack.c.h.b16 %v3759
    %v4250 = vunpack.c.l.b16 %v3760
    %v4251 = vunpack.c.h.b16 %v3760
    %v4252 = vunpack.c.l.b16 %v3761
    %v4253 = vunpack.c.h.b16 %v3761
    %v4254 = vunpack.c.l.b16 %v3762
    %v4255 = vunpack.c.h.b16 %v3762
    %v4256 = vunpack.c.l.b16 %v3763
    %v4257 = vunpack.c.h.b16 %v3763
    %v4258 = vunpack.c.l.b16 %v3764
    %v4259 = vunpack.c.h.b16 %v3764
    %v4260 = vunpack.c.l.b16 %v3765
    %v4261 = vunpack.c.h.b16 %v3765
    %v4262 = vunpack.c.l.b16 %v3766
    %v4263 = vunpack.c.h.b16 %v3766
    %v4264 = vunpack.c.l.b16 %v3767
    %v4265 = vunpack.c.h.b16 %v3767
    %v4266 = vunpack.c.l.b16 %v3768
    %v4267 = vunpack.c.h.b16 %v3768
    %v4268 = vunpack.c.l.b16 %v3769
    %v4269 = vunpack.c.h.b16 %v3769
    %v4270 = vunpack.c.l.b16 %v3770
    %v4271 = vunpack.c.h.b16 %v3770
    %v4272 = vunpack.c.l.b16 %v3771
    %v4273 = vunpack.c.h.b16 %v3771
    %v4274 = vunpack.c.l.b16 %v3772
    %v4275 = vunpack.c.h.b16 %v3772
    %v4276 = vunpack.c.l.b16 %v3773
    %v4277 = vunpack.c.h.b16 %v3773
    %v4278 = vunpack.c.l.b16 %v3774
    %v4279 = vunpack.c.h.b16 %v3774
    %v4280 = vunpack.c.l.b16 %v3775
    %v4281 = vunpack.c.h.b16 %v3775
    %v4282 = vunpack.c.l.b16 %v3776
    %v4283 = vunpack.c.h.b16 %v3776
    %v4284 = vunpack.c.l.b16 %v3777
    %v4285 = vunpack.c.h.b16 %v3777
    %v4286 = vunpack.c.l.b16 %v3778
    %v4287 = vunpack.c.h.b16 %v3778
    %v4288 = vunpack.c.l.b16 %v3779
    %v4289 = vunpack.c.h.b16 %v3779
    %v4290 = vunpack.c.l.b16 %v3780
    %v4291 = vunpack.c.h.b16 %v3780
    %v4292 = vunpack.c.l.b16 %v3781
    %v4293 = vunpack.c.h.b16 %v3781
    %v4294 = vunpack.c.l.b16 %v3782
    %v4295 = vunpack.c.h.b16 %v3782
    %v4296 = vunpack.c.l.b16 %v3783
    %v4297 = vunpack.c.h.b16 %v3783
    %v4298 = vunpack.c.l.b16 %v3784
    %v4299 = vunpack.c.h.b16 %v3784
    %v4300 = vunpack.c.l.b16 %v3785
    %v4301 = vunpack.c.h.b16 %v3785
    %v4302 = vunpack.c.l.b16 %v3786
    %v4303 = vunpack.c.h.b16 %v3786
    %v4304 = vunpack.c.l.b16 %v3787
    %v4305 = vunpack.c.h.b16 %v3787
    %v4306 = vunpack.c.l.b16 %v3788
    %v4307 = vunpack.c.h.b16 %v3788
    %v4308 = vunpack.c.l.b16 %v3789
    %v4309 = vunpack.c.h.b16 %v3789
    %v4310 = vunpack.c.l.b16 %v3790
    %v4311 = vunpack.c.h.b16 %v3790
    %v4312 = vunpack.c.l.b16 %v3791
    %v4313 = vunpack.c.h.b16 %v3791
    %v4314 = vunpack.c.l.b16 %v3792
    %v4315 = vunpack.c.h.b16 %v3792
    %v4316 = vunpack.c.l.b16 %v3793
    %v4317 = vunpack.c.h.b16 %v3793
    %v4318 = vunpack.c.l.b16 %v3794
    %v4319 = vunpack.c.h.b16 %v3794
    %v4320 = vunpack.c.l.b16 %v3795
    %v4321 = vunpack.c.h.b16 %v3795
    %v4322 = vunpack.c.l.b16 %v3796
    %v4323 = vunpack.c.h.b16 %v3796
    %v4324 = vunpack.c.l.b16 %v3797
    %v4325 = vunpack.c.h.b16 %v3797
    %v4326 = vunpack.c.l.b16 %v3798
    %v4327 = vunpack.c.h.b16 %v3798
    %v4328 = vunpack.c.l.b16 %v3799
    %v4329 = vunpack.c.h.b16 %v3799
    %v4330 = vunpack.c.l.b16 %v3800
    %v4331 = vunpack.c.h.b16 %v3800
    %v4332 = vunpack.c.l.b16 %v3801
    %v4333 = vunpack.c.h.b16 %v3801
    %v4334 = vunpack.c.l.b16 %v3802
    %v4335 = vunpack.c.h.b16 %v3802
    %v4336 = vunpack.c.l.b16 %v3803
    %v4337 = vunpack.c.h.b16 %v3803
    %v4338 = vunpack.c.l.b16 %v3804
    %v4339 = vunpack.c.h.b16 %v3804
    %v4340 = vunpack.c.l.b16 %v3805
    %v4341 = vunpack.c.h.b16 %v3805
    %v4342 = vunpack.c.l.b16 %v3806
    %v4343 = vunpack.c.h.b16 %v3806
    %v4344 = vunpack.c.l.b16 %v3807
    %v4345 = vunpack.c.h.b16 %v3807
    %v4346 = vunpack.c.l.b16 %v3808
    %v4347 = vunpack.c.h.b16 %v3808
    %v4348 = vunpack.c.l.b16 %v3809
    %v4349 = vunpack.c.h.b16 %v3809
    %v4350 = vunpack.c.l.b16 %v3810
    %v4351 = vunpack.c.h.b16 %v3810
    %v4352 = vunpack.c.l.b16 %v3811
    %v4353 = vunpack.c.h.b16 %v3811
    %v4354 = vunpack.c.l.b16 %v3812
    %v4355 = vunpack.c.h.b16 %v3812
    %v4356 = vunpack.c.l.b16 %v3813
    %v4357 = vunpack.c.h.b16 %v3813
    %v4358 = vunpack.c.l.b16 %v3814
    %v4359 = vunpack.c.h.b16 %v3814
    %v4360 = vunpack.c.l.b16 %v3815
    %v4361 = vunpack.c.h.b16 %v3815
    %v4362 = vunpack.c.l.b16 %v3816
    %v4363 = vunpack.c.h.b16 %v3816
    %v4364 = vunpack.c.l.b16 %v3817
    %v4365 = vunpack.c.h.b16 %v3817
    %v4366 = vunpack.c.l.b16 %v3818
    %v4367 = vunpack.c.h.b16 %v3818
    %v4368 = vunpack.c.l.b16 %v3819
    %v4369 = vunpack.c.h.b16 %v3819
    %v4370 = vunpack.c.l.b16 %v3820
    %v4371 = vunpack.c.h.b16 %v3820
    %v4372 = vunpack.c.l.b16 %v3821
    %v4373 = vunpack.c.h.b16 %v3821
    %v4374 = vunpack.c.l.b16 %v3822
    %v4375 = vunpack.c.h.b16 %v3822
    %v4376 = vunpack.c.l.b16 %v3823
    %v4377 = vunpack.c.h.b16 %v3823
    %v4378 = vunpack.c.l.b16 %v3824
    %v4379 = vunpack.c.h.b16 %v3824
    %v4380 = vunpack.c.l.b16 %v3825
    %v4381 = vunpack.c.h.b16 %v3825
    %v4382 = vunpack.c.l.b16 %v3826
    %v4383 = vunpack.c.h.b16 %v3826
    %v4384 = vunpack.c.l.b16 %v3827
    %v4385 = vunpack.c.h.b16 %v3827
    %v4386 = vunpack.c.l.b16 %v3828
    %v4387 = vunpack.c.h.b16 %v3828
    %v4388 = vunpack.c.l.b16 %v3829
    %v4389 = vunpack.c.h.b16 %v3829
    %v4390 = vunpack.c.l.b16 %v3830
    %v4391 = vunpack.c.h.b16 %v3830
    %v4392 = vunpack.c.l.b16 %v3831
    %v4393 = vunpack.c.h.b16 %v3831
    %v4394 = vunpack.c.l.b16 %v3832
    %v4395 = vunpack.c.h.b16 %v3832
    %v4396 = vunpack.c.l.b16 %v3833
    %v4397 = vunpack.c.h.b16 %v3833
    %v4398 = vunpack.c.l.b16 %v3834
    %v4399 = vunpack.c.h.b16 %v3834
    %v4400 = vunpack.c.l.b16 %v3835
    %v4401 = vunpack.c.h.b16 %v3835
    %v4402 = vunpack.c.l.b16 %v3836
    %v4403 = vunpack.c.h.b16 %v3836
    %v4404 = vunpack.c.l.b16 %v3837
    %v4405 = vunpack.c.h.b16 %v3837
    %v4406 = vunpack.c.l.b16 %v3838
    %v4407 = vunpack.c.h.b16 %v3838
    %v4408 = vunpack.c.l.b16 %v3839
    %v4409 = vunpack.c.h.b16 %v3839
    %v4410 = vunpack.c.l.b16 %v3840
    %v4411 = vunpack.c.h.b16 %v3840
    %v4412 = vunpack.c.l.b16 %v3841
    %v4413 = vunpack.c.h.b16 %v3841
    %v4414 = vunpack.c.l.b16 %v3842
    %v4415 = vunpack.c.h.b16 %v3842
    %v4416 = vunpack.c.l.b16 %v3843
    %v4417 = vunpack.c.h.b16 %v3843
    %v4418 = vunpack.c.l.b16 %v3844
    %v4419 = vunpack.c.h.b16 %v3844
    %v4420 = vunpack.c.l.b16 %v3845
    %v4421 = vunpack.c.h.b16 %v3845
    %v4422 = vunpack.c.l.b16 %v3846
    %v4423 = vunpack.c.h.b16 %v3846
    %v4424 = vunpack.c.l.b16 %v3847
    %v4425 = vunpack.c.h.b16 %v3847
    %v4426 = vunpack.c.l.b16 %v3848
    %v4427 = vunpack.c.h.b16 %v3848
    %v4428 = vunpack.c.l.b16 %v3849
    %v4429 = vunpack.c.h.b16 %v3849
    %v4430 = vunpack.c.l.b16 %v3850
    %v4431 = vunpack.c.h.b16 %v3850
    %v4432 = vunpack.c.l.b16 %v3851
    %v4433 = vunpack.c.h.b16 %v3851
    %v4434 = vunpack.c.l.b16 %v3852
    %v4435 = vunpack.c.h.b16 %v3852
    %v4436 = vunpack.c.l.b16 %v3853
    %v4437 = vunpack.c.h.b16 %v3853
    %v4438 = vunpack.c.l.b16 %v3854
    %v4439 = vunpack.c.h.b16 %v3854
    %v4440 = vunpack.c.l.b16 %v3855
    %v4441 = vunpack.c.h.b16 %v3855
    %v4442 = vunpack.c.l.b16 %v3856
    %v4443 = vunpack.c.h.b16 %v3856
    %v4444 = vunpack.c.l.b16 %v3857
    %v4445 = vunpack.c.h.b16 %v3857
    %v4446 = vunpack.c.l.b16 %v3858
    %v4447 = vunpack.c.h.b16 %v3858
    %v4448 = vunpack.c.l.b16 %v3859
    %v4449 = vunpack.c.h.b16 %v3859
    %v4450 = vunpack.c.l.b16 %v3860
    %v4451 = vunpack.c.h.b16 %v3860
    %v4452 = vunpack.c.l.b16 %v3861
    %v4453 = vunpack.c.h.b16 %v3861
    %v4454 = vunpack.c.l.b16 %v3862
    %v4455 = vunpack.c.h.b16 %v3862
    %v4456 = vunpack.c.l.b16 %v3863
    %v4457 = vunpack.c.h.b16 %v3863
    %v4458 = vunpack.c.l.b16 %v3864
    %v4459 = vunpack.c.h.b16 %v3864
    %v4460 = vunpack.c.l.b16 %v3865
    %v4461 = vunpack.c.h.b16 %v3865
    %v4462 = vunpack.c.l.b16 %v3866
    %v4463 = vunpack.c.h.b16 %v3866
    %v4464 = vunpack.c.l.b16 %v3867
    %v4465 = vunpack.c.h.b16 %v3867
    %v4466 = vunpack.c.l.b16 %v3868
    %v4467 = vunpack.c.h.b16 %v3868
    %v4468 = vunpack.c.l.b16 %v3869
    %v4469 = vunpack.c.h.b16 %v3869
    %v4470 = vunpack.c.l.b16 %v3870
    %v4471 = vunpack.c.h.b16 %v3870
    %v4472 = vunpack.c.l.b16 %v3871
    %v4473 = vunpack.c.h.b16 %v3871
    %v4474 = vunpack.c.l.b16 %v3872
    %v4475 = vunpack.c.h.b16 %v3872
    %v4476 = vunpack.c.l.b16 %v3873
    %v4477 = vunpack.c.h.b16 %v3873
    %v4478 = vunpack.c.l.b16 %v3874
    %v4479 = vunpack.c.h.b16 %v3874
    %v4480 = vunpack.c.l.b16 %v3875
    %v4481 = vunpack.c.h.b16 %v3875
    %v4482 = vunpack.c.l.b16 %v3876
    %v4483 = vunpack.c.h.b16 %v3876
    %v4484 = vunpack.c.l.b16 %v3877
    %v4485 = vunpack.c.h.b16 %v3877
    %v4486 = vunpack.c.l.b16 %v3878
    %v4487 = vunpack.c.h.b16 %v3878
    %v4488 = vunpack.c.l.b16 %v3879
    %v4489 = vunpack.c.h.b16 %v3879
    %v4490 = vunpack.c.l.b16 %v3880
    %v4491 = vunpack.c.h.b16 %v3880
    %v4492 = vunpack.c.l.b16 %v3881
    %v4493 = vunpack.c.h.b16 %v3881
    %v4494 = vunpack.c.l.b16 %v3882
    %v4495 = vunpack.c.h.b16 %v3882
    %v4496 = vunpack.c.l.b16 %v3883
    %v4497 = vunpack.c.h.b16 %v3883
    %v4498 = vunpack.c.l.b16 %v3884
    %v4499 = vunpack.c.h.b16 %v3884
    %v4500 = vunpack.c.l.b16 %v3885
    %v4501 = vunpack.c.h.b16 %v3885
    %v4502 = vunpack.c.l.b16 %v3886
    %v4503 = vunpack.c.h.b16 %v3886
    %v4504 = vunpack.c.l.b16 %v3887
    %v4505 = vunpack.c.h.b16 %v3887
    %v4506 = vpack.c.b16 %v4130, %v4122
    %v4507 = vpack.c.b16 %v4131, %v4123
    %v4508 = vpack.c.b16 %v4132, %v4124
    %v4509 = vpack.c.b16 %v4133, %v4125
    %v4510 = vpack.c.b16 %v4134, %v4126
    %v4511 = vpack.c.b16 %v4135, %v4127
    %v4512 = vpack.c.b16 %v4136, %v4128
    %v4513 = vpack.c.b16 %v4137, %v4129
    %v4514 = vpack.c.b16 %v4146, %v4138
    %v4515 = vpack.c.b16 %v4147, %v4139
    %v4516 = vpack.c.b16 %v4148, %v4140
    %v4517 = vpack.c.b16 %v4149, %v4141
    %v4518 = vpack.c.b16 %v4150, %v4142
    %v4519 = vpack.c.b16 %v4151, %v4143
    %v4520 = vpack.c.b16 %v4152, %v4144
    %v4521 = vpack.c.b16 %v4153, %v4145
    %v4522 = vpack.c.b16 %v4162, %v4154
    %v4523 = vpack.c.b16 %v4163, %v4155
    %v4524 = vpack.c.b16 %v4164, %v4156
    %v4525 = vpack.c.b16 %v4165, %v4157
    %v4526 = vpack.c.b16 %v4166, %v4158
    %v4527 = vpack.c.b16 %v4167, %v4159
    %v4528 = vpack.c.b16 %v4168, %v4160
    %v4529 = vpack.c.b16 %v4169, %v4161
    %v4530 = vpack.c.b16 %v4178, %v4170
    %v4531 = vpack.c.b16 %v4179, %v4171
    %v4532 = vpack.c.b16 %v4180, %v4172
    %v4533 = vpack.c.b16 %v4181, %v4173
    %v4534 = vpack.c.b16 %v4182, %v4174
    %v4535 = vpack.c.b16 %v4183, %v4175
    %v4536 = vpack.c.b16 %v4184, %v4176
    %v4537 = vpack.c.b16 %v4185, %v4177
    %v4538 = vpack.c.b16 %v4194, %v4186
    %v4539 = vpack.c.b16 %v4195, %v4187
    %v4540 = vpack.c.b16 %v4196, %v4188
    %v4541 = vpack.c.b16 %v4197, %v4189
    %v4542 = vpack.c.b16 %v4198, %v4190
    %v4543 = vpack.c.b16 %v4199, %v4191
    %v4544 = vpack.c.b16 %v4200, %v4192
    %v4545 = vpack.c.b16 %v4201, %v4193
    %v4546 = vpack.c.b16 %v4210, %v4202
    %v4547 = vpack.c.b16 %v4211, %v4203
    %v4548 = vpack.c.b16 %v4212, %v4204
    %v4549 = vpack.c.b16 %v4213, %v4205
    %v4550 = vpack.c.b16 %v4214, %v4206
    %v4551 = vpack.c.b16 %v4215, %v4207
    %v4552 = vpack.c.b16 %v4216, %v4208
    %v4553 = vpack.c.b16 %v4217, %v4209
    %v4554 = vpack.c.b16 %v4226, %v4218
    %v4555 = vpack.c.b16 %v4227, %v4219
    %v4556 = vpack.c.b16 %v4228, %v4220
    %v4557 = vpack.c.b16 %v4229, %v4221
    %v4558 = vpack.c.b16 %v4230, %v4222
    %v4559 = vpack.c.b16 %v4231, %v4223
    %v4560 = vpack.c.b16 %v4232, %v4224
    %v4561 = vpack.c.b16 %v4233, %v4225
    %v4562 = vpack.c.b16 %v4242, %v4234
    %v4563 = vpack.c.b16 %v4243, %v4235
    %v4564 = vpack.c.b16 %v4244, %v4236
    %v4565 = vpack.c.b16 %v4245, %v4237
    %v4566 = vpack.c.b16 %v4246, %v4238
    %v4567 = vpack.c.b16 %v4247, %v4239
    %v4568 = vpack.c.b16 %v4248, %v4240
    %v4569 = vpack.c.b16 %v4249, %v4241
    %v4570 = vpack.c.b16 %v4258, %v4250
    %v4571 = vpack.c.b16 %v4259, %v4251
    %v4572 = vpack.c.b16 %v4260, %v4252
    %v4573 = vpack.c.b16 %v4261, %v4253
    %v4574 = vpack.c.b16 %v4262, %v4254
    %v4575 = vpack.c.b16 %v4263, %v4255
    %v4576 = vpack.c.b16 %v4264, %v4256
    %v4577 = vpack.c.b16 %v4265, %v4257
    %v4578 = vpack.c.b16 %v4274, %v4266
    %v4579 = vpack.c.b16 %v4275, %v4267
    %v4580 = vpack.c.b16 %v4276, %v4268
    %v4581 = vpack.c.b16 %v4277, %v4269
    %v4582 = vpack.c.b16 %v4278, %v4270
    %v4583 = vpack.c.b16 %v4279, %v4271
    %v4584 = vpack.c.b16 %v4280, %v4272
    %v4585 = vpack.c.b16 %v4281, %v4273
    %v4586 = vpack.c.b16 %v4290, %v4282
    %v4587 = vpack.c.b16 %v4291, %v4283
    %v4588 = vpack.c.b16 %v4292, %v4284
    %v4589 = vpack.c.b16 %v4293, %v4285
    %v4590 = vpack.c.b16 %v4294, %v4286
    %v4591 = vpack.c.b16 %v4295, %v4287
    %v4592 = vpack.c.b16 %v4296, %v4288
    %v4593 = vpack.c.b16 %v4297, %v4289
    %v4594 = vpack.c.b16 %v4306, %v4298
    %v4595 = vpack.c.b16 %v4307, %v4299
    %v4596 = vpack.c.b16 %v4308, %v4300
    %v4597 = vpack.c.b16 %v4309, %v4301
    %v4598 = vpack.c.b16 %v4310, %v4302
    %v4599 = vpack.c.b16 %v4311, %v4303
    %v4600 = vpack.c.b16 %v4312, %v4304
    %v4601 = vpack.c.b16 %v4313, %v4305
    %v4602 = vpack.c.b16 %v4322, %v4314
    %v4603 = vpack.c.b16 %v4323, %v4315
    %v4604 = vpack.c.b16 %v4324, %v4316
    %v4605 = vpack.c.b16 %v4325, %v4317
    %v4606 = vpack.c.b16 %v4326, %v4318
    %v4607 = vpack.c.b16 %v4327, %v4319
    %v4608 = vpack.c.b16 %v4328, %v4320
    %v4609 = vpack.c.b16 %v4329, %v4321
    %v4610 = vpack.c.b16 %v4338, %v4330
    %v4611 = vpack.c.b16 %v4339, %v4331
    %v4612 = vpack.c.b16 %v4340, %v4332
    %v4613 = vpack.c.b16 %v4341, %v4333
    %v4614 = vpack.c.b16 %v4342, %v4334
    %v4615 = vpack.c.b16 %v4343, %v4335
    %v4616 = vpack.c.b16 %v4344, %v4336
    %v4617 = vpack.c.b16 %v4345, %v4337
    %v4618 = vpack.c.b16 %v4354, %v4346
    %v4619 = vpack.c.b16 %v4355, %v4347
    %v4620 = vpack.c.b16 %v4356, %v4348
    %v4621 = vpack.c.b16 %v4357, %v4349
    %v4622 = vpack.c.b16 %v4358, %v4350
    %v4623 = vpack.c.b16 %v4359, %v4351
    %v4624 = vpack.c.b16 %v4360, %v4352
    %v4625 = vpack.c.b16 %v4361, %v4353
    %v4626 = vpack.c.b16 %v4370, %v4362
    %v4627 = vpack.c.b16 %v4371, %v4363
    %v4628 = vpack.c.b16 %v4372, %v4364
    %v4629 = vpack.c.b16 %v4373, %v4365
    %v4630 = vpack.c.b16 %v4374, %v4366
    %v4631 = vpack.c.b16 %v4375, %v4367
    %v4632 = vpack.c.b16 %v4376, %v4368
    %v4633 = vpack.c.b16 %v4377, %v4369
    %v4634 = vpack.c.b16 %v4386, %v4378
    %v4635 = vpack.c.b16 %v4387, %v4379
    %v4636 = vpack.c.b16 %v4388, %v4380
    %v4637 = vpack.c.b16 %v4389, %v4381
    %v4638 = vpack.c.b16 %v4390, %v4382
    %v4639 = vpack.c.b16 %v4391, %v4383
    %v4640 = vpack.c.b16 %v4392, %v4384
    %v4641 = vpack.c.b16 %v4393, %v4385
    %v4642 = vpack.c.b16 %v4402, %v4394
    %v4643 = vpack.c.b16 %v4403, %v4395
    %v4644 = vpack.c.b16 %v4404, %v4396
    %v4645 = vpack.c.b16 %v4405, %v4397
    %v4646 = vpack.c.b16 %v4406, %v4398
    %v4647 = vpack.c.b16 %v4407, %v4399
    %v4648 = vpack.c.b16 %v4408, %v4400
    %v4649 = vpack.c.b16 %v4409, %v4401
    %v4650 = vpack.c.b16 %v4418, %v4410
    %v4651 = vpack.c.b16 %v4419, %v4411
    %v4652 = vpack.c.b16 %v4420, %v4412
    %v4653 = vpack.c.b16 %v4421, %v4413
    %v4654 = vpack.c.b16 %v4422, %v4414
    %v4655 = vpack.c.b16 %v4423, %v4415
    %v4656 = vpack.c.b16 %v4424, %v4416
    %v4657 = vpack.c.b16 %v4425, %v4417
    %v4658 = vpack.c.b16 %v4434, %v4426
    %v4659 = vpack.c.b16 %v4435, %v4427
    %v4660 = vpack.c.b16 %v4436, %v4428
    %v4661 = vpack.c.b16 %v4437, %v4429
    %v4662 = vpack.c.b16 %v4438, %v4430
    %v4663 = vpack.c.b16 %v4439, %v4431
    %v4664 = vpack.c.b16 %v4440, %v4432
    %v4665 = vpack.c.b16 %v4441, %v4433
    %v4666 = vpack.c.b16 %v4450, %v4442
    %v4667 = vpack.c.b16 %v4451, %v4443
    %v4668 = vpack.c.b16 %v4452, %v4444
    %v4669 = vpack.c.b16 %v4453, %v4445
    %v4670 = vpack.c.b16 %v4454, %v4446
    %v4671 = vpack.c.b16 %v4455, %v4447
    %v4672 = vpack.c.b16 %v4456, %v4448
    %v4673 = vpack.c.b16 %v4457, %v4449
    %v4674 = vpack.c.b16 %v4466, %v4458
    %v4675 = vpack.c.b16 %v4467, %v4459
    %v4676 = vpack.c.b16 %v4468, %v4460
    %v4677 = vpack.c.b16 %v4469, %v4461
    %v4678 = vpack.c.b16 %v4470, %v4462
    %v4679 = vpack.c.b16 %v4471, %v4463
    %v4680 = vpack.c.b16 %v4472, %v4464
    %v4681 = vpack.c.b16 %v4473, %v4465
    %v4682 = vpack.c.b16 %v4482, %v4474
    %v4683 = vpack.c.b16 %v4483, %v4475
    %v4684 = vpack.c.b16 %v4484, %v4476
    %v4685 = vpack.c.b16 %v4485, %v4477
    %v4686 = vpack.c.b16 %v4486, %v4478
    %v4687 = vpack.c.b16 %v4487, %v4479
    %v4688 = vpack.c.b16 %v4488, %v4480
    %v4689 = vpack.c.b16 %v4489, %v4481
    %v4690 = vpack.c.b16 %v4498, %v4490
    %v4691 = vpack.c.b16 %v4499, %v4491
    %v4692 = vpack.c.b16 %v4500, %v4492
    %v4693 = vpack.c.b16 %v4501, %v4493
    %v4694 = vpack.c.b16 %v4502, %v4494
    %v4695 = vpack.c.b16 %v4503, %v4495
    %v4696 = vpack.c.b16 %v4504, %v4496
    %v4697 = vpack.c.b16 %v4505, %v4497
    %4890 = vmatprep.subr.bf16.mxu0 %v4563
    %4891 = vmatpush1.bf16.msra.mxu0 %v4562
    %4892 = vmatprep.subr.bf16.mxu0 %v4555
    %4893 = vmatpush1.bf16.msra.mxu0 %v4554
    %4894 = vmatprep.subr.bf16.mxu0 %v4547
    %4895 = vmatpush1.bf16.msra.mxu0 %v4546
    %4896 = vmatprep.subr.bf16.mxu0 %v4539
    %4897 = vmatpush1.bf16.msra.mxu0 %v4538
    %4898 = vmatprep.subr.bf16.mxu0 %v4531
    %4899 = vmatpush1.bf16.msra.mxu0 %v4530
    %4900 = vmatprep.subr.bf16.mxu0 %v4523
    %4901 = vmatpush1.bf16.msra.mxu0 %v4522
    %4902 = vmatprep.subr.bf16.mxu0 %v4515
    %4903 = vmatpush1.bf16.msra.mxu0 %v4514
    %4904 = vmatprep.subr.bf16.mxu0 %v4507
    %4905 = vmatpush1.bf16.msra.mxu0 %v4506
    %4906 = vmatprep.subr.bf16.mxu0 %v4627
    %4907 = vmatpush2.bf16.msra.mxu0 %v4626
    %4908 = vmatprep.subr.bf16.mxu0 %v4619
    %4909 = vmatpush2.bf16.msra.mxu0 %v4618
    %4910 = vmatprep.subr.bf16.mxu0 %v4611
    %4911 = vmatpush2.bf16.msra.mxu0 %v4610
    %4912 = vmatprep.subr.bf16.mxu0 %v4603
    %4913 = vmatpush2.bf16.msra.mxu0 %v4602
    %4914 = vmatprep.subr.bf16.mxu0 %v4595
    %4915 = vmatpush2.bf16.msra.mxu0 %v4594
    %4916 = vmatprep.subr.bf16.mxu0 %v4587
    %4917 = vmatpush2.bf16.msra.mxu0 %v4586
    %4918 = vmatprep.subr.bf16.mxu0 %v4579
    %4919 = vmatpush2.bf16.msra.mxu0 %v4578
    %4920 = vmatprep.subr.bf16.mxu0 %v4571
    %4921 = vmatpush2.bf16.msra.mxu0 %v4570
    %4922 = vmatprep.mubr.bf16.mxu0 %v3694
    %4923 = vmatmul.mubr.bf16.gmra.mxu0 %v3693
    %v4924 = vpop.f32.mrf.mxu0
    %v4925 = vadd.f32 %v3893, %v4924
    %v4926 = vpop.f32.mrf.mxu0
    %v4927 = vadd.f32 %v3897, %v4926
    %v4928 = vpop.f32.mrf.mxu0
    %v4929 = vpop.f32.mrf.mxu0
    %4930 = vdwg.mxu0
    %4931 = vmatprep.subr.bf16.mxu0 %v4691
    %4932 = vmatpush1.bf16.msra.mxu0 %v4690
    %4933 = vmatprep.subr.bf16.mxu0 %v4683
    %4934 = vmatpush1.bf16.msra.mxu0 %v4682
    %4935 = vmatprep.subr.bf16.mxu0 %v4675
    %4936 = vmatpush1.bf16.msra.mxu0 %v4674
    %4937 = vmatprep.subr.bf16.mxu0 %v4667
    %4938 = vmatpush1.bf16.msra.mxu0 %v4666
    %4939 = vmatprep.subr.bf16.mxu0 %v4659
    %4940 = vmatpush1.bf16.msra.mxu0 %v4658
    %4941 = vmatprep.subr.bf16.mxu0 %v4651
    %4942 = vmatpush1.bf16.msra.mxu0 %v4650
    %4943 = vmatprep.subr.bf16.mxu0 %v4643
    %4944 = vmatpush1.bf16.msra.mxu0 %v4642
    %4945 = vmatprep.subr.bf16.mxu0 %v4635
    %4946 = vmatpush1.bf16.msra.mxu0 %v4634
    %4947 = vmatprep.subr.bf16.mxu0 0
    %4948 = vmatpush2.bf16.msra.mxu0 0
    %4949 = vmatprep.subr.bf16.mxu0 0
    %4950 = vmatpush2.bf16.msra.mxu0 0
    %4951 = vmatprep.subr.bf16.mxu0 0
    %4952 = vmatpush2.bf16.msra.mxu0 0
    %4953 = vmatprep.subr.bf16.mxu0 0
    %4954 = vmatpush2.bf16.msra.mxu0 0
    %4955 = vmatprep.subr.bf16.mxu0 0
    %4956 = vmatpush2.bf16.msra.mxu0 0
    %4957 = vmatprep.subr.bf16.mxu0 0
    %4958 = vmatpush2.bf16.msra.mxu0 0
    %4959 = vmatprep.subr.bf16.mxu0 0
    %4960 = vmatpush2.bf16.msra.mxu0 0
    %4961 = vmatprep.subr.bf16.mxu0 0
    %4962 = vmatpush2.bf16.msra.mxu0 0
    %4963 = vmatprep.mubr.bf16.mxu0 0
    %4964 = vmatmul.mubr.bf16.gmra.mxu0 %v3695
    %v4965 = vpop.f32.mrf.mxu0
    %v4966 = vadd.f32 %v4925, %v4965
    %v4967 = vpop.f32.mrf.mxu0
    %v4968 = vadd.f32 %v4927, %v4967
    %v4969 = vpop.f32.mrf.mxu0
    %v4970 = vpop.f32.mrf.mxu0
    %4971 = vdwg.mxu0
    %4972 = vmatprep.subr.bf16.mxu0 %v4565
    %4973 = vmatpush1.bf16.msra.mxu0 %v4564
    %4974 = vmatprep.subr.bf16.mxu0 %v4557
    %4975 = vmatpush1.bf16.msra.mxu0 %v4556
    %4976 = vmatprep.subr.bf16.mxu0 %v4549
    %4977 = vmatpush1.bf16.msra.mxu0 %v4548
    %4978 = vmatprep.subr.bf16.mxu0 %v4541
    %4979 = vmatpush1.bf16.msra.mxu0 %v4540
    %4980 = vmatprep.subr.bf16.mxu0 %v4533
    %4981 = vmatpush1.bf16.msra.mxu0 %v4532
    %4982 = vmatprep.subr.bf16.mxu0 %v4525
    %4983 = vmatpush1.bf16.msra.mxu0 %v4524
    %4984 = vmatprep.subr.bf16.mxu0 %v4517
    %4985 = vmatpush1.bf16.msra.mxu0 %v4516
    %4986 = vmatprep.subr.bf16.mxu0 %v4509
    %4987 = vmatpush1.bf16.msra.mxu0 %v4508
    %4988 = vmatprep.subr.bf16.mxu0 %v4629
    %4989 = vmatpush2.bf16.msra.mxu0 %v4628
    %4990 = vmatprep.subr.bf16.mxu0 %v4621
    %4991 = vmatpush2.bf16.msra.mxu0 %v4620
    %4992 = vmatprep.subr.bf16.mxu0 %v4613
    %4993 = vmatpush2.bf16.msra.mxu0 %v4612
    %4994 = vmatprep.subr.bf16.mxu0 %v4605
    %4995 = vmatpush2.bf16.msra.mxu0 %v4604
    %4996 = vmatprep.subr.bf16.mxu0 %v4597
    %4997 = vmatpush2.bf16.msra.mxu0 %v4596
    %4998 = vmatprep.subr.bf16.mxu0 %v4589
    %4999 = vmatpush2.bf16.msra.mxu0 %v4588
    %5000 = vmatprep.subr.bf16.mxu0 %v4581
    %5001 = vmatpush2.bf16.msra.mxu0 %v4580
    %5002 = vmatprep.subr.bf16.mxu0 %v4573
    %5003 = vmatpush2.bf16.msra.mxu0 %v4572
    %5004 = vmatprep.mubr.bf16.mxu0 %v3694
    %5005 = vmatmul.mubr.bf16.gmra.mxu0 %v3693
    %v5006 = vpop.f32.mrf.mxu0
    %v5007 = vadd.f32 %v3901, %v5006
    %v5008 = vpop.f32.mrf.mxu0
    %v5009 = vadd.f32 %v3905, %v5008
    %v5010 = vpop.f32.mrf.mxu0
    %v5011 = vpop.f32.mrf.mxu0
    %5012 = vdwg.mxu0
    %5013 = vmatprep.subr.bf16.mxu0 %v4693
    %5014 = vmatpush1.bf16.msra.mxu0 %v4692
    %5015 = vmatprep.subr.bf16.mxu0 %v4685
    %5016 = vmatpush1.bf16.msra.mxu0 %v4684
    %5017 = vmatprep.subr.bf16.mxu0 %v4677
    %5018 = vmatpush1.bf16.msra.mxu0 %v4676
    %5019 = vmatprep.subr.bf16.mxu0 %v4669
    %5020 = vmatpush1.bf16.msra.mxu0 %v4668
    %5021 = vmatprep.subr.bf16.mxu0 %v4661
    %5022 = vmatpush1.bf16.msra.mxu0 %v4660
    %5023 = vmatprep.subr.bf16.mxu0 %v4653
    %5024 = vmatpush1.bf16.msra.mxu0 %v4652
    %5025 = vmatprep.subr.bf16.mxu0 %v4645
    %5026 = vmatpush1.bf16.msra.mxu0 %v4644
    %5027 = vmatprep.subr.bf16.mxu0 %v4637
    %5028 = vmatpush1.bf16.msra.mxu0 %v4636
    %5029 = vmatprep.subr.bf16.mxu0 0
    %5030 = vmatpush2.bf16.msra.mxu0 0
    %5031 = vmatprep.subr.bf16.mxu0 0
    %5032 = vmatpush2.bf16.msra.mxu0 0
    %5033 = vmatprep.subr.bf16.mxu0 0
    %5034 = vmatpush2.bf16.msra.mxu0 0
    %5035 = vmatprep.subr.bf16.mxu0 0
    %5036 = vmatpush2.bf16.msra.mxu0 0
    %5037 = vmatprep.subr.bf16.mxu0 0
    %5038 = vmatpush2.bf16.msra.mxu0 0
    %5039 = vmatprep.subr.bf16.mxu0 0
    %5040 = vmatpush2.bf16.msra.mxu0 0
    %5041 = vmatprep.subr.bf16.mxu0 0
    %5042 = vmatpush2.bf16.msra.mxu0 0
    %5043 = vmatprep.subr.bf16.mxu0 0
    %5044 = vmatpush2.bf16.msra.mxu0 0
    %5045 = vmatprep.mubr.bf16.mxu0 0
    %5046 = vmatmul.mubr.bf16.gmra.mxu0 %v3695
    %v5047 = vpop.f32.mrf.mxu0
    %v5048 = vadd.f32 %v5007, %v5047
    %v5049 = vpop.f32.mrf.mxu0
    %v5050 = vadd.f32 %v5009, %v5049
    %v5051 = vpop.f32.mrf.mxu0
    %v5052 = vpop.f32.mrf.mxu0
    %5053 = vdwg.mxu0
    %5054 = vmatprep.subr.bf16.mxu0 %v4567
    %5055 = vmatpush1.bf16.msra.mxu0 %v4566
    %5056 = vmatprep.subr.bf16.mxu0 %v4559
    %5057 = vmatpush1.bf16.msra.mxu0 %v4558
    %5058 = vmatprep.subr.bf16.mxu0 %v4551
    %5059 = vmatpush1.bf16.msra.mxu0 %v4550
    %5060 = vmatprep.subr.bf16.mxu0 %v4543
    %5061 = vmatpush1.bf16.msra.mxu0 %v4542
    %5062 = vmatprep.subr.bf16.mxu0 %v4535
    %5063 = vmatpush1.bf16.msra.mxu0 %v4534
    %5064 = vmatprep.subr.bf16.mxu0 %v4527
    %5065 = vmatpush1.bf16.msra.mxu0 %v4526
    %5066 = vmatprep.subr.bf16.mxu0 %v4519
    %5067 = vmatpush1.bf16.msra.mxu0 %v4518
    %5068 = vmatprep.subr.bf16.mxu0 %v4511
    %5069 = vmatpush1.bf16.msra.mxu0 %v4510
    %5070 = vmatprep.subr.bf16.mxu0 %v4631
    %5071 = vmatpush2.bf16.msra.mxu0 %v4630
    %5072 = vmatprep.subr.bf16.mxu0 %v4623
    %5073 = vmatpush2.bf16.msra.mxu0 %v4622
    %5074 = vmatprep.subr.bf16.mxu0 %v4615
    %5075 = vmatpush2.bf16.msra.mxu0 %v4614
    %5076 = vmatprep.subr.bf16.mxu0 %v4607
    %5077 = vmatpush2.bf16.msra.mxu0 %v4606
    %5078 = vmatprep.subr.bf16.mxu0 %v4599
    %5079 = vmatpush2.bf16.msra.mxu0 %v4598
    %5080 = vmatprep.subr.bf16.mxu0 %v4591
    %5081 = vmatpush2.bf16.msra.mxu0 %v4590
    %5082 = vmatprep.subr.bf16.mxu0 %v4583
    %5083 = vmatpush2.bf16.msra.mxu0 %v4582
    %5084 = vmatprep.subr.bf16.mxu0 %v4575
    %5085 = vmatpush2.bf16.msra.mxu0 %v4574
    %5086 = vmatprep.mubr.bf16.mxu0 %v3694
    %5087 = vmatmul.mubr.bf16.gmra.mxu0 %v3693
    %v5088 = vpop.f32.mrf.mxu0
    %v5089 = vadd.f32 %v3909, %v5088
    %v5090 = vpop.f32.mrf.mxu0
    %v5091 = vadd.f32 %v3913, %v5090
    %v5092 = vpop.f32.mrf.mxu0
    %v5093 = vpop.f32.mrf.mxu0
    %5094 = vdwg.mxu0
    %5095 = vmatprep.subr.bf16.mxu0 %v4695
    %5096 = vmatpush1.bf16.msra.mxu0 %v4694
    %5097 = vmatprep.subr.bf16.mxu0 %v4687
    %5098 = vmatpush1.bf16.msra.mxu0 %v4686
    %5099 = vmatprep.subr.bf16.mxu0 %v4679
    %5100 = vmatpush1.bf16.msra.mxu0 %v4678
    %5101 = vmatprep.subr.bf16.mxu0 %v4671
    %5102 = vmatpush1.bf16.msra.mxu0 %v4670
    %5103 = vmatprep.subr.bf16.mxu0 %v4663
    %5104 = vmatpush1.bf16.msra.mxu0 %v4662
    %5105 = vmatprep.subr.bf16.mxu0 %v4655
    %5106 = vmatpush1.bf16.msra.mxu0 %v4654
    %5107 = vmatprep.subr.bf16.mxu0 %v4647
    %5108 = vmatpush1.bf16.msra.mxu0 %v4646
    %5109 = vmatprep.subr.bf16.mxu0 %v4639
    %5110 = vmatpush1.bf16.msra.mxu0 %v4638
    %5111 = vmatprep.subr.bf16.mxu0 0
    %5112 = vmatpush2.bf16.msra.mxu0 0
    %5113 = vmatprep.subr.bf16.mxu0 0
    %5114 = vmatpush2.bf16.msra.mxu0 0
    %5115 = vmatprep.subr.bf16.mxu0 0
    %5116 = vmatpush2.bf16.msra.mxu0 0
    %5117 = vmatprep.subr.bf16.mxu0 0
    %5118 = vmatpush2.bf16.msra.mxu0 0
    %5119 = vmatprep.subr.bf16.mxu0 0
    %5120 = vmatpush2.bf16.msra.mxu0 0
    %5121 = vmatprep.subr.bf16.mxu0 0
    %5122 = vmatpush2.bf16.msra.mxu0 0
    %5123 = vmatprep.subr.bf16.mxu0 0
    %5124 = vmatpush2.bf16.msra.mxu0 0
    %5125 = vmatprep.subr.bf16.mxu0 0
    %5126 = vmatpush2.bf16.msra.mxu0 0
    %5127 = vmatprep.mubr.bf16.mxu0 0
    %5128 = vmatmul.mubr.bf16.gmra.mxu0 %v3695
    %v5129 = vpop.f32.mrf.mxu0
    %v5130 = vadd.f32 %v5089, %v5129
    %v5131 = vpop.f32.mrf.mxu0
    %v5132 = vadd.f32 %v5091, %v5131
    %v5133 = vpop.f32.mrf.mxu0
    %v5134 = vpop.f32.mrf.mxu0
    %5135 = vdwg.mxu0
    %5136 = vmatprep.subr.bf16.mxu0 %v4569
    %5137 = vmatpush1.bf16.msra.mxu0 %v4568
    %5138 = vmatprep.subr.bf16.mxu0 %v4561
    %5139 = vmatpush1.bf16.msra.mxu0 %v4560
    %5140 = vmatprep.subr.bf16.mxu0 %v4553
    %5141 = vmatpush1.bf16.msra.mxu0 %v4552
    %5142 = vmatprep.subr.bf16.mxu0 %v4545
    %5143 = vmatpush1.bf16.msra.mxu0 %v4544
    %5144 = vmatprep.subr.bf16.mxu0 %v4537
    %5145 = vmatpush1.bf16.msra.mxu0 %v4536
    %5146 = vmatprep.subr.bf16.mxu0 %v4529
    %5147 = vmatpush1.bf16.msra.mxu0 %v4528
    %5148 = vmatprep.subr.bf16.mxu0 %v4521
    %5149 = vmatpush1.bf16.msra.mxu0 %v4520
    %5150 = vmatprep.subr.bf16.mxu0 %v4513
    %5151 = vmatpush1.bf16.msra.mxu0 %v4512
    %5152 = vmatprep.subr.bf16.mxu0 %v4633
    %5153 = vmatpush2.bf16.msra.mxu0 %v4632
    %5154 = vmatprep.subr.bf16.mxu0 %v4625
    %5155 = vmatpush2.bf16.msra.mxu0 %v4624
    %5156 = vmatprep.subr.bf16.mxu0 %v4617
    %5157 = vmatpush2.bf16.msra.mxu0 %v4616
    %5158 = vmatprep.subr.bf16.mxu0 %v4609
    %5159 = vmatpush2.bf16.msra.mxu0 %v4608
    %5160 = vmatprep.subr.bf16.mxu0 %v4601
    %5161 = vmatpush2.bf16.msra.mxu0 %v4600
    %5162 = vmatprep.subr.bf16.mxu0 %v4593
    %5163 = vmatpush2.bf16.msra.mxu0 %v4592
    %5164 = vmatprep.subr.bf16.mxu0 %v4585
    %5165 = vmatpush2.bf16.msra.mxu0 %v4584
    %5166 = vmatprep.subr.bf16.mxu0 %v4577
    %5167 = vmatpush2.bf16.msra.mxu0 %v4576
    %5168 = vmatprep.mubr.bf16.mxu0 %v3694
    %5169 = vmatmul.mubr.bf16.gmra.mxu0 %v3693
    %v5170 = vpop.f32.mrf.mxu0
    %v5171 = vadd.f32 %v3917, %v5170
    %v5172 = vpop.f32.mrf.mxu0
    %v5173 = vadd.f32 %v3921, %v5172
    %v5174 = vpop.f32.mrf.mxu0
    %v5175 = vpop.f32.mrf.mxu0
    %5176 = vdwg.mxu0
    %5177 = vmatprep.subr.bf16.mxu0 %v4697
    %5178 = vmatpush1.bf16.msra.mxu0 %v4696
    %5179 = vmatprep.subr.bf16.mxu0 %v4689
    %5180 = vmatpush1.bf16.msra.mxu0 %v4688
    %5181 = vmatprep.subr.bf16.mxu0 %v4681
    %5182 = vmatpush1.bf16.msra.mxu0 %v4680
    %5183 = vmatprep.subr.bf16.mxu0 %v4673
    %5184 = vmatpush1.bf16.msra.mxu0 %v4672
    %5185 = vmatprep.subr.bf16.mxu0 %v4665
    %5186 = vmatpush1.bf16.msra.mxu0 %v4664
    %5187 = vmatprep.subr.bf16.mxu0 %v4657
    %5188 = vmatpush1.bf16.msra.mxu0 %v4656
    %5189 = vmatprep.subr.bf16.mxu0 %v4649
    %5190 = vmatpush1.bf16.msra.mxu0 %v4648
    %5191 = vmatprep.subr.bf16.mxu0 %v4641
    %5192 = vmatpush1.bf16.msra.mxu0 %v4640
    %5193 = vmatprep.subr.bf16.mxu0 0
    %5194 = vmatpush2.bf16.msra.mxu0 0
    %5195 = vmatprep.subr.bf16.mxu0 0
    %5196 = vmatpush2.bf16.msra.mxu0 0
    %5197 = vmatprep.subr.bf16.mxu0 0
    %5198 = vmatpush2.bf16.msra.mxu0 0
    %5199 = vmatprep.subr.bf16.mxu0 0
    %5200 = vmatpush2.bf16.msra.mxu0 0
    %5201 = vmatprep.subr.bf16.mxu0 0
    %5202 = vmatpush2.bf16.msra.mxu0 0
    %5203 = vmatprep.subr.bf16.mxu0 0
    %5204 = vmatpush2.bf16.msra.mxu0 0
    %5205 = vmatprep.subr.bf16.mxu0 0
    %5206 = vmatpush2.bf16.msra.mxu0 0
    %5207 = vmatprep.subr.bf16.mxu0 0
    %5208 = vmatpush2.bf16.msra.mxu0 0
    %5209 = vmatprep.mubr.bf16.mxu0 0
    %5210 = vmatmul.mubr.bf16.gmra.mxu0 %v3695
    %v5211 = vpop.f32.mrf.mxu0
    %v5212 = vadd.f32 %v5171, %v5211
    %v5213 = vpop.f32.mrf.mxu0
    %v5214 = vadd.f32 %v5173, %v5213
    %v5215 = vpop.f32.mrf.mxu0
    %v5216 = vpop.f32.mrf.mxu0
    %5217 = vdwg.mxu0
    %5218 = vst [vmem:[#allocation16] sm:$0xff] %v4966
    %5219 = vst [vmem:[#allocation16 + $0x8] sm:$0xff] %v4968
    %5220 = vst [vmem:[#allocation16 + $0x10] sm:$0xff] %v5048
    %5221 = vst [vmem:[#allocation16 + $0x18] sm:$0xff] %v5050
    %5222 = vst [vmem:[#allocation16 + $0x20] sm:$0xff] %v5130
    %5223 = vst [vmem:[#allocation16 + $0x28] sm:$0xff] %v5132
    %5224 = vst [vmem:[#allocation16 + $0x30] sm:$0xff] %v5212
    %5225 = vst [vmem:[#allocation16 + $0x38] sm:$0xff] %v5214
    // Predicated region
    $region74: #{tpu_custom_call.1} parent=1 // pred_check
      _
    $region75: #{tpu_custom_call.1} parent=1 // pred_check_branch
      %5227 = sbr.rel (0) target = $region77
    $region76: #{tpu_custom_call.1} parent=1 // pred_region
      %s5229 = ssub.s32 1024, 1024
      %5230 = vsyncadd [#allocation4], %s5229
      %s5232 = sshll.u32 [#allocation16], 4
      %s5233 = int_to_ptr.vmem [resolvable:$true] %s5232
      %5235 = dma.vmem_to_hbm [thread:$0]  %s5233, 1024, %s10, [#allocation4]
    $region77: #{tpu_custom_call.1} parent=1 // pred_fallthru
      _
    // Predicated region
    $region78: #{tpu_custom_call.1} parent=1 // pred_check
      _
    $region79: #{tpu_custom_call.1} parent=1 // pred_check_branch
      %5237 = sbr.rel (0) target = $region81
    $region80: #{tpu_custom_call.1} parent=1 // pred_region
      %s5239 = ssub.s32 128, 128
      %5240 = vsyncadd [#allocation18], %s5239
      %s5242 = sshll.u32 [#allocation17], 4
      %s5243 = int_to_ptr.vmem [resolvable:$true] %s5242
      %5245 = dma.vmem_to_hbm [thread:$0]  %s5243, 128, %s11, [#allocation18]
    $region81: #{tpu_custom_call.1} parent=1 // pred_fallthru
      _
    // Predicated region
    $region82: #{tpu_custom_call.1} parent=1 // pred_check
      _
    $region83: #{tpu_custom_call.1} parent=1 // pred_check_branch
      %5247 = sbr.rel (0) target = $region85
    $region84: #{tpu_custom_call.1} parent=1 // pred_region
      %s5249 = ssub.s32 128, 128
      %5250 = vsyncadd [#allocation18], %s5249
      %s5252 = sshll.u32 [#allocation19], 4
      %s5253 = int_to_ptr.vmem [resolvable:$true] %s5252
      %5255 = dma.vmem_to_hbm [thread:$0]  %s5253, 128, %s12, [#allocation18]
    $region85: #{tpu_custom_call.1} parent=1 // pred_fallthru
      _
    // Predicated region
    $region86: #{tpu_custom_call.1} parent=1 // pred_check
      _
    $region87: #{tpu_custom_call.1} parent=1 // pred_check_branch
      %5257 = sbr.rel (0) target = $region89
    $region88: #{tpu_custom_call.1} parent=1 // pred_region
      %5258 = dma.done [#allocation4], 1024
    $region89: #{tpu_custom_call.1} parent=1 // pred_fallthru
      _
    // Predicated region
    $region90: #{tpu_custom_call.1} parent=1 // pred_check
      _
    $region91: #{tpu_custom_call.1} parent=1 // pred_check_branch
      %5260 = sbr.rel (0) target = $region93
    $region92: #{tpu_custom_call.1} parent=1 // pred_region
      %5261 = dma.done [#allocation18], 128
    $region93: #{tpu_custom_call.1} parent=1 // pred_fallthru
      _
    // Predicated region
    $region94: #{tpu_custom_call.1} parent=1 // pred_check
      _
    $region95: #{tpu_custom_call.1} parent=1 // pred_check_branch
      %5263 = sbr.rel (0) target = $region97
    $region96: #{tpu_custom_call.1} parent=1 // pred_region
      %5264 = dma.done [#allocation18], 128
    $region97: #{tpu_custom_call.1} parent=1 // pred_fallthru
      _
    %5265 = vsyncpa [#allocation3], 1
    %5266 = vsyncpa [#allocation6], 1
    %5267 = vsyncpa [#allocation9], 1
    %5268 = vsyncpa [#allocation12], 1
    %5269 = vsyncpa [#allocation15], 1
    %5270 = vsyncpa [#allocation4], 1
    %5271 = vsyncpa [#allocation18], 1

</llo_original>
